<compile_context>
chip_gen: v7x
topology: tpu7x:2x2x1
jax: 0.10.0
libtpu: 0.0.40
codegen_flags: <defaults>
</compile_context>

<pallas_src>
import functools

import jax
import jax.numpy as jnp
from jax import lax
from jax.experimental import pallas as pl
from jax.experimental.pallas import tpu as pltpu


def _gates_to_hc(gates, c, H):
    """LSTM nonlinearity with gates pre-ordered [i, f, o, g].

    Sigmoid via the tanh identity (single EUP op per vreg on the serial chain);
    one contiguous tanh-based sigmoid over (B, 3H), one tanh over (B, H).
    """
    sig = 0.5 * jnp.tanh(0.5 * gates[:, :3 * H]) + 0.5
    i = sig[:, 0 * H:1 * H]
    f = sig[:, 1 * H:2 * H]
    o = sig[:, 2 * H:3 * H]
    g = jnp.tanh(gates[:, 3 * H:4 * H])
    c_new = f * c + i * g
    h_new = o * jnp.tanh(c_new)
    return h_new, c_new


def _sequence_fc_kernel(gx_ref, wih1_ref, whh1_ref, b1_ref, wih2_ref, whh2_ref,
                        b2_ref, wlin_ref, blin_ref, whio_ref, bhio_ref,
                        out_ref, *, seq_len, future):
    Bp = out_ref.shape[0]          # padded batch
    H = whh1_ref.shape[0]          # whh1 is (H, 4H)

    # Hoist bias broadcasts out of the serial loop (no CSE for broadcast_in_dim).
    b1_b = jnp.broadcast_to(b1_ref[...], (Bp, 4 * H))
    b2_b = jnp.broadcast_to(b2_ref[...], (Bp, 4 * H))

    zeros = jnp.zeros((Bp, H), jnp.float32)

    def step(t, carry):
        h1, c1, h2, c2 = carry
        row = pl.multiple_of(t * Bp, Bp)
        # Recurrent half of cell 2 depends only on h2(t-1): issued at step
        # start so it overlaps cell 1's matmul + EUP chain (unrolled loop).
        g2_rec = jnp.dot(h2, whh2_ref[...],
                         preferred_element_type=jnp.float32) + b2_b
        # Cell 1: input projection precomputed (gx), only h1 @ whh1 on the chain.
        g1 = gx_ref[pl.ds(row, Bp), :] + jnp.dot(
            h1, whh1_ref[...], preferred_element_type=jnp.float32)
        h1, c1 = _gates_to_hc(g1, c1, H)
        # Cell 2: only the h1-dependent half is left on the critical path.
        g2 = jnp.dot(h1, wih2_ref[...],
                     preferred_element_type=jnp.float32) + g2_rec
        h2, c2 = _gates_to_hc(g2, c2, H)
        return (h1, c1, h2, c2)

    h1, c1, h2, c2 = lax.fori_loop(0, seq_len, step,
                                   (zeros, zeros, zeros, zeros), unroll=True)

    # Output head only depends on the final h2 — hoisted out of the time loop.
    out = (jnp.dot(h2, wlin_ref[...], preferred_element_type=jnp.float32)
           + blin_ref[...])                                  # (Bp, F)

    # "future" rollout (static trip count; default future=1, matching PyTorch).
    for _ in range(future):
        g2_rec = jnp.dot(h2, whh2_ref[...],
                         preferred_element_type=jnp.float32) + b2_b
        g1 = (jnp.dot(out, wih1_ref[...], preferred_element_type=jnp.float32)
              + jnp.dot(h1, whh1_ref[...], preferred_element_type=jnp.float32)
              + b1_b)
        h1, c1 = _gates_to_hc(g1, c1, H)
        g2 = jnp.dot(h1, wih2_ref[...],
                     preferred_element_type=jnp.float32) + g2_rec
        h2, c2 = _gates_to_hc(g2, c2, H)
        out = (jnp.dot(h2, whio_ref[...], preferred_element_type=jnp.float32)
               + bhio_ref[...])                              # (Bp, O)

    out_ref[...] = out.astype(out_ref.dtype)


def sequence_fc_forward(x_btf, params, future=1):
    """x_btf: (B, T, F) float32 -> (B, 1, O), exactly like Sequence_fc.forward."""
    B, T, F = x_btf.shape
    H = params["w_hh1"].shape[1]
    O = params["w_hio"].shape[0] if future > 0 else F
    Bp = max(8, ((B + 7) // 8) * 8)          # pad batch to full sublanes

    # --- layout plumbing (plain JAX glue) ------------------------------------
    def reorder_rows(w):
        # PyTorch gate order is [i, f, g, o] along the 4H axis -> [i, f, o, g]
        return jnp.concatenate([w[0:H], w[H:2 * H], w[3 * H:4 * H], w[2 * H:3 * H]],
                               axis=0)

    def reorder_vec(b):
        return jnp.concatenate([b[0:H], b[H:2 * H], b[3 * H:4 * H], b[2 * H:3 * H]])

    wih1 = reorder_rows(params["w_ih1"]).T                          # (F, 4H)
    whh1 = reorder_rows(params["w_hh1"]).T                          # (H, 4H)
    b1 = reorder_vec(params["b_ih1"] + params["b_hh1"]).reshape(1, 4 * H)
    wih2 = reorder_rows(params["w_ih2"]).T                          # (H, 4H)
    whh2 = reorder_rows(params["w_hh2"]).T                          # (H, 4H)
    b2 = reorder_vec(params["b_ih2"] + params["b_hh2"]).reshape(1, 4 * H)
    wlin = params["w_lin"].T                                        # (H, F)
    blin = params["b_lin"].reshape(1, F)
    whio = params["w_hio"].T                                        # (H, O)
    bhio = params["b_hio"].reshape(1, params["w_hio"].shape[0])

    # time-major, batch-padded, flattened to (T*Bp, F)
    x_tbf = jnp.transpose(x_btf, (1, 0, 2)).astype(jnp.float32)     # (T, B, F)
    if Bp != B:
        x_tbf = jnp.pad(x_tbf, ((0, 0), (0, Bp - B), (0, 0)))
    x_flat = x_tbf.reshape(T * Bp, F)

    # Cell-1 input projection for the whole sequence, computed once outside the
    # kernel (K = F = 4 degenerate matmul; keeps the narrow-lane x out of VMEM
    # and the recurrent chain down to h1 @ whh1 only). Lane-dense (T*Bp, 4H).
    gx = x_flat @ wih1 + b1                                          # (T*Bp, 4H)

    vmem = pl.BlockSpec(memory_space=pltpu.MemorySpace.VMEM)
    out = pl.pallas_call(
        functools.partial(_sequence_fc_kernel, seq_len=T, future=future),
        out_shape=jax.ShapeDtypeStruct((Bp, O), jnp.float32),
        in_specs=[vmem] * 11,
        out_specs=vmem,
        compiler_params=pltpu.CompilerParams(vmem_limit_bytes=64 << 20),
    )(gx, wih1, whh1, b1, wih2, whh2, b2, wlin, blin, whio, bhio)

    return out[:B, None, :]                                          # unsqueeze(1)


# -------------------- pure-JAX reference (for verification) --------------------
def sequence_fc_reference(x_btf, params, future=1):
    B, T, F = x_btf.shape
    H = params["w_hh1"].shape[1]

    def cell(x, h, c, w_ih, w_hh, b_ih, b_hh):
        g = x @ w_ih.T + b_ih + h @ w_hh.T + b_hh
        i = jax.nn.sigmoid(g[:, 0 * H:1 * H])
        f = jax.nn.sigmoid(g[:, 1 * H:2 * H])
        gg = jnp.tanh(g[:, 2 * H:3 * H])
        o = jax.nn.sigmoid(g[:, 3 * H:4 * H])
        c = f * c + i * gg
        return o * jnp.tanh(c), c

    h1 = c1 = h2 = c2 = jnp.zeros((B, H), jnp.float32)
    out = jnp.zeros((B, F), jnp.float32)
    for t in range(T):
        h1, c1 = cell(x_btf[:, t, :], h1, c1, params["w_ih1"], params["w_hh1"],
                      params["b_ih1"], params["b_hh1"])
        h2, c2 = cell(h1, h2, c2, params["w_ih2"], params["w_hh2"],
                      params["b_ih2"], params["b_hh2"])
        out = h2 @ params["w_lin"].T + params["b_lin"]
    for _ in range(future):
        h1, c1 = cell(out, h1, c1, params["w_ih1"], params["w_hh1"],
                      params["b_ih1"], params["b_hh1"])
        h2, c2 = cell(h1, h2, c2, params["w_ih2"], params["w_hh2"],
                      params["b_ih2"], params["b_hh2"])
        out = h2 @ params["w_hio"].T + params["b_hio"]
    return out[:, None, :]


def init_params(key, in_feature, out_feature, hid_feature):
    H = hid_feature
    ks = jax.random.split(key, 14)
    u = lambda k, shape, bound: jax.random.uniform(
        k, shape, jnp.float32, minval=-bound, maxval=bound)
    bh = 1.0 / jnp.sqrt(H)
    return {
        "w_ih1": u(ks[0], (4 * H, in_feature), bh),
        "w_hh1": u(ks[1], (4 * H, H), bh),
        "b_ih1": u(ks[2], (4 * H,), bh),
        "b_hh1": u(ks[3], (4 * H,), bh),
        "w_ih2": u(ks[4], (4 * H, H), bh),
        "w_hh2": u(ks[5], (4 * H, H), bh),
        "b_ih2": u(ks[6], (4 * H,), bh),
        "b_hh2": u(ks[7], (4 * H,), bh),
        "w_lin": u(ks[8], (in_feature, H), bh),
        "b_lin": u(ks[9], (in_feature,), bh),
        "w_hio": u(ks[10], (out_feature, H), bh),
        "b_hio": u(ks[11], (out_feature,), bh),
    }


if __name__ == "__main__":
    key = jax.random.PRNGKey(0)
    k_x, k_p = jax.random.split(key)

    B, T, IN_F, OUT_F, HID = 4, 8, 4, 2, 128   # hid_feature matches module default
    params = init_params(k_p, IN_F, OUT_F, HID)
    x = jax.random.normal(k_x, (B, T, IN_F), jnp.float32)

    out = sequence_fc_forward(x, params, future=1)     # (B, 1, OUT_F)
    out = jax.block_until_ready(out)

    ref = jax.block_until_ready(sequence_fc_reference(x, params, future=1))
    assert out.shape == (B, 1, OUT_F)
    assert jnp.allclose(out, ref, rtol=1e-4, atol=1e-4), (out, ref)

    print("KERNEL_OK")
</pallas_src>

<mosaic_0001>
module attributes {stable_mosaic.version = 11 : i64} {
  func.func @_sequence_fc_kernel(%arg0: memref<64x512xf32, #tpu.memory_space<vmem>>, %arg1: memref<4x512xf32, #tpu.memory_space<vmem>>, %arg2: memref<128x512xf32, #tpu.memory_space<vmem>>, %arg3: memref<1x512xf32, #tpu.memory_space<vmem>>, %arg4: memref<128x512xf32, #tpu.memory_space<vmem>>, %arg5: memref<128x512xf32, #tpu.memory_space<vmem>>, %arg6: memref<1x512xf32, #tpu.memory_space<vmem>>, %arg7: memref<128x4xf32, #tpu.memory_space<vmem>>, %arg8: memref<1x4xf32, #tpu.memory_space<vmem>>, %arg9: memref<128x2xf32, #tpu.memory_space<vmem>>, %arg10: memref<1x2xf32, #tpu.memory_space<vmem>>, %arg11: memref<8x2xf32, #tpu.memory_space<vmem>>) attributes {dimension_semantics = [], scalar_prefetch = 0 : i64, scratch_operands = 0 : i64, tpu.core_type = #tpu.core_type<tc>} {
    %c0 = arith.constant 0 : index
    %c0_0 = arith.constant 0 : index
    %0 = vector.load %arg3[%c0, %c0_0] : memref<1x512xf32, #tpu.memory_space<vmem>>, vector<1x512xf32>
    %1 = vector.shape_cast %0 : vector<1x512xf32> to vector<1x512xf32>
    %2 = vector.broadcast %1 : vector<1x512xf32> to vector<8x512xf32>
    %c0_1 = arith.constant 0 : index
    %c0_2 = arith.constant 0 : index
    %3 = vector.load %arg6[%c0_1, %c0_2] : memref<1x512xf32, #tpu.memory_space<vmem>>, vector<1x512xf32>
    %4 = vector.shape_cast %3 : vector<1x512xf32> to vector<1x512xf32>
    %5 = vector.broadcast %4 : vector<1x512xf32> to vector<8x512xf32>
    %cst = arith.constant 0.000000e+00 : f32
    %6 = vector.broadcast %cst : f32 to vector<8x128xf32>
    %c0_i32 = arith.constant 0 : i32
    %c8_i32 = arith.constant 8 : i32
    %7 = arith.muli %c0_i32, %c8_i32 : i32
    %8 = tpu.assume_multiple %7, 8 : i32
    %c0_3 = arith.constant 0 : index
    %c0_4 = arith.constant 0 : index
    %9 = vector.load %arg5[%c0_3, %c0_4] : memref<128x512xf32, #tpu.memory_space<vmem>>, vector<128x512xf32>
    %cst_5 = arith.constant dense<0.000000e+00> : vector<8x512xf32>
    %10 = tpu.matmul %6, %9, %cst_5 {dimension_numbers = #tpu.dot_dimension_numbers<[1], [0], [0], [1], [0, 0, 1, 1], [], []>} : vector<8x128xf32>, vector<128x512xf32>, vector<8x512xf32> -> vector<8x512xf32>
    %11 = arith.addf %10, %5 : vector<8x512xf32>
    %12 = arith.index_cast %8 : i32 to index
    %c0_6 = arith.constant 0 : index
    %13 = vector.load %arg0[%12, %c0_6] : memref<64x512xf32, #tpu.memory_space<vmem>>, vector<8x512xf32>
    %c0_7 = arith.constant 0 : index
    %c0_8 = arith.constant 0 : index
    %14 = vector.load %arg2[%c0_7, %c0_8] : memref<128x512xf32, #tpu.memory_space<vmem>>, vector<128x512xf32>
    %cst_9 = arith.constant dense<0.000000e+00> : vector<8x512xf32>
    %15 = tpu.matmul %6, %14, %cst_9 {dimension_numbers = #tpu.dot_dimension_numbers<[1], [0], [0], [1], [0, 0, 1, 1], [], []>} : vector<8x128xf32>, vector<128x512xf32>, vector<8x512xf32> -> vector<8x512xf32>
    %16 = arith.addf %13, %15 : vector<8x512xf32>
    %17 = vector.extract_strided_slice %16 {offsets = [0, 0], sizes = [8, 384], strides = [1, 1]} : vector<8x512xf32> to vector<8x384xf32>
    %cst_10 = arith.constant 5.000000e-01 : f32
    %18 = vector.broadcast %cst_10 : f32 to vector<8x384xf32>
    %19 = arith.mulf %18, %17 : vector<8x384xf32>
    %20 = math.tanh %19 : vector<8x384xf32>
    %cst_11 = arith.constant 5.000000e-01 : f32
    %21 = vector.broadcast %cst_11 : f32 to vector<8x384xf32>
    %22 = arith.mulf %21, %20 : vector<8x384xf32>
    %cst_12 = arith.constant 5.000000e-01 : f32
    %23 = vector.broadcast %cst_12 : f32 to vector<8x384xf32>
    %24 = arith.addf %22, %23 : vector<8x384xf32>
    %25 = vector.extract_strided_slice %24 {offsets = [0, 0], sizes = [8, 128], strides = [1, 1]} : vector<8x384xf32> to vector<8x128xf32>
    %26 = vector.extract_strided_slice %24 {offsets = [0, 128], sizes = [8, 128], strides = [1, 1]} : vector<8x384xf32> to vector<8x128xf32>
    %27 = vector.extract_strided_slice %24 {offsets = [0, 256], sizes = [8, 128], strides = [1, 1]} : vector<8x384xf32> to vector<8x128xf32>
    %28 = vector.extract_strided_slice %16 {offsets = [0, 384], sizes = [8, 128], strides = [1, 1]} : vector<8x512xf32> to vector<8x128xf32>
    %29 = math.tanh %28 : vector<8x128xf32>
    %30 = arith.mulf %26, %6 : vector<8x128xf32>
    %31 = arith.mulf %25, %29 : vector<8x128xf32>
    %32 = arith.addf %30, %31 : vector<8x128xf32>
    %33 = math.tanh %32 : vector<8x128xf32>
    %34 = arith.mulf %27, %33 : vector<8x128xf32>
    %c0_13 = arith.constant 0 : index
    %c0_14 = arith.constant 0 : index
    %35 = vector.load %arg4[%c0_13, %c0_14] : memref<128x512xf32, #tpu.memory_space<vmem>>, vector<128x512xf32>
    %cst_15 = arith.constant dense<0.000000e+00> : vector<8x512xf32>
    %36 = tpu.matmul %34, %35, %cst_15 {dimension_numbers = #tpu.dot_dimension_numbers<[1], [0], [0], [1], [0, 0, 1, 1], [], []>} : vector<8x128xf32>, vector<128x512xf32>, vector<8x512xf32> -> vector<8x512xf32>
    %37 = arith.addf %36, %11 : vector<8x512xf32>
    %38 = vector.extract_strided_slice %37 {offsets = [0, 0], sizes = [8, 384], strides = [1, 1]} : vector<8x512xf32> to vector<8x384xf32>
    %cst_16 = arith.constant 5.000000e-01 : f32
    %39 = vector.broadcast %cst_16 : f32 to vector<8x384xf32>
    %40 = arith.mulf %39, %38 : vector<8x384xf32>
    %41 = math.tanh %40 : vector<8x384xf32>
    %cst_17 = arith.constant 5.000000e-01 : f32
    %42 = vector.broadcast %cst_17 : f32 to vector<8x384xf32>
    %43 = arith.mulf %42, %41 : vector<8x384xf32>
    %cst_18 = arith.constant 5.000000e-01 : f32
    %44 = vector.broadcast %cst_18 : f32 to vector<8x384xf32>
    %45 = arith.addf %43, %44 : vector<8x384xf32>
    %46 = vector.extract_strided_slice %45 {offsets = [0, 0], sizes = [8, 128], strides = [1, 1]} : vector<8x384xf32> to vector<8x128xf32>
    %47 = vector.extract_strided_slice %45 {offsets = [0, 128], sizes = [8, 128], strides = [1, 1]} : vector<8x384xf32> to vector<8x128xf32>
    %48 = vector.extract_strided_slice %45 {offsets = [0, 256], sizes = [8, 128], strides = [1, 1]} : vector<8x384xf32> to vector<8x128xf32>
    %49 = vector.extract_strided_slice %37 {offsets = [0, 384], sizes = [8, 128], strides = [1, 1]} : vector<8x512xf32> to vector<8x128xf32>
    %50 = math.tanh %49 : vector<8x128xf32>
    %51 = arith.mulf %47, %6 : vector<8x128xf32>
    %52 = arith.mulf %46, %50 : vector<8x128xf32>
    %53 = arith.addf %51, %52 : vector<8x128xf32>
    %54 = math.tanh %53 : vector<8x128xf32>
    %55 = arith.mulf %48, %54 : vector<8x128xf32>
    %c1_i32 = arith.constant 1 : i32
    %c8_i32_19 = arith.constant 8 : i32
    %56 = arith.muli %c1_i32, %c8_i32_19 : i32
    %57 = tpu.assume_multiple %56, 8 : i32
    %c0_20 = arith.constant 0 : index
    %c0_21 = arith.constant 0 : index
    %58 = vector.load %arg5[%c0_20, %c0_21] : memref<128x512xf32, #tpu.memory_space<vmem>>, vector<128x512xf32>
    %cst_22 = arith.constant dense<0.000000e+00> : vector<8x512xf32>
    %59 = tpu.matmul %55, %58, %cst_22 {dimension_numbers = #tpu.dot_dimension_numbers<[1], [0], [0], [1], [0, 0, 1, 1], [], []>} : vector<8x128xf32>, vector<128x512xf32>, vector<8x512xf32> -> vector<8x512xf32>
    %60 = arith.addf %59, %5 : vector<8x512xf32>
    %61 = arith.index_cast %57 : i32 to index
    %c0_23 = arith.constant 0 : index
    %62 = vector.load %arg0[%61, %c0_23] : memref<64x512xf32, #tpu.memory_space<vmem>>, vector<8x512xf32>
    %c0_24 = arith.constant 0 : index
    %c0_25 = arith.constant 0 : index
    %63 = vector.load %arg2[%c0_24, %c0_25] : memref<128x512xf32, #tpu.memory_space<vmem>>, vector<128x512xf32>
    %cst_26 = arith.constant dense<0.000000e+00> : vector<8x512xf32>
    %64 = tpu.matmul %34, %63, %cst_26 {dimension_numbers = #tpu.dot_dimension_numbers<[1], [0], [0], [1], [0, 0, 1, 1], [], []>} : vector<8x128xf32>, vector<128x512xf32>, vector<8x512xf32> -> vector<8x512xf32>
    %65 = arith.addf %62, %64 : vector<8x512xf32>
    %66 = vector.extract_strided_slice %65 {offsets = [0, 0], sizes = [8, 384], strides = [1, 1]} : vector<8x512xf32> to vector<8x384xf32>
    %cst_27 = arith.constant 5.000000e-01 : f32
    %67 = vector.broadcast %cst_27 : f32 to vector<8x384xf32>
    %68 = arith.mulf %67, %66 : vector<8x384xf32>
    %69 = math.tanh %68 : vector<8x384xf32>
    %cst_28 = arith.constant 5.000000e-01 : f32
    %70 = vector.broadcast %cst_28 : f32 to vector<8x384xf32>
    %71 = arith.mulf %70, %69 : vector<8x384xf32>
    %cst_29 = arith.constant 5.000000e-01 : f32
    %72 = vector.broadcast %cst_29 : f32 to vector<8x384xf32>
    %73 = arith.addf %71, %72 : vector<8x384xf32>
    %74 = vector.extract_strided_slice %73 {offsets = [0, 0], sizes = [8, 128], strides = [1, 1]} : vector<8x384xf32> to vector<8x128xf32>
    %75 = vector.extract_strided_slice %73 {offsets = [0, 128], sizes = [8, 128], strides = [1, 1]} : vector<8x384xf32> to vector<8x128xf32>
    %76 = vector.extract_strided_slice %73 {offsets = [0, 256], sizes = [8, 128], strides = [1, 1]} : vector<8x384xf32> to vector<8x128xf32>
    %77 = vector.extract_strided_slice %65 {offsets = [0, 384], sizes = [8, 128], strides = [1, 1]} : vector<8x512xf32> to vector<8x128xf32>
    %78 = math.tanh %77 : vector<8x128xf32>
    %79 = arith.mulf %75, %32 : vector<8x128xf32>
    %80 = arith.mulf %74, %78 : vector<8x128xf32>
    %81 = arith.addf %79, %80 : vector<8x128xf32>
    %82 = math.tanh %81 : vector<8x128xf32>
    %83 = arith.mulf %76, %82 : vector<8x128xf32>
    %c0_30 = arith.constant 0 : index
    %c0_31 = arith.constant 0 : index
    %84 = vector.load %arg4[%c0_30, %c0_31] : memref<128x512xf32, #tpu.memory_space<vmem>>, vector<128x512xf32>
    %cst_32 = arith.constant dense<0.000000e+00> : vector<8x512xf32>
    %85 = tpu.matmul %83, %84, %cst_32 {dimension_numbers = #tpu.dot_dimension_numbers<[1], [0], [0], [1], [0, 0, 1, 1], [], []>} : vector<8x128xf32>, vector<128x512xf32>, vector<8x512xf32> -> vector<8x512xf32>
    %86 = arith.addf %85, %60 : vector<8x512xf32>
    %87 = vector.extract_strided_slice %86 {offsets = [0, 0], sizes = [8, 384], strides = [1, 1]} : vector<8x512xf32> to vector<8x384xf32>
    %cst_33 = arith.constant 5.000000e-01 : f32
    %88 = vector.broadcast %cst_33 : f32 to vector<8x384xf32>
    %89 = arith.mulf %88, %87 : vector<8x384xf32>
    %90 = math.tanh %89 : vector<8x384xf32>
    %cst_34 = arith.constant 5.000000e-01 : f32
    %91 = vector.broadcast %cst_34 : f32 to vector<8x384xf32>
    %92 = arith.mulf %91, %90 : vector<8x384xf32>
    %cst_35 = arith.constant 5.000000e-01 : f32
    %93 = vector.broadcast %cst_35 : f32 to vector<8x384xf32>
    %94 = arith.addf %92, %93 : vector<8x384xf32>
    %95 = vector.extract_strided_slice %94 {offsets = [0, 0], sizes = [8, 128], strides = [1, 1]} : vector<8x384xf32> to vector<8x128xf32>
    %96 = vector.extract_strided_slice %94 {offsets = [0, 128], sizes = [8, 128], strides = [1, 1]} : vector<8x384xf32> to vector<8x128xf32>
    %97 = vector.extract_strided_slice %94 {offsets = [0, 256], sizes = [8, 128], strides = [1, 1]} : vector<8x384xf32> to vector<8x128xf32>
    %98 = vector.extract_strided_slice %86 {offsets = [0, 384], sizes = [8, 128], strides = [1, 1]} : vector<8x512xf32> to vector<8x128xf32>
    %99 = math.tanh %98 : vector<8x128xf32>
    %100 = arith.mulf %96, %53 : vector<8x128xf32>
    %101 = arith.mulf %95, %99 : vector<8x128xf32>
    %102 = arith.addf %100, %101 : vector<8x128xf32>
    %103 = math.tanh %102 : vector<8x128xf32>
    %104 = arith.mulf %97, %103 : vector<8x128xf32>
    %c2_i32 = arith.constant 2 : i32
    %c8_i32_36 = arith.constant 8 : i32
    %105 = arith.muli %c2_i32, %c8_i32_36 : i32
    %106 = tpu.assume_multiple %105, 8 : i32
    %c0_37 = arith.constant 0 : index
    %c0_38 = arith.constant 0 : index
    %107 = vector.load %arg5[%c0_37, %c0_38] : memref<128x512xf32, #tpu.memory_space<vmem>>, vector<128x512xf32>
    %cst_39 = arith.constant dense<0.000000e+00> : vector<8x512xf32>
    %108 = tpu.matmul %104, %107, %cst_39 {dimension_numbers = #tpu.dot_dimension_numbers<[1], [0], [0], [1], [0, 0, 1, 1], [], []>} : vector<8x128xf32>, vector<128x512xf32>, vector<8x512xf32> -> vector<8x512xf32>
    %109 = arith.addf %108, %5 : vector<8x512xf32>
    %110 = arith.index_cast %106 : i32 to index
    %c0_40 = arith.constant 0 : index
    %111 = vector.load %arg0[%110, %c0_40] : memref<64x512xf32, #tpu.memory_space<vmem>>, vector<8x512xf32>
    %c0_41 = arith.constant 0 : index
    %c0_42 = arith.constant 0 : index
    %112 = vector.load %arg2[%c0_41, %c0_42] : memref<128x512xf32, #tpu.memory_space<vmem>>, vector<128x512xf32>
    %cst_43 = arith.constant dense<0.000000e+00> : vector<8x512xf32>
    %113 = tpu.matmul %83, %112, %cst_43 {dimension_numbers = #tpu.dot_dimension_numbers<[1], [0], [0], [1], [0, 0, 1, 1], [], []>} : vector<8x128xf32>, vector<128x512xf32>, vector<8x512xf32> -> vector<8x512xf32>
    %114 = arith.addf %111, %113 : vector<8x512xf32>
    %115 = vector.extract_strided_slice %114 {offsets = [0, 0], sizes = [8, 384], strides = [1, 1]} : vector<8x512xf32> to vector<8x384xf32>
    %cst_44 = arith.constant 5.000000e-01 : f32
    %116 = vector.broadcast %cst_44 : f32 to vector<8x384xf32>
    %117 = arith.mulf %116, %115 : vector<8x384xf32>
    %118 = math.tanh %117 : vector<8x384xf32>
    %cst_45 = arith.constant 5.000000e-01 : f32
    %119 = vector.broadcast %cst_45 : f32 to vector<8x384xf32>
    %120 = arith.mulf %119, %118 : vector<8x384xf32>
    %cst_46 = arith.constant 5.000000e-01 : f32
    %121 = vector.broadcast %cst_46 : f32 to vector<8x384xf32>
    %122 = arith.addf %120, %121 : vector<8x384xf32>
    %123 = vector.extract_strided_slice %122 {offsets = [0, 0], sizes = [8, 128], strides = [1, 1]} : vector<8x384xf32> to vector<8x128xf32>
    %124 = vector.extract_strided_slice %122 {offsets = [0, 128], sizes = [8, 128], strides = [1, 1]} : vector<8x384xf32> to vector<8x128xf32>
    %125 = vector.extract_strided_slice %122 {offsets = [0, 256], sizes = [8, 128], strides = [1, 1]} : vector<8x384xf32> to vector<8x128xf32>
    %126 = vector.extract_strided_slice %114 {offsets = [0, 384], sizes = [8, 128], strides = [1, 1]} : vector<8x512xf32> to vector<8x128xf32>
    %127 = math.tanh %126 : vector<8x128xf32>
    %128 = arith.mulf %124, %81 : vector<8x128xf32>
    %129 = arith.mulf %123, %127 : vector<8x128xf32>
    %130 = arith.addf %128, %129 : vector<8x128xf32>
    %131 = math.tanh %130 : vector<8x128xf32>
    %132 = arith.mulf %125, %131 : vector<8x128xf32>
    %c0_47 = arith.constant 0 : index
    %c0_48 = arith.constant 0 : index
    %133 = vector.load %arg4[%c0_47, %c0_48] : memref<128x512xf32, #tpu.memory_space<vmem>>, vector<128x512xf32>
    %cst_49 = arith.constant dense<0.000000e+00> : vector<8x512xf32>
    %134 = tpu.matmul %132, %133, %cst_49 {dimension_numbers = #tpu.dot_dimension_numbers<[1], [0], [0], [1], [0, 0, 1, 1], [], []>} : vector<8x128xf32>, vector<128x512xf32>, vector<8x512xf32> -> vector<8x512xf32>
    %135 = arith.addf %134, %109 : vector<8x512xf32>
    %136 = vector.extract_strided_slice %135 {offsets = [0, 0], sizes = [8, 384], strides = [1, 1]} : vector<8x512xf32> to vector<8x384xf32>
    %cst_50 = arith.constant 5.000000e-01 : f32
    %137 = vector.broadcast %cst_50 : f32 to vector<8x384xf32>
    %138 = arith.mulf %137, %136 : vector<8x384xf32>
    %139 = math.tanh %138 : vector<8x384xf32>
    %cst_51 = arith.constant 5.000000e-01 : f32
    %140 = vector.broadcast %cst_51 : f32 to vector<8x384xf32>
    %141 = arith.mulf %140, %139 : vector<8x384xf32>
    %cst_52 = arith.constant 5.000000e-01 : f32
    %142 = vector.broadcast %cst_52 : f32 to vector<8x384xf32>
    %143 = arith.addf %141, %142 : vector<8x384xf32>
    %144 = vector.extract_strided_slice %143 {offsets = [0, 0], sizes = [8, 128], strides = [1, 1]} : vector<8x384xf32> to vector<8x128xf32>
    %145 = vector.extract_strided_slice %143 {offsets = [0, 128], sizes = [8, 128], strides = [1, 1]} : vector<8x384xf32> to vector<8x128xf32>
    %146 = vector.extract_strided_slice %143 {offsets = [0, 256], sizes = [8, 128], strides = [1, 1]} : vector<8x384xf32> to vector<8x128xf32>
    %147 = vector.extract_strided_slice %135 {offsets = [0, 384], sizes = [8, 128], strides = [1, 1]} : vector<8x512xf32> to vector<8x128xf32>
    %148 = math.tanh %147 : vector<8x128xf32>
    %149 = arith.mulf %145, %102 : vector<8x128xf32>
    %150 = arith.mulf %144, %148 : vector<8x128xf32>
    %151 = arith.addf %149, %150 : vector<8x128xf32>
    %152 = math.tanh %151 : vector<8x128xf32>
    %153 = arith.mulf %146, %152 : vector<8x128xf32>
    %c3_i32 = arith.constant 3 : i32
    %c8_i32_53 = arith.constant 8 : i32
    %154 = arith.muli %c3_i32, %c8_i32_53 : i32
    %155 = tpu.assume_multiple %154, 8 : i32
    %c0_54 = arith.constant 0 : index
    %c0_55 = arith.constant 0 : index
    %156 = vector.load %arg5[%c0_54, %c0_55] : memref<128x512xf32, #tpu.memory_space<vmem>>, vector<128x512xf32>
    %cst_56 = arith.constant dense<0.000000e+00> : vector<8x512xf32>
    %157 = tpu.matmul %153, %156, %cst_56 {dimension_numbers = #tpu.dot_dimension_numbers<[1], [0], [0], [1], [0, 0, 1, 1], [], []>} : vector<8x128xf32>, vector<128x512xf32>, vector<8x512xf32> -> vector<8x512xf32>
    %158 = arith.addf %157, %5 : vector<8x512xf32>
    %159 = arith.index_cast %155 : i32 to index
    %c0_57 = arith.constant 0 : index
    %160 = vector.load %arg0[%159, %c0_57] : memref<64x512xf32, #tpu.memory_space<vmem>>, vector<8x512xf32>
    %c0_58 = arith.constant 0 : index
    %c0_59 = arith.constant 0 : index
    %161 = vector.load %arg2[%c0_58, %c0_59] : memref<128x512xf32, #tpu.memory_space<vmem>>, vector<128x512xf32>
    %cst_60 = arith.constant dense<0.000000e+00> : vector<8x512xf32>
    %162 = tpu.matmul %132, %161, %cst_60 {dimension_numbers = #tpu.dot_dimension_numbers<[1], [0], [0], [1], [0, 0, 1, 1], [], []>} : vector<8x128xf32>, vector<128x512xf32>, vector<8x512xf32> -> vector<8x512xf32>
    %163 = arith.addf %160, %162 : vector<8x512xf32>
    %164 = vector.extract_strided_slice %163 {offsets = [0, 0], sizes = [8, 384], strides = [1, 1]} : vector<8x512xf32> to vector<8x384xf32>
    %cst_61 = arith.constant 5.000000e-01 : f32
    %165 = vector.broadcast %cst_61 : f32 to vector<8x384xf32>
    %166 = arith.mulf %165, %164 : vector<8x384xf32>
    %167 = math.tanh %166 : vector<8x384xf32>
    %cst_62 = arith.constant 5.000000e-01 : f32
    %168 = vector.broadcast %cst_62 : f32 to vector<8x384xf32>
    %169 = arith.mulf %168, %167 : vector<8x384xf32>
    %cst_63 = arith.constant 5.000000e-01 : f32
    %170 = vector.broadcast %cst_63 : f32 to vector<8x384xf32>
    %171 = arith.addf %169, %170 : vector<8x384xf32>
    %172 = vector.extract_strided_slice %171 {offsets = [0, 0], sizes = [8, 128], strides = [1, 1]} : vector<8x384xf32> to vector<8x128xf32>
    %173 = vector.extract_strided_slice %171 {offsets = [0, 128], sizes = [8, 128], strides = [1, 1]} : vector<8x384xf32> to vector<8x128xf32>
    %174 = vector.extract_strided_slice %171 {offsets = [0, 256], sizes = [8, 128], strides = [1, 1]} : vector<8x384xf32> to vector<8x128xf32>
    %175 = vector.extract_strided_slice %163 {offsets = [0, 384], sizes = [8, 128], strides = [1, 1]} : vector<8x512xf32> to vector<8x128xf32>
    %176 = math.tanh %175 : vector<8x128xf32>
    %177 = arith.mulf %173, %130 : vector<8x128xf32>
    %178 = arith.mulf %172, %176 : vector<8x128xf32>
    %179 = arith.addf %177, %178 : vector<8x128xf32>
    %180 = math.tanh %179 : vector<8x128xf32>
    %181 = arith.mulf %174, %180 : vector<8x128xf32>
    %c0_64 = arith.constant 0 : index
    %c0_65 = arith.constant 0 : index
    %182 = vector.load %arg4[%c0_64, %c0_65] : memref<128x512xf32, #tpu.memory_space<vmem>>, vector<128x512xf32>
    %cst_66 = arith.constant dense<0.000000e+00> : vector<8x512xf32>
    %183 = tpu.matmul %181, %182, %cst_66 {dimension_numbers = #tpu.dot_dimension_numbers<[1], [0], [0], [1], [0, 0, 1, 1], [], []>} : vector<8x128xf32>, vector<128x512xf32>, vector<8x512xf32> -> vector<8x512xf32>
    %184 = arith.addf %183, %158 : vector<8x512xf32>
    %185 = vector.extract_strided_slice %184 {offsets = [0, 0], sizes = [8, 384], strides = [1, 1]} : vector<8x512xf32> to vector<8x384xf32>
    %cst_67 = arith.constant 5.000000e-01 : f32
    %186 = vector.broadcast %cst_67 : f32 to vector<8x384xf32>
    %187 = arith.mulf %186, %185 : vector<8x384xf32>
    %188 = math.tanh %187 : vector<8x384xf32>
    %cst_68 = arith.constant 5.000000e-01 : f32
    %189 = vector.broadcast %cst_68 : f32 to vector<8x384xf32>
    %190 = arith.mulf %189, %188 : vector<8x384xf32>
    %cst_69 = arith.constant 5.000000e-01 : f32
    %191 = vector.broadcast %cst_69 : f32 to vector<8x384xf32>
    %192 = arith.addf %190, %191 : vector<8x384xf32>
    %193 = vector.extract_strided_slice %192 {offsets = [0, 0], sizes = [8, 128], strides = [1, 1]} : vector<8x384xf32> to vector<8x128xf32>
    %194 = vector.extract_strided_slice %192 {offsets = [0, 128], sizes = [8, 128], strides = [1, 1]} : vector<8x384xf32> to vector<8x128xf32>
    %195 = vector.extract_strided_slice %192 {offsets = [0, 256], sizes = [8, 128], strides = [1, 1]} : vector<8x384xf32> to vector<8x128xf32>
    %196 = vector.extract_strided_slice %184 {offsets = [0, 384], sizes = [8, 128], strides = [1, 1]} : vector<8x512xf32> to vector<8x128xf32>
    %197 = math.tanh %196 : vector<8x128xf32>
    %198 = arith.mulf %194, %151 : vector<8x128xf32>
    %199 = arith.mulf %193, %197 : vector<8x128xf32>
    %200 = arith.addf %198, %199 : vector<8x128xf32>
    %201 = math.tanh %200 : vector<8x128xf32>
    %202 = arith.mulf %195, %201 : vector<8x128xf32>
    %c4_i32 = arith.constant 4 : i32
    %c8_i32_70 = arith.constant 8 : i32
    %203 = arith.muli %c4_i32, %c8_i32_70 : i32
    %204 = tpu.assume_multiple %203, 8 : i32
    %c0_71 = arith.constant 0 : index
    %c0_72 = arith.constant 0 : index
    %205 = vector.load %arg5[%c0_71, %c0_72] : memref<128x512xf32, #tpu.memory_space<vmem>>, vector<128x512xf32>
    %cst_73 = arith.constant dense<0.000000e+00> : vector<8x512xf32>
    %206 = tpu.matmul %202, %205, %cst_73 {dimension_numbers = #tpu.dot_dimension_numbers<[1], [0], [0], [1], [0, 0, 1, 1], [], []>} : vector<8x128xf32>, vector<128x512xf32>, vector<8x512xf32> -> vector<8x512xf32>
    %207 = arith.addf %206, %5 : vector<8x512xf32>
    %208 = arith.index_cast %204 : i32 to index
    %c0_74 = arith.constant 0 : index
    %209 = vector.load %arg0[%208, %c0_74] : memref<64x512xf32, #tpu.memory_space<vmem>>, vector<8x512xf32>
    %c0_75 = arith.constant 0 : index
    %c0_76 = arith.constant 0 : index
    %210 = vector.load %arg2[%c0_75, %c0_76] : memref<128x512xf32, #tpu.memory_space<vmem>>, vector<128x512xf32>
    %cst_77 = arith.constant dense<0.000000e+00> : vector<8x512xf32>
    %211 = tpu.matmul %181, %210, %cst_77 {dimension_numbers = #tpu.dot_dimension_numbers<[1], [0], [0], [1], [0, 0, 1, 1], [], []>} : vector<8x128xf32>, vector<128x512xf32>, vector<8x512xf32> -> vector<8x512xf32>
    %212 = arith.addf %209, %211 : vector<8x512xf32>
    %213 = vector.extract_strided_slice %212 {offsets = [0, 0], sizes = [8, 384], strides = [1, 1]} : vector<8x512xf32> to vector<8x384xf32>
    %cst_78 = arith.constant 5.000000e-01 : f32
    %214 = vector.broadcast %cst_78 : f32 to vector<8x384xf32>
    %215 = arith.mulf %214, %213 : vector<8x384xf32>
    %216 = math.tanh %215 : vector<8x384xf32>
    %cst_79 = arith.constant 5.000000e-01 : f32
    %217 = vector.broadcast %cst_79 : f32 to vector<8x384xf32>
    %218 = arith.mulf %217, %216 : vector<8x384xf32>
    %cst_80 = arith.constant 5.000000e-01 : f32
    %219 = vector.broadcast %cst_80 : f32 to vector<8x384xf32>
    %220 = arith.addf %218, %219 : vector<8x384xf32>
    %221 = vector.extract_strided_slice %220 {offsets = [0, 0], sizes = [8, 128], strides = [1, 1]} : vector<8x384xf32> to vector<8x128xf32>
    %222 = vector.extract_strided_slice %220 {offsets = [0, 128], sizes = [8, 128], strides = [1, 1]} : vector<8x384xf32> to vector<8x128xf32>
    %223 = vector.extract_strided_slice %220 {offsets = [0, 256], sizes = [8, 128], strides = [1, 1]} : vector<8x384xf32> to vector<8x128xf32>
    %224 = vector.extract_strided_slice %212 {offsets = [0, 384], sizes = [8, 128], strides = [1, 1]} : vector<8x512xf32> to vector<8x128xf32>
    %225 = math.tanh %224 : vector<8x128xf32>
    %226 = arith.mulf %222, %179 : vector<8x128xf32>
    %227 = arith.mulf %221, %225 : vector<8x128xf32>
    %228 = arith.addf %226, %227 : vector<8x128xf32>
    %229 = math.tanh %228 : vector<8x128xf32>
    %230 = arith.mulf %223, %229 : vector<8x128xf32>
    %c0_81 = arith.constant 0 : index
    %c0_82 = arith.constant 0 : index
    %231 = vector.load %arg4[%c0_81, %c0_82] : memref<128x512xf32, #tpu.memory_space<vmem>>, vector<128x512xf32>
    %cst_83 = arith.constant dense<0.000000e+00> : vector<8x512xf32>
    %232 = tpu.matmul %230, %231, %cst_83 {dimension_numbers = #tpu.dot_dimension_numbers<[1], [0], [0], [1], [0, 0, 1, 1], [], []>} : vector<8x128xf32>, vector<128x512xf32>, vector<8x512xf32> -> vector<8x512xf32>
    %233 = arith.addf %232, %207 : vector<8x512xf32>
    %234 = vector.extract_strided_slice %233 {offsets = [0, 0], sizes = [8, 384], strides = [1, 1]} : vector<8x512xf32> to vector<8x384xf32>
    %cst_84 = arith.constant 5.000000e-01 : f32
    %235 = vector.broadcast %cst_84 : f32 to vector<8x384xf32>
    %236 = arith.mulf %235, %234 : vector<8x384xf32>
    %237 = math.tanh %236 : vector<8x384xf32>
    %cst_85 = arith.constant 5.000000e-01 : f32
    %238 = vector.broadcast %cst_85 : f32 to vector<8x384xf32>
    %239 = arith.mulf %238, %237 : vector<8x384xf32>
    %cst_86 = arith.constant 5.000000e-01 : f32
    %240 = vector.broadcast %cst_86 : f32 to vector<8x384xf32>
    %241 = arith.addf %239, %240 : vector<8x384xf32>
    %242 = vector.extract_strided_slice %241 {offsets = [0, 0], sizes = [8, 128], strides = [1, 1]} : vector<8x384xf32> to vector<8x128xf32>
    %243 = vector.extract_strided_slice %241 {offsets = [0, 128], sizes = [8, 128], strides = [1, 1]} : vector<8x384xf32> to vector<8x128xf32>
    %244 = vector.extract_strided_slice %241 {offsets = [0, 256], sizes = [8, 128], strides = [1, 1]} : vector<8x384xf32> to vector<8x128xf32>
    %245 = vector.extract_strided_slice %233 {offsets = [0, 384], sizes = [8, 128], strides = [1, 1]} : vector<8x512xf32> to vector<8x128xf32>
    %246 = math.tanh %245 : vector<8x128xf32>
    %247 = arith.mulf %243, %200 : vector<8x128xf32>
    %248 = arith.mulf %242, %246 : vector<8x128xf32>
    %249 = arith.addf %247, %248 : vector<8x128xf32>
    %250 = math.tanh %249 : vector<8x128xf32>
    %251 = arith.mulf %244, %250 : vector<8x128xf32>
    %c5_i32 = arith.constant 5 : i32
    %c8_i32_87 = arith.constant 8 : i32
    %252 = arith.muli %c5_i32, %c8_i32_87 : i32
    %253 = tpu.assume_multiple %252, 8 : i32
    %c0_88 = arith.constant 0 : index
    %c0_89 = arith.constant 0 : index
    %254 = vector.load %arg5[%c0_88, %c0_89] : memref<128x512xf32, #tpu.memory_space<vmem>>, vector<128x512xf32>
    %cst_90 = arith.constant dense<0.000000e+00> : vector<8x512xf32>
    %255 = tpu.matmul %251, %254, %cst_90 {dimension_numbers = #tpu.dot_dimension_numbers<[1], [0], [0], [1], [0, 0, 1, 1], [], []>} : vector<8x128xf32>, vector<128x512xf32>, vector<8x512xf32> -> vector<8x512xf32>
    %256 = arith.addf %255, %5 : vector<8x512xf32>
    %257 = arith.index_cast %253 : i32 to index
    %c0_91 = arith.constant 0 : index
    %258 = vector.load %arg0[%257, %c0_91] : memref<64x512xf32, #tpu.memory_space<vmem>>, vector<8x512xf32>
    %c0_92 = arith.constant 0 : index
    %c0_93 = arith.constant 0 : index
    %259 = vector.load %arg2[%c0_92, %c0_93] : memref<128x512xf32, #tpu.memory_space<vmem>>, vector<128x512xf32>
    %cst_94 = arith.constant dense<0.000000e+00> : vector<8x512xf32>
    %260 = tpu.matmul %230, %259, %cst_94 {dimension_numbers = #tpu.dot_dimension_numbers<[1], [0], [0], [1], [0, 0, 1, 1], [], []>} : vector<8x128xf32>, vector<128x512xf32>, vector<8x512xf32> -> vector<8x512xf32>
    %261 = arith.addf %258, %260 : vector<8x512xf32>
    %262 = vector.extract_strided_slice %261 {offsets = [0, 0], sizes = [8, 384], strides = [1, 1]} : vector<8x512xf32> to vector<8x384xf32>
    %cst_95 = arith.constant 5.000000e-01 : f32
    %263 = vector.broadcast %cst_95 : f32 to vector<8x384xf32>
    %264 = arith.mulf %263, %262 : vector<8x384xf32>
    %265 = math.tanh %264 : vector<8x384xf32>
    %cst_96 = arith.constant 5.000000e-01 : f32
    %266 = vector.broadcast %cst_96 : f32 to vector<8x384xf32>
    %267 = arith.mulf %266, %265 : vector<8x384xf32>
    %cst_97 = arith.constant 5.000000e-01 : f32
    %268 = vector.broadcast %cst_97 : f32 to vector<8x384xf32>
    %269 = arith.addf %267, %268 : vector<8x384xf32>
    %270 = vector.extract_strided_slice %269 {offsets = [0, 0], sizes = [8, 128], strides = [1, 1]} : vector<8x384xf32> to vector<8x128xf32>
    %271 = vector.extract_strided_slice %269 {offsets = [0, 128], sizes = [8, 128], strides = [1, 1]} : vector<8x384xf32> to vector<8x128xf32>
    %272 = vector.extract_strided_slice %269 {offsets = [0, 256], sizes = [8, 128], strides = [1, 1]} : vector<8x384xf32> to vector<8x128xf32>
    %273 = vector.extract_strided_slice %261 {offsets = [0, 384], sizes = [8, 128], strides = [1, 1]} : vector<8x512xf32> to vector<8x128xf32>
    %274 = math.tanh %273 : vector<8x128xf32>
    %275 = arith.mulf %271, %228 : vector<8x128xf32>
    %276 = arith.mulf %270, %274 : vector<8x128xf32>
    %277 = arith.addf %275, %276 : vector<8x128xf32>
    %278 = math.tanh %277 : vector<8x128xf32>
    %279 = arith.mulf %272, %278 : vector<8x128xf32>
    %c0_98 = arith.constant 0 : index
    %c0_99 = arith.constant 0 : index
    %280 = vector.load %arg4[%c0_98, %c0_99] : memref<128x512xf32, #tpu.memory_space<vmem>>, vector<128x512xf32>
    %cst_100 = arith.constant dense<0.000000e+00> : vector<8x512xf32>
    %281 = tpu.matmul %279, %280, %cst_100 {dimension_numbers = #tpu.dot_dimension_numbers<[1], [0], [0], [1], [0, 0, 1, 1], [], []>} : vector<8x128xf32>, vector<128x512xf32>, vector<8x512xf32> -> vector<8x512xf32>
    %282 = arith.addf %281, %256 : vector<8x512xf32>
    %283 = vector.extract_strided_slice %282 {offsets = [0, 0], sizes = [8, 384], strides = [1, 1]} : vector<8x512xf32> to vector<8x384xf32>
    %cst_101 = arith.constant 5.000000e-01 : f32
    %284 = vector.broadcast %cst_101 : f32 to vector<8x384xf32>
    %285 = arith.mulf %284, %283 : vector<8x384xf32>
    %286 = math.tanh %285 : vector<8x384xf32>
    %cst_102 = arith.constant 5.000000e-01 : f32
    %287 = vector.broadcast %cst_102 : f32 to vector<8x384xf32>
    %288 = arith.mulf %287, %286 : vector<8x384xf32>
    %cst_103 = arith.constant 5.000000e-01 : f32
    %289 = vector.broadcast %cst_103 : f32 to vector<8x384xf32>
    %290 = arith.addf %288, %289 : vector<8x384xf32>
    %291 = vector.extract_strided_slice %290 {offsets = [0, 0], sizes = [8, 128], strides = [1, 1]} : vector<8x384xf32> to vector<8x128xf32>
    %292 = vector.extract_strided_slice %290 {offsets = [0, 128], sizes = [8, 128], strides = [1, 1]} : vector<8x384xf32> to vector<8x128xf32>
    %293 = vector.extract_strided_slice %290 {offsets = [0, 256], sizes = [8, 128], strides = [1, 1]} : vector<8x384xf32> to vector<8x128xf32>
    %294 = vector.extract_strided_slice %282 {offsets = [0, 384], sizes = [8, 128], strides = [1, 1]} : vector<8x512xf32> to vector<8x128xf32>
    %295 = math.tanh %294 : vector<8x128xf32>
    %296 = arith.mulf %292, %249 : vector<8x128xf32>
    %297 = arith.mulf %291, %295 : vector<8x128xf32>
    %298 = arith.addf %296, %297 : vector<8x128xf32>
    %299 = math.tanh %298 : vector<8x128xf32>
    %300 = arith.mulf %293, %299 : vector<8x128xf32>
    %c6_i32 = arith.constant 6 : i32
    %c8_i32_104 = arith.constant 8 : i32
    %301 = arith.muli %c6_i32, %c8_i32_104 : i32
    %302 = tpu.assume_multiple %301, 8 : i32
    %c0_105 = arith.constant 0 : index
    %c0_106 = arith.constant 0 : index
    %303 = vector.load %arg5[%c0_105, %c0_106] : memref<128x512xf32, #tpu.memory_space<vmem>>, vector<128x512xf32>
    %cst_107 = arith.constant dense<0.000000e+00> : vector<8x512xf32>
    %304 = tpu.matmul %300, %303, %cst_107 {dimension_numbers = #tpu.dot_dimension_numbers<[1], [0], [0], [1], [0, 0, 1, 1], [], []>} : vector<8x128xf32>, vector<128x512xf32>, vector<8x512xf32> -> vector<8x512xf32>
    %305 = arith.addf %304, %5 : vector<8x512xf32>
    %306 = arith.index_cast %302 : i32 to index
    %c0_108 = arith.constant 0 : index
    %307 = vector.load %arg0[%306, %c0_108] : memref<64x512xf32, #tpu.memory_space<vmem>>, vector<8x512xf32>
    %c0_109 = arith.constant 0 : index
    %c0_110 = arith.constant 0 : index
    %308 = vector.load %arg2[%c0_109, %c0_110] : memref<128x512xf32, #tpu.memory_space<vmem>>, vector<128x512xf32>
    %cst_111 = arith.constant dense<0.000000e+00> : vector<8x512xf32>
    %309 = tpu.matmul %279, %308, %cst_111 {dimension_numbers = #tpu.dot_dimension_numbers<[1], [0], [0], [1], [0, 0, 1, 1], [], []>} : vector<8x128xf32>, vector<128x512xf32>, vector<8x512xf32> -> vector<8x512xf32>
    %310 = arith.addf %307, %309 : vector<8x512xf32>
    %311 = vector.extract_strided_slice %310 {offsets = [0, 0], sizes = [8, 384], strides = [1, 1]} : vector<8x512xf32> to vector<8x384xf32>
    %cst_112 = arith.constant 5.000000e-01 : f32
    %312 = vector.broadcast %cst_112 : f32 to vector<8x384xf32>
    %313 = arith.mulf %312, %311 : vector<8x384xf32>
    %314 = math.tanh %313 : vector<8x384xf32>
    %cst_113 = arith.constant 5.000000e-01 : f32
    %315 = vector.broadcast %cst_113 : f32 to vector<8x384xf32>
    %316 = arith.mulf %315, %314 : vector<8x384xf32>
    %cst_114 = arith.constant 5.000000e-01 : f32
    %317 = vector.broadcast %cst_114 : f32 to vector<8x384xf32>
    %318 = arith.addf %316, %317 : vector<8x384xf32>
    %319 = vector.extract_strided_slice %318 {offsets = [0, 0], sizes = [8, 128], strides = [1, 1]} : vector<8x384xf32> to vector<8x128xf32>
    %320 = vector.extract_strided_slice %318 {offsets = [0, 128], sizes = [8, 128], strides = [1, 1]} : vector<8x384xf32> to vector<8x128xf32>
    %321 = vector.extract_strided_slice %318 {offsets = [0, 256], sizes = [8, 128], strides = [1, 1]} : vector<8x384xf32> to vector<8x128xf32>
    %322 = vector.extract_strided_slice %310 {offsets = [0, 384], sizes = [8, 128], strides = [1, 1]} : vector<8x512xf32> to vector<8x128xf32>
    %323 = math.tanh %322 : vector<8x128xf32>
    %324 = arith.mulf %320, %277 : vector<8x128xf32>
    %325 = arith.mulf %319, %323 : vector<8x128xf32>
    %326 = arith.addf %324, %325 : vector<8x128xf32>
    %327 = math.tanh %326 : vector<8x128xf32>
    %328 = arith.mulf %321, %327 : vector<8x128xf32>
    %c0_115 = arith.constant 0 : index
    %c0_116 = arith.constant 0 : index
    %329 = vector.load %arg4[%c0_115, %c0_116] : memref<128x512xf32, #tpu.memory_space<vmem>>, vector<128x512xf32>
    %cst_117 = arith.constant dense<0.000000e+00> : vector<8x512xf32>
    %330 = tpu.matmul %328, %329, %cst_117 {dimension_numbers = #tpu.dot_dimension_numbers<[1], [0], [0], [1], [0, 0, 1, 1], [], []>} : vector<8x128xf32>, vector<128x512xf32>, vector<8x512xf32> -> vector<8x512xf32>
    %331 = arith.addf %330, %305 : vector<8x512xf32>
    %332 = vector.extract_strided_slice %331 {offsets = [0, 0], sizes = [8, 384], strides = [1, 1]} : vector<8x512xf32> to vector<8x384xf32>
    %cst_118 = arith.constant 5.000000e-01 : f32
    %333 = vector.broadcast %cst_118 : f32 to vector<8x384xf32>
    %334 = arith.mulf %333, %332 : vector<8x384xf32>
    %335 = math.tanh %334 : vector<8x384xf32>
    %cst_119 = arith.constant 5.000000e-01 : f32
    %336 = vector.broadcast %cst_119 : f32 to vector<8x384xf32>
    %337 = arith.mulf %336, %335 : vector<8x384xf32>
    %cst_120 = arith.constant 5.000000e-01 : f32
    %338 = vector.broadcast %cst_120 : f32 to vector<8x384xf32>
    %339 = arith.addf %337, %338 : vector<8x384xf32>
    %340 = vector.extract_strided_slice %339 {offsets = [0, 0], sizes = [8, 128], strides = [1, 1]} : vector<8x384xf32> to vector<8x128xf32>
    %341 = vector.extract_strided_slice %339 {offsets = [0, 128], sizes = [8, 128], strides = [1, 1]} : vector<8x384xf32> to vector<8x128xf32>
    %342 = vector.extract_strided_slice %339 {offsets = [0, 256], sizes = [8, 128], strides = [1, 1]} : vector<8x384xf32> to vector<8x128xf32>
    %343 = vector.extract_strided_slice %331 {offsets = [0, 384], sizes = [8, 128], strides = [1, 1]} : vector<8x512xf32> to vector<8x128xf32>
    %344 = math.tanh %343 : vector<8x128xf32>
    %345 = arith.mulf %341, %298 : vector<8x128xf32>
    %346 = arith.mulf %340, %344 : vector<8x128xf32>
    %347 = arith.addf %345, %346 : vector<8x128xf32>
    %348 = math.tanh %347 : vector<8x128xf32>
    %349 = arith.mulf %342, %348 : vector<8x128xf32>
    %c7_i32 = arith.constant 7 : i32
    %c8_i32_121 = arith.constant 8 : i32
    %350 = arith.muli %c7_i32, %c8_i32_121 : i32
    %351 = tpu.assume_multiple %350, 8 : i32
    %c0_122 = arith.constant 0 : index
    %c0_123 = arith.constant 0 : index
    %352 = vector.load %arg5[%c0_122, %c0_123] : memref<128x512xf32, #tpu.memory_space<vmem>>, vector<128x512xf32>
    %cst_124 = arith.constant dense<0.000000e+00> : vector<8x512xf32>
    %353 = tpu.matmul %349, %352, %cst_124 {dimension_numbers = #tpu.dot_dimension_numbers<[1], [0], [0], [1], [0, 0, 1, 1], [], []>} : vector<8x128xf32>, vector<128x512xf32>, vector<8x512xf32> -> vector<8x512xf32>
    %354 = arith.addf %353, %5 : vector<8x512xf32>
    %355 = arith.index_cast %351 : i32 to index
    %c0_125 = arith.constant 0 : index
    %356 = vector.load %arg0[%355, %c0_125] : memref<64x512xf32, #tpu.memory_space<vmem>>, vector<8x512xf32>
    %c0_126 = arith.constant 0 : index
    %c0_127 = arith.constant 0 : index
    %357 = vector.load %arg2[%c0_126, %c0_127] : memref<128x512xf32, #tpu.memory_space<vmem>>, vector<128x512xf32>
    %cst_128 = arith.constant dense<0.000000e+00> : vector<8x512xf32>
    %358 = tpu.matmul %328, %357, %cst_128 {dimension_numbers = #tpu.dot_dimension_numbers<[1], [0], [0], [1], [0, 0, 1, 1], [], []>} : vector<8x128xf32>, vector<128x512xf32>, vector<8x512xf32> -> vector<8x512xf32>
    %359 = arith.addf %356, %358 : vector<8x512xf32>
    %360 = vector.extract_strided_slice %359 {offsets = [0, 0], sizes = [8, 384], strides = [1, 1]} : vector<8x512xf32> to vector<8x384xf32>
    %cst_129 = arith.constant 5.000000e-01 : f32
    %361 = vector.broadcast %cst_129 : f32 to vector<8x384xf32>
    %362 = arith.mulf %361, %360 : vector<8x384xf32>
    %363 = math.tanh %362 : vector<8x384xf32>
    %cst_130 = arith.constant 5.000000e-01 : f32
    %364 = vector.broadcast %cst_130 : f32 to vector<8x384xf32>
    %365 = arith.mulf %364, %363 : vector<8x384xf32>
    %cst_131 = arith.constant 5.000000e-01 : f32
    %366 = vector.broadcast %cst_131 : f32 to vector<8x384xf32>
    %367 = arith.addf %365, %366 : vector<8x384xf32>
    %368 = vector.extract_strided_slice %367 {offsets = [0, 0], sizes = [8, 128], strides = [1, 1]} : vector<8x384xf32> to vector<8x128xf32>
    %369 = vector.extract_strided_slice %367 {offsets = [0, 128], sizes = [8, 128], strides = [1, 1]} : vector<8x384xf32> to vector<8x128xf32>
    %370 = vector.extract_strided_slice %367 {offsets = [0, 256], sizes = [8, 128], strides = [1, 1]} : vector<8x384xf32> to vector<8x128xf32>
    %371 = vector.extract_strided_slice %359 {offsets = [0, 384], sizes = [8, 128], strides = [1, 1]} : vector<8x512xf32> to vector<8x128xf32>
    %372 = math.tanh %371 : vector<8x128xf32>
    %373 = arith.mulf %369, %326 : vector<8x128xf32>
    %374 = arith.mulf %368, %372 : vector<8x128xf32>
    %375 = arith.addf %373, %374 : vector<8x128xf32>
    %376 = math.tanh %375 : vector<8x128xf32>
    %377 = arith.mulf %370, %376 : vector<8x128xf32>
    %c0_132 = arith.constant 0 : index
    %c0_133 = arith.constant 0 : index
    %378 = vector.load %arg4[%c0_132, %c0_133] : memref<128x512xf32, #tpu.memory_space<vmem>>, vector<128x512xf32>
    %cst_134 = arith.constant dense<0.000000e+00> : vector<8x512xf32>
    %379 = tpu.matmul %377, %378, %cst_134 {dimension_numbers = #tpu.dot_dimension_numbers<[1], [0], [0], [1], [0, 0, 1, 1], [], []>} : vector<8x128xf32>, vector<128x512xf32>, vector<8x512xf32> -> vector<8x512xf32>
    %380 = arith.addf %379, %354 : vector<8x512xf32>
    %381 = vector.extract_strided_slice %380 {offsets = [0, 0], sizes = [8, 384], strides = [1, 1]} : vector<8x512xf32> to vector<8x384xf32>
    %cst_135 = arith.constant 5.000000e-01 : f32
    %382 = vector.broadcast %cst_135 : f32 to vector<8x384xf32>
    %383 = arith.mulf %382, %381 : vector<8x384xf32>
    %384 = math.tanh %383 : vector<8x384xf32>
    %cst_136 = arith.constant 5.000000e-01 : f32
    %385 = vector.broadcast %cst_136 : f32 to vector<8x384xf32>
    %386 = arith.mulf %385, %384 : vector<8x384xf32>
    %cst_137 = arith.constant 5.000000e-01 : f32
    %387 = vector.broadcast %cst_137 : f32 to vector<8x384xf32>
    %388 = arith.addf %386, %387 : vector<8x384xf32>
    %389 = vector.extract_strided_slice %388 {offsets = [0, 0], sizes = [8, 128], strides = [1, 1]} : vector<8x384xf32> to vector<8x128xf32>
    %390 = vector.extract_strided_slice %388 {offsets = [0, 128], sizes = [8, 128], strides = [1, 1]} : vector<8x384xf32> to vector<8x128xf32>
    %391 = vector.extract_strided_slice %388 {offsets = [0, 256], sizes = [8, 128], strides = [1, 1]} : vector<8x384xf32> to vector<8x128xf32>
    %392 = vector.extract_strided_slice %380 {offsets = [0, 384], sizes = [8, 128], strides = [1, 1]} : vector<8x512xf32> to vector<8x128xf32>
    %393 = math.tanh %392 : vector<8x128xf32>
    %394 = arith.mulf %390, %347 : vector<8x128xf32>
    %395 = arith.mulf %389, %393 : vector<8x128xf32>
    %396 = arith.addf %394, %395 : vector<8x128xf32>
    %397 = math.tanh %396 : vector<8x128xf32>
    %398 = arith.mulf %391, %397 : vector<8x128xf32>
    %c8_i32_138 = arith.constant 8 : i32
    %c0_139 = arith.constant 0 : index
    %c0_140 = arith.constant 0 : index
    %399 = vector.load %arg7[%c0_139, %c0_140] : memref<128x4xf32, #tpu.memory_space<vmem>>, vector<128x4xf32>
    %cst_141 = arith.constant dense<0.000000e+00> : vector<8x4xf32>
    %400 = tpu.matmul %398, %399, %cst_141 {dimension_numbers = #tpu.dot_dimension_numbers<[1], [0], [0], [1], [0, 0, 1, 1], [], []>} : vector<8x128xf32>, vector<128x4xf32>, vector<8x4xf32> -> vector<8x4xf32>
    %c0_142 = arith.constant 0 : index
    %c0_143 = arith.constant 0 : index
    %401 = vector.load %arg8[%c0_142, %c0_143] : memref<1x4xf32, #tpu.memory_space<vmem>>, vector<1x4xf32>
    %402 = vector.broadcast %401 : vector<1x4xf32> to vector<8x4xf32>
    %403 = arith.addf %400, %402 : vector<8x4xf32>
    %c0_144 = arith.constant 0 : index
    %c0_145 = arith.constant 0 : index
    %404 = vector.load %arg5[%c0_144, %c0_145] : memref<128x512xf32, #tpu.memory_space<vmem>>, vector<128x512xf32>
    %cst_146 = arith.constant dense<0.000000e+00> : vector<8x512xf32>
    %405 = tpu.matmul %398, %404, %cst_146 {dimension_numbers = #tpu.dot_dimension_numbers<[1], [0], [0], [1], [0, 0, 1, 1], [], []>} : vector<8x128xf32>, vector<128x512xf32>, vector<8x512xf32> -> vector<8x512xf32>
    %406 = arith.addf %405, %5 : vector<8x512xf32>
    %c0_147 = arith.constant 0 : index
    %c0_148 = arith.constant 0 : index
    %407 = vector.load %arg1[%c0_147, %c0_148] : memref<4x512xf32, #tpu.memory_space<vmem>>, vector<4x512xf32>
    %cst_149 = arith.constant dense<0.000000e+00> : vector<8x512xf32>
    %408 = tpu.matmul %403, %407, %cst_149 {dimension_numbers = #tpu.dot_dimension_numbers<[1], [0], [0], [1], [0, 0, 1, 1], [], []>} : vector<8x4xf32>, vector<4x512xf32>, vector<8x512xf32> -> vector<8x512xf32>
    %c0_150 = arith.constant 0 : index
    %c0_151 = arith.constant 0 : index
    %409 = vector.load %arg2[%c0_150, %c0_151] : memref<128x512xf32, #tpu.memory_space<vmem>>, vector<128x512xf32>
    %cst_152 = arith.constant dense<0.000000e+00> : vector<8x512xf32>
    %410 = tpu.matmul %377, %409, %cst_152 {dimension_numbers = #tpu.dot_dimension_numbers<[1], [0], [0], [1], [0, 0, 1, 1], [], []>} : vector<8x128xf32>, vector<128x512xf32>, vector<8x512xf32> -> vector<8x512xf32>
    %411 = arith.addf %408, %410 : vector<8x512xf32>
    %412 = arith.addf %411, %2 : vector<8x512xf32>
    %413 = vector.extract_strided_slice %412 {offsets = [0, 0], sizes = [8, 384], strides = [1, 1]} : vector<8x512xf32> to vector<8x384xf32>
    %cst_153 = arith.constant 5.000000e-01 : f32
    %414 = vector.broadcast %cst_153 : f32 to vector<8x384xf32>
    %415 = arith.mulf %414, %413 : vector<8x384xf32>
    %416 = math.tanh %415 : vector<8x384xf32>
    %cst_154 = arith.constant 5.000000e-01 : f32
    %417 = vector.broadcast %cst_154 : f32 to vector<8x384xf32>
    %418 = arith.mulf %417, %416 : vector<8x384xf32>
    %cst_155 = arith.constant 5.000000e-01 : f32
    %419 = vector.broadcast %cst_155 : f32 to vector<8x384xf32>
    %420 = arith.addf %418, %419 : vector<8x384xf32>
    %421 = vector.extract_strided_slice %420 {offsets = [0, 0], sizes = [8, 128], strides = [1, 1]} : vector<8x384xf32> to vector<8x128xf32>
    %422 = vector.extract_strided_slice %420 {offsets = [0, 128], sizes = [8, 128], strides = [1, 1]} : vector<8x384xf32> to vector<8x128xf32>
    %423 = vector.extract_strided_slice %420 {offsets = [0, 256], sizes = [8, 128], strides = [1, 1]} : vector<8x384xf32> to vector<8x128xf32>
    %424 = vector.extract_strided_slice %412 {offsets = [0, 384], sizes = [8, 128], strides = [1, 1]} : vector<8x512xf32> to vector<8x128xf32>
    %425 = math.tanh %424 : vector<8x128xf32>
    %426 = arith.mulf %422, %375 : vector<8x128xf32>
    %427 = arith.mulf %421, %425 : vector<8x128xf32>
    %428 = arith.addf %426, %427 : vector<8x128xf32>
    %429 = math.tanh %428 : vector<8x128xf32>
    %430 = arith.mulf %423, %429 : vector<8x128xf32>
    %c0_156 = arith.constant 0 : index
    %c0_157 = arith.constant 0 : index
    %431 = vector.load %arg4[%c0_156, %c0_157] : memref<128x512xf32, #tpu.memory_space<vmem>>, vector<128x512xf32>
    %cst_158 = arith.constant dense<0.000000e+00> : vector<8x512xf32>
    %432 = tpu.matmul %430, %431, %cst_158 {dimension_numbers = #tpu.dot_dimension_numbers<[1], [0], [0], [1], [0, 0, 1, 1], [], []>} : vector<8x128xf32>, vector<128x512xf32>, vector<8x512xf32> -> vector<8x512xf32>
    %433 = arith.addf %432, %406 : vector<8x512xf32>
    %434 = vector.extract_strided_slice %433 {offsets = [0, 0], sizes = [8, 384], strides = [1, 1]} : vector<8x512xf32> to vector<8x384xf32>
    %cst_159 = arith.constant 5.000000e-01 : f32
    %435 = vector.broadcast %cst_159 : f32 to vector<8x384xf32>
    %436 = arith.mulf %435, %434 : vector<8x384xf32>
    %437 = math.tanh %436 : vector<8x384xf32>
    %cst_160 = arith.constant 5.000000e-01 : f32
    %438 = vector.broadcast %cst_160 : f32 to vector<8x384xf32>
    %439 = arith.mulf %438, %437 : vector<8x384xf32>
    %cst_161 = arith.constant 5.000000e-01 : f32
    %440 = vector.broadcast %cst_161 : f32 to vector<8x384xf32>
    %441 = arith.addf %439, %440 : vector<8x384xf32>
    %442 = vector.extract_strided_slice %441 {offsets = [0, 0], sizes = [8, 128], strides = [1, 1]} : vector<8x384xf32> to vector<8x128xf32>
    %443 = vector.extract_strided_slice %441 {offsets = [0, 128], sizes = [8, 128], strides = [1, 1]} : vector<8x384xf32> to vector<8x128xf32>
    %444 = vector.extract_strided_slice %441 {offsets = [0, 256], sizes = [8, 128], strides = [1, 1]} : vector<8x384xf32> to vector<8x128xf32>
    %445 = vector.extract_strided_slice %433 {offsets = [0, 384], sizes = [8, 128], strides = [1, 1]} : vector<8x512xf32> to vector<8x128xf32>
    %446 = math.tanh %445 : vector<8x128xf32>
    %447 = arith.mulf %443, %396 : vector<8x128xf32>
    %448 = arith.mulf %442, %446 : vector<8x128xf32>
    %449 = arith.addf %447, %448 : vector<8x128xf32>
    %450 = math.tanh %449 : vector<8x128xf32>
    %451 = arith.mulf %444, %450 : vector<8x128xf32>
    %c0_162 = arith.constant 0 : index
    %c0_163 = arith.constant 0 : index
    %452 = vector.load %arg9[%c0_162, %c0_163] : memref<128x2xf32, #tpu.memory_space<vmem>>, vector<128x2xf32>
    %cst_164 = arith.constant dense<0.000000e+00> : vector<8x2xf32>
    %453 = tpu.matmul %451, %452, %cst_164 {dimension_numbers = #tpu.dot_dimension_numbers<[1], [0], [0], [1], [0, 0, 1, 1], [], []>} : vector<8x128xf32>, vector<128x2xf32>, vector<8x2xf32> -> vector<8x2xf32>
    %c0_165 = arith.constant 0 : index
    %c0_166 = arith.constant 0 : index
    %454 = vector.load %arg10[%c0_165, %c0_166] : memref<1x2xf32, #tpu.memory_space<vmem>>, vector<1x2xf32>
    %455 = vector.broadcast %454 : vector<1x2xf32> to vector<8x2xf32>
    %456 = arith.addf %453, %455 : vector<8x2xf32>
    %c0_167 = arith.constant 0 : index
    %c0_168 = arith.constant 0 : index
    %457 = vector.load %arg11[%c0_167, %c0_168] : memref<8x2xf32, #tpu.memory_space<vmem>>, vector<8x2xf32>
    tpu.vector_store %arg11[%c0_167, %c0_168], %456 {strides = array<i32>} : memref<8x2xf32, #tpu.memory_space<vmem>>, vector<8x2xf32>,
    return
  }
}

</mosaic_0001>

<llo_original>
// kernel: tpu_custom_call.1
$region0: #{tpu_custom_call.1}
  #allocation0 [shape = 'u32[]', space=smem, size = 0x4, offset = 0x4, fixed_abs, tag = 'smem constant byte address 0x4 - core index']
  #allocation1 [shape = 'u32[144,128]{1,0:T(1,128)}', space=vmem, size = 0x12000, scoped, tag = 'internal scratch']
  %s0 = inlined_call_operand.hbm [shape: f32[64,512], index: 0, kind: input, shape index: {}]
  %s1 = inlined_call_operand.hbm [shape: f32[4,512], index: 1, kind: input, shape index: {}]
  %s2 = inlined_call_operand.hbm [shape: f32[128,512], index: 2, kind: input, shape index: {}]
  %s3 = inlined_call_operand.hbm [shape: f32[1,512], index: 3, kind: input, shape index: {}]
  %s4 = inlined_call_operand.hbm [shape: f32[128,512], index: 4, kind: input, shape index: {}]
  %s5 = inlined_call_operand.hbm [shape: f32[128,512], index: 5, kind: input, shape index: {}]
  %s6 = inlined_call_operand.hbm [shape: f32[1,512], index: 6, kind: input, shape index: {}]
  %s7 = inlined_call_operand.hbm [shape: f32[128,4], index: 7, kind: input, shape index: {}]
  %s8 = inlined_call_operand.hbm [shape: f32[1,4], index: 8, kind: input, shape index: {}]
  %s9 = inlined_call_operand.hbm [shape: f32[128,2], index: 9, kind: input, shape index: {}]
  %s10 = inlined_call_operand.hbm [shape: f32[1,2], index: 10, kind: input, shape index: {}]
  %s11 = inlined_call_operand.hbm [shape: f32[8,2], index: 11, kind: output, shape index: {}]
  %s12 = sld [smem:[#allocation0]]
  $region98: #{tpu_custom_call.1} parent=0
    _
  %s14 = ssub.s32 1, %s12
  %s15 = scalar_select 0, %s14, %s12
  $region1: #{tpu_custom_call.1} parent=0
    #allocation2 [shape = 'u8[131072]{0}', space=vmem, size = 0x20000, scoped, tag = 'input window, operand 0, single buffered']
    #allocation3 [shape = 's32[1]{0}', space=sflag, size = 0x4, scoped, tag = 'scoped memory for tpu_custom_call.1']
    #allocation4 [shape = 's32[1]{0}', space=sflag, size = 0x4, scoped, tag = 'scoped memory for tpu_custom_call.1']
    #allocation5 [shape = 'u8[8192]{0}', space=vmem, size = 0x2000, scoped, tag = 'input window, operand 1, single buffered']
    #allocation6 [shape = 's32[1]{0}', space=sflag, size = 0x4, scoped, tag = 'scoped memory for tpu_custom_call.1']
    #allocation7 [shape = 'u8[262144]{0}', space=vmem, size = 0x40000, scoped, tag = 'input window, operand 2, single buffered']
    #allocation8 [shape = 'u8[2048]{0}', space=vmem, size = 0x800, scoped, tag = 'input window, operand 3, single buffered']
    #allocation9 [shape = 's32[1]{0}', space=sflag, size = 0x4, scoped, tag = 'scoped memory for tpu_custom_call.1']
    #allocation10 [shape = 'u8[262144]{0}', space=vmem, size = 0x40000, scoped, tag = 'input window, operand 4, single buffered']
    #allocation11 [shape = 'u8[262144]{0}', space=vmem, size = 0x40000, scoped, tag = 'input window, operand 5, single buffered']
    #allocation12 [shape = 's32[1]{0}', space=sflag, size = 0x4, scoped, tag = 'scoped memory for tpu_custom_call.1']
    #allocation13 [shape = 'u8[2048]{0}', space=vmem, size = 0x800, scoped, tag = 'input window, operand 6, single buffered']
    #allocation14 [shape = 'u8[65536]{0}', space=vmem, size = 0x10000, scoped, tag = 'input window, operand 7, single buffered']
    #allocation15 [shape = 's32[1]{0}', space=sflag, size = 0x4, scoped, tag = 'scoped memory for tpu_custom_call.1']
    #allocation16 [shape = 'u8[512]{0}', space=vmem, size = 0x400, scoped, tag = 'input window, operand 8, single buffered']
    #allocation17 [shape = 'u8[65536]{0}', space=vmem, size = 0x10000, scoped, tag = 'input window, operand 9, single buffered']
    #allocation18 [shape = 's32[1]{0}', space=sflag, size = 0x4, scoped, tag = 'scoped memory for tpu_custom_call.1']
    #allocation19 [shape = 'u8[512]{0}', space=vmem, size = 0x400, scoped, tag = 'input window, operand 10, single buffered']
    #allocation20 [shape = 'u8[4096]{0}', space=vmem, size = 0x1000, scoped, tag = 'output window, operand 0, single buffered']
    %16 = vsyncpa [#allocation3], 0
    %17 = vsyncpa [#allocation6], 0
    %18 = vsyncpa [#allocation9], 0
    %19 = vsyncpa [#allocation12], 0
    %20 = vsyncpa [#allocation15], 0
    %21 = vsyncpa [#allocation18], 0
    %22 = vsyncpa [#allocation4], 0
    // Predicated region
    $region2: #{tpu_custom_call.1} parent=1 // pred_check
      _
    $region3: #{tpu_custom_call.1} parent=1 // pred_check_branch
      %24 = sbr.rel (0) target = $region5
    $region4: #{tpu_custom_call.1} parent=1 // pred_region
      %s26 = ssub.s32 4096, 4096
      %27 = vsyncadd [#allocation3], %s26
      %s28 = sshll.u32 [#allocation2], 4
      %s29 = int_to_ptr.vmem [resolvable:$true] %s28
      %34 = dma.hbm_to_vmem [thread:$0]  %s0, 4096, %s29, [#allocation3], 512, 512, 32
    $region5: #{tpu_custom_call.1} parent=1 // pred_fallthru
      _
    // Predicated region
    $region6: #{tpu_custom_call.1} parent=1 // pred_check
      _
    $region7: #{tpu_custom_call.1} parent=1 // pred_check_branch
      %36 = sbr.rel (0) target = $region9
    $region8: #{tpu_custom_call.1} parent=1 // pred_region
      %s38 = ssub.s32 256, 256
      %39 = vsyncadd [#allocation6], %s38
      %s41 = sshll.u32 [#allocation5], 4
      %s42 = int_to_ptr.vmem [resolvable:$true] %s41
      %44 = dma.hbm_to_vmem [thread:$0]  %s1, 256, %s42, [#allocation6]
    $region9: #{tpu_custom_call.1} parent=1 // pred_fallthru
      _
    // Predicated region
    $region10: #{tpu_custom_call.1} parent=1 // pred_check
      _
    $region11: #{tpu_custom_call.1} parent=1 // pred_check_branch
      %46 = sbr.rel (0) target = $region13
    $region12: #{tpu_custom_call.1} parent=1 // pred_region
      %s48 = ssub.s32 8192, 8192
      %49 = vsyncadd [#allocation6], %s48
      %s50 = sshll.u32 [#allocation7], 4
      %s51 = int_to_ptr.vmem [resolvable:$true] %s50
      %56 = dma.hbm_to_vmem [thread:$0]  %s2, 8192, %s51, [#allocation6], 512, 512, 32
    $region13: #{tpu_custom_call.1} parent=1 // pred_fallthru
      _
    // Predicated region
    $region14: #{tpu_custom_call.1} parent=1 // pred_check
      _
    $region15: #{tpu_custom_call.1} parent=1 // pred_check_branch
      %58 = sbr.rel (0) target = $region17
    $region16: #{tpu_custom_call.1} parent=1 // pred_region
      %s60 = ssub.s32 64, 64
      %61 = vsyncadd [#allocation9], %s60
      %s63 = sshll.u32 [#allocation8], 4
      %s64 = int_to_ptr.vmem [resolvable:$true] %s63
      %66 = dma.hbm_to_vmem [thread:$0]  %s3, 64, %s64, [#allocation9]
    $region17: #{tpu_custom_call.1} parent=1 // pred_fallthru
      _
    // Predicated region
    $region18: #{tpu_custom_call.1} parent=1 // pred_check
      _
    $region19: #{tpu_custom_call.1} parent=1 // pred_check_branch
      %68 = sbr.rel (0) target = $region21
    $region20: #{tpu_custom_call.1} parent=1 // pred_region
      %s70 = ssub.s32 8192, 8192
      %71 = vsyncadd [#allocation9], %s70
      %s72 = sshll.u32 [#allocation10], 4
      %s73 = int_to_ptr.vmem [resolvable:$true] %s72
      %78 = dma.hbm_to_vmem [thread:$0]  %s4, 8192, %s73, [#allocation9], 512, 512, 32
    $region21: #{tpu_custom_call.1} parent=1 // pred_fallthru
      _
    // Predicated region
    $region22: #{tpu_custom_call.1} parent=1 // pred_check
      _
    $region23: #{tpu_custom_call.1} parent=1 // pred_check_branch
      %80 = sbr.rel (0) target = $region25
    $region24: #{tpu_custom_call.1} parent=1 // pred_region
      %s82 = ssub.s32 8192, 8192
      %83 = vsyncadd [#allocation12], %s82
      %s84 = sshll.u32 [#allocation11], 4
      %s85 = int_to_ptr.vmem [resolvable:$true] %s84
      %90 = dma.hbm_to_vmem [thread:$0]  %s5, 8192, %s85, [#allocation12], 512, 512, 32
    $region25: #{tpu_custom_call.1} parent=1 // pred_fallthru
      _
    // Predicated region
    $region26: #{tpu_custom_call.1} parent=1 // pred_check
      _
    $region27: #{tpu_custom_call.1} parent=1 // pred_check_branch
      %92 = sbr.rel (0) target = $region29
    $region28: #{tpu_custom_call.1} parent=1 // pred_region
      %s94 = ssub.s32 64, 64
      %95 = vsyncadd [#allocation12], %s94
      %s97 = sshll.u32 [#allocation13], 4
      %s98 = int_to_ptr.vmem [resolvable:$true] %s97
      %100 = dma.hbm_to_vmem [thread:$0]  %s6, 64, %s98, [#allocation12]
    $region29: #{tpu_custom_call.1} parent=1 // pred_fallthru
      _
    // Predicated region
    $region30: #{tpu_custom_call.1} parent=1 // pred_check
      _
    $region31: #{tpu_custom_call.1} parent=1 // pred_check_branch
      %102 = sbr.rel (0) target = $region33
    $region32: #{tpu_custom_call.1} parent=1 // pred_region
      %s104 = ssub.s32 2048, 2048
      %105 = vsyncadd [#allocation15], %s104
      %s106 = sshll.u32 [#allocation14], 4
      %s107 = int_to_ptr.vmem [resolvable:$true] %s106
      %112 = dma.hbm_to_vmem [thread:$0]  %s7, 2048, %s107, [#allocation15], 128, 128, 8
    $region33: #{tpu_custom_call.1} parent=1 // pred_fallthru
      _
    // Predicated region
    $region34: #{tpu_custom_call.1} parent=1 // pred_check
      _
    $region35: #{tpu_custom_call.1} parent=1 // pred_check_branch
      %114 = sbr.rel (0) target = $region37
    $region36: #{tpu_custom_call.1} parent=1 // pred_region
      %s116 = ssub.s32 16, 16
      %117 = vsyncadd [#allocation15], %s116
      %s119 = sshll.u32 [#allocation16], 4
      %s120 = int_to_ptr.vmem [resolvable:$true] %s119
      %122 = dma.hbm_to_vmem [thread:$0]  %s8, 16, %s120, [#allocation15]
    $region37: #{tpu_custom_call.1} parent=1 // pred_fallthru
      _
    // Predicated region
    $region38: #{tpu_custom_call.1} parent=1 // pred_check
      _
    $region39: #{tpu_custom_call.1} parent=1 // pred_check_branch
      %124 = sbr.rel (0) target = $region41
    $region40: #{tpu_custom_call.1} parent=1 // pred_region
      %s126 = ssub.s32 2048, 2048
      %127 = vsyncadd [#allocation18], %s126
      %s128 = sshll.u32 [#allocation17], 4
      %s129 = int_to_ptr.vmem [resolvable:$true] %s128
      %134 = dma.hbm_to_vmem [thread:$0]  %s9, 2048, %s129, [#allocation18], 128, 128, 8
    $region41: #{tpu_custom_call.1} parent=1 // pred_fallthru
      _
    // Predicated region
    $region42: #{tpu_custom_call.1} parent=1 // pred_check
      _
    $region43: #{tpu_custom_call.1} parent=1 // pred_check_branch
      %136 = sbr.rel (0) target = $region45
    $region44: #{tpu_custom_call.1} parent=1 // pred_region
      %s138 = ssub.s32 16, 16
      %139 = vsyncadd [#allocation18], %s138
      %s141 = sshll.u32 [#allocation19], 4
      %s142 = int_to_ptr.vmem [resolvable:$true] %s141
      %144 = dma.hbm_to_vmem [thread:$0]  %s10, 16, %s142, [#allocation18]
    $region45: #{tpu_custom_call.1} parent=1 // pred_fallthru
      _
    // Predicated region
    $region46: #{tpu_custom_call.1} parent=1 // pred_check
      _
    $region47: #{tpu_custom_call.1} parent=1 // pred_check_branch
      %146 = sbr.rel (0) target = $region49
    $region48: #{tpu_custom_call.1} parent=1 // pred_region
      %147 = dma.done [#allocation3], 4096
    $region49: #{tpu_custom_call.1} parent=1 // pred_fallthru
      _
    // Predicated region
    $region50: #{tpu_custom_call.1} parent=1 // pred_check
      _
    $region51: #{tpu_custom_call.1} parent=1 // pred_check_branch
      %149 = sbr.rel (0) target = $region53
    $region52: #{tpu_custom_call.1} parent=1 // pred_region
      %150 = dma.done [#allocation6], 256
    $region53: #{tpu_custom_call.1} parent=1 // pred_fallthru
      _
    // Predicated region
    $region54: #{tpu_custom_call.1} parent=1 // pred_check
      _
    $region55: #{tpu_custom_call.1} parent=1 // pred_check_branch
      %152 = sbr.rel (0) target = $region57
    $region56: #{tpu_custom_call.1} parent=1 // pred_region
      %153 = dma.done [#allocation6], 8192
    $region57: #{tpu_custom_call.1} parent=1 // pred_fallthru
      _
    // Predicated region
    $region58: #{tpu_custom_call.1} parent=1 // pred_check
      _
    $region59: #{tpu_custom_call.1} parent=1 // pred_check_branch
      %155 = sbr.rel (0) target = $region61
    $region60: #{tpu_custom_call.1} parent=1 // pred_region
      %156 = dma.done [#allocation9], 64
    $region61: #{tpu_custom_call.1} parent=1 // pred_fallthru
      _
    // Predicated region
    $region62: #{tpu_custom_call.1} parent=1 // pred_check
      _
    $region63: #{tpu_custom_call.1} parent=1 // pred_check_branch
      %158 = sbr.rel (0) target = $region65
    $region64: #{tpu_custom_call.1} parent=1 // pred_region
      %159 = dma.done [#allocation9], 8192
    $region65: #{tpu_custom_call.1} parent=1 // pred_fallthru
      _
    // Predicated region
    $region66: #{tpu_custom_call.1} parent=1 // pred_check
      _
    $region67: #{tpu_custom_call.1} parent=1 // pred_check_branch
      %161 = sbr.rel (0) target = $region69
    $region68: #{tpu_custom_call.1} parent=1 // pred_region
      %162 = dma.done [#allocation12], 8192
    $region69: #{tpu_custom_call.1} parent=1 // pred_fallthru
      _
    // Predicated region
    $region70: #{tpu_custom_call.1} parent=1 // pred_check
      _
    $region71: #{tpu_custom_call.1} parent=1 // pred_check_branch
      %164 = sbr.rel (0) target = $region73
    $region72: #{tpu_custom_call.1} parent=1 // pred_region
      %165 = dma.done [#allocation12], 64
    $region73: #{tpu_custom_call.1} parent=1 // pred_fallthru
      _
    // Predicated region
    $region74: #{tpu_custom_call.1} parent=1 // pred_check
      _
    $region75: #{tpu_custom_call.1} parent=1 // pred_check_branch
      %167 = sbr.rel (0) target = $region77
    $region76: #{tpu_custom_call.1} parent=1 // pred_region
      %168 = dma.done [#allocation15], 2048
    $region77: #{tpu_custom_call.1} parent=1 // pred_fallthru
      _
    // Predicated region
    $region78: #{tpu_custom_call.1} parent=1 // pred_check
      _
    $region79: #{tpu_custom_call.1} parent=1 // pred_check_branch
      %170 = sbr.rel (0) target = $region81
    $region80: #{tpu_custom_call.1} parent=1 // pred_region
      %171 = dma.done [#allocation15], 16
    $region81: #{tpu_custom_call.1} parent=1 // pred_fallthru
      _
    // Predicated region
    $region82: #{tpu_custom_call.1} parent=1 // pred_check
      _
    $region83: #{tpu_custom_call.1} parent=1 // pred_check_branch
      %173 = sbr.rel (0) target = $region85
    $region84: #{tpu_custom_call.1} parent=1 // pred_region
      %174 = dma.done [#allocation18], 2048
    $region85: #{tpu_custom_call.1} parent=1 // pred_fallthru
      _
    // Predicated region
    $region86: #{tpu_custom_call.1} parent=1 // pred_check
      _
    $region87: #{tpu_custom_call.1} parent=1 // pred_check_branch
      %176 = sbr.rel (0) target = $region89
    $region88: #{tpu_custom_call.1} parent=1 // pred_region
      %177 = dma.done [#allocation18], 16
    $region89: #{tpu_custom_call.1} parent=1 // pred_fallthru
      _
    %v178 = vld [vmem:[#allocation8] sm:$0xf]
    %v180 = vlaneseq
    %v181 = vshrl.u32 %v180, 7
    %v182 = vsub.s32 0, %v181
    %v183 = vrot.slane %v178, %v182
    %v184 = vlaneseq
    %v185 = vshrl.u32 %v184, 7
    %v186 = vsub.s32 1, %v185
    %v187 = vrot.slane %v178, %v186
    %v188 = vlaneseq
    %v189 = vshrl.u32 %v188, 7
    %v190 = vsub.s32 2, %v189
    %v191 = vrot.slane %v178, %v190
    %v192 = vlaneseq
    %v193 = vshrl.u32 %v192, 7
    %v194 = vsub.s32 3, %v193
    %v195 = vrot.slane %v178, %v194
    %v200 = vld [vmem:[#allocation13] sm:$0xf]
    %v202 = vlaneseq
    %v203 = vshrl.u32 %v202, 7
    %v204 = vsub.s32 0, %v203
    %v205 = vrot.slane %v200, %v204
    %v206 = vlaneseq
    %v207 = vshrl.u32 %v206, 7
    %v208 = vsub.s32 1, %v207
    %v209 = vrot.slane %v200, %v208
    %v210 = vlaneseq
    %v211 = vshrl.u32 %v210, 7
    %v212 = vsub.s32 2, %v211
    %v213 = vrot.slane %v200, %v212
    %v214 = vlaneseq
    %v215 = vshrl.u32 %v214, 7
    %v216 = vsub.s32 3, %v215
    %v217 = vrot.slane %v200, %v216
    %v222 = vld [vmem:[#allocation11] sm:$0xff]
    %v223 = vld [vmem:[#allocation11 + $0x8] sm:$0xff]
    %v224 = vld [vmem:[#allocation11 + $0x10] sm:$0xff]
    %v225 = vld [vmem:[#allocation11 + $0x18] sm:$0xff]
    %v226 = vld [vmem:[#allocation11 + $0x20] sm:$0xff]
    %v227 = vld [vmem:[#allocation11 + $0x28] sm:$0xff]
    %v228 = vld [vmem:[#allocation11 + $0x30] sm:$0xff]
    %v229 = vld [vmem:[#allocation11 + $0x38] sm:$0xff]
    %v230 = vld [vmem:[#allocation11 + $0x40] sm:$0xff]
    %v231 = vld [vmem:[#allocation11 + $0x48] sm:$0xff]
    %v232 = vld [vmem:[#allocation11 + $0x50] sm:$0xff]
    %v233 = vld [vmem:[#allocation11 + $0x58] sm:$0xff]
    %v234 = vld [vmem:[#allocation11 + $0x60] sm:$0xff]
    %v235 = vld [vmem:[#allocation11 + $0x68] sm:$0xff]
    %v236 = vld [vmem:[#allocation11 + $0x70] sm:$0xff]
    %v237 = vld [vmem:[#allocation11 + $0x78] sm:$0xff]
    %v238 = vld [vmem:[#allocation11 + $0x80] sm:$0xff]
    %v239 = vld [vmem:[#allocation11 + $0x88] sm:$0xff]
    %v240 = vld [vmem:[#allocation11 + $0x90] sm:$0xff]
    %v241 = vld [vmem:[#allocation11 + $0x98] sm:$0xff]
    %v242 = vld [vmem:[#allocation11 + $0xa0] sm:$0xff]
    %v243 = vld [vmem:[#allocation11 + $0xa8] sm:$0xff]
    %v244 = vld [vmem:[#allocation11 + $0xb0] sm:$0xff]
    %v245 = vld [vmem:[#allocation11 + $0xb8] sm:$0xff]
    %v246 = vld [vmem:[#allocation11 + $0xc0] sm:$0xff]
    %v247 = vld [vmem:[#allocation11 + $0xc8] sm:$0xff]
    %v248 = vld [vmem:[#allocation11 + $0xd0] sm:$0xff]
    %v249 = vld [vmem:[#allocation11 + $0xd8] sm:$0xff]
    %v250 = vld [vmem:[#allocation11 + $0xe0] sm:$0xff]
    %v251 = vld [vmem:[#allocation11 + $0xe8] sm:$0xff]
    %v252 = vld [vmem:[#allocation11 + $0xf0] sm:$0xff]
    %v253 = vld [vmem:[#allocation11 + $0xf8] sm:$0xff]
    %v254 = vld [vmem:[#allocation11 + $0x100] sm:$0xff]
    %v255 = vld [vmem:[#allocation11 + $0x108] sm:$0xff]
    %v256 = vld [vmem:[#allocation11 + $0x110] sm:$0xff]
    %v257 = vld [vmem:[#allocation11 + $0x118] sm:$0xff]
    %v258 = vld [vmem:[#allocation11 + $0x120] sm:$0xff]
    %v259 = vld [vmem:[#allocation11 + $0x128] sm:$0xff]
    %v260 = vld [vmem:[#allocation11 + $0x130] sm:$0xff]
    %v261 = vld [vmem:[#allocation11 + $0x138] sm:$0xff]
    %v262 = vld [vmem:[#allocation11 + $0x140] sm:$0xff]
    %v263 = vld [vmem:[#allocation11 + $0x148] sm:$0xff]
    %v264 = vld [vmem:[#allocation11 + $0x150] sm:$0xff]
    %v265 = vld [vmem:[#allocation11 + $0x158] sm:$0xff]
    %v266 = vld [vmem:[#allocation11 + $0x160] sm:$0xff]
    %v267 = vld [vmem:[#allocation11 + $0x168] sm:$0xff]
    %v268 = vld [vmem:[#allocation11 + $0x170] sm:$0xff]
    %v269 = vld [vmem:[#allocation11 + $0x178] sm:$0xff]
    %v270 = vld [vmem:[#allocation11 + $0x180] sm:$0xff]
    %v271 = vld [vmem:[#allocation11 + $0x188] sm:$0xff]
    %v272 = vld [vmem:[#allocation11 + $0x190] sm:$0xff]
    %v273 = vld [vmem:[#allocation11 + $0x198] sm:$0xff]
    %v274 = vld [vmem:[#allocation11 + $0x1a0] sm:$0xff]
    %v275 = vld [vmem:[#allocation11 + $0x1a8] sm:$0xff]
    %v276 = vld [vmem:[#allocation11 + $0x1b0] sm:$0xff]
    %v277 = vld [vmem:[#allocation11 + $0x1b8] sm:$0xff]
    %v278 = vld [vmem:[#allocation11 + $0x1c0] sm:$0xff]
    %v279 = vld [vmem:[#allocation11 + $0x1c8] sm:$0xff]
    %v280 = vld [vmem:[#allocation11 + $0x1d0] sm:$0xff]
    %v281 = vld [vmem:[#allocation11 + $0x1d8] sm:$0xff]
    %v282 = vld [vmem:[#allocation11 + $0x1e0] sm:$0xff]
    %v283 = vld [vmem:[#allocation11 + $0x1e8] sm:$0xff]
    %v284 = vld [vmem:[#allocation11 + $0x1f0] sm:$0xff]
    %v285 = vld [vmem:[#allocation11 + $0x1f8] sm:$0xff]
    %286 = vmatprep.subr.mxu0 %v223
    %287 = vmatpush1.msra.mxu0 %v222
    %288 = vmatprep.subr.mxu0 %v227
    %289 = vmatpush1.msra.mxu0 %v226
    %290 = vmatprep.subr.mxu0 %v231
    %291 = vmatpush1.msra.mxu0 %v230
    %292 = vmatprep.subr.mxu0 %v235
    %293 = vmatpush1.msra.mxu0 %v234
    %294 = vmatprep.subr.mxu0 %v239
    %295 = vmatpush1.msra.mxu0 %v238
    %296 = vmatprep.subr.mxu0 %v243
    %297 = vmatpush1.msra.mxu0 %v242
    %298 = vmatprep.subr.mxu0 %v247
    %299 = vmatpush1.msra.mxu0 %v246
    %300 = vmatprep.subr.mxu0 %v251
    %301 = vmatpush1.msra.mxu0 %v250
    %302 = vmatprep.subr.mxu0 %v255
    %303 = vmatpush1.msra.mxu0 %v254
    %304 = vmatprep.subr.mxu0 %v259
    %305 = vmatpush1.msra.mxu0 %v258
    %306 = vmatprep.subr.mxu0 %v263
    %307 = vmatpush1.msra.mxu0 %v262
    %308 = vmatprep.subr.mxu0 %v267
    %309 = vmatpush1.msra.mxu0 %v266
    %310 = vmatprep.subr.mxu0 %v271
    %311 = vmatpush1.msra.mxu0 %v270
    %312 = vmatprep.subr.mxu0 %v275
    %313 = vmatpush1.msra.mxu0 %v274
    %314 = vmatprep.subr.mxu0 %v279
    %315 = vmatpush1.msra.mxu0 %v278
    %316 = vmatprep.subr.mxu0 %v283
    %317 = vmatpush1.msra.mxu0 %v282
    %318 = vmatprep.subr.mxu0 0.0
    %319 = vmatpush1.msra.mxu0 0.0
    %320 = vmatprep.subr.mxu0 0.0
    %321 = vmatpush1.msra.mxu0 0.0
    %322 = vmatprep.subr.mxu0 0.0
    %323 = vmatpush1.msra.mxu0 0.0
    %324 = vmatprep.subr.mxu0 0.0
    %325 = vmatpush1.msra.mxu0 0.0
    %326 = vmatprep.subr.mxu0 0.0
    %327 = vmatpush1.msra.mxu0 0.0
    %328 = vmatprep.subr.mxu0 0.0
    %329 = vmatpush1.msra.mxu0 0.0
    %330 = vmatprep.subr.mxu0 0.0
    %331 = vmatpush1.msra.mxu0 0.0
    %332 = vmatprep.subr.mxu0 0.0
    %333 = vmatpush1.msra.mxu0 0.0
    %334 = vmatprep.subr.mxu0 0.0
    %335 = vmatpush1.msra.mxu0 0.0
    %336 = vmatprep.subr.mxu0 0.0
    %337 = vmatpush1.msra.mxu0 0.0
    %338 = vmatprep.subr.mxu0 0.0
    %339 = vmatpush1.msra.mxu0 0.0
    %340 = vmatprep.subr.mxu0 0.0
    %341 = vmatpush1.msra.mxu0 0.0
    %342 = vmatprep.subr.mxu0 0.0
    %343 = vmatpush1.msra.mxu0 0.0
    %344 = vmatprep.subr.mxu0 0.0
    %345 = vmatpush1.msra.mxu0 0.0
    %346 = vmatprep.subr.mxu0 0.0
    %347 = vmatpush1.msra.mxu0 0.0
    %348 = vmatprep.subr.mxu0 0.0
    %349 = vmatpush1.msra.mxu0 0.0
    %350 = vmatprep.mubr.f32.mxu0 0.0
    %351 = vmatmul.mubr.f32.gmra.mrb[0].mxu0 0.0
    %v352 = vpop.f32.mrb[0].mxu0
    %v353 = vadd.f32 %v205, %v352
    %v354 = vpop.f32.mrb[0].mxu0
    %v355 = vadd.f32 %v209, %v354
    %356 = vdwg.mxu0
    %357 = vmatprep.subr.mxu0 %v225
    %358 = vmatpush1.msra.mxu0 %v224
    %359 = vmatprep.subr.mxu0 %v229
    %360 = vmatpush1.msra.mxu0 %v228
    %361 = vmatprep.subr.mxu0 %v233
    %362 = vmatpush1.msra.mxu0 %v232
    %363 = vmatprep.subr.mxu0 %v237
    %364 = vmatpush1.msra.mxu0 %v236
    %365 = vmatprep.subr.mxu0 %v241
    %366 = vmatpush1.msra.mxu0 %v240
    %367 = vmatprep.subr.mxu0 %v245
    %368 = vmatpush1.msra.mxu0 %v244
    %369 = vmatprep.subr.mxu0 %v249
    %370 = vmatpush1.msra.mxu0 %v248
    %371 = vmatprep.subr.mxu0 %v253
    %372 = vmatpush1.msra.mxu0 %v252
    %373 = vmatprep.subr.mxu0 %v257
    %374 = vmatpush1.msra.mxu0 %v256
    %375 = vmatprep.subr.mxu0 %v261
    %376 = vmatpush1.msra.mxu0 %v260
    %377 = vmatprep.subr.mxu0 %v265
    %378 = vmatpush1.msra.mxu0 %v264
    %379 = vmatprep.subr.mxu0 %v269
    %380 = vmatpush1.msra.mxu0 %v268
    %381 = vmatprep.subr.mxu0 %v273
    %382 = vmatpush1.msra.mxu0 %v272
    %383 = vmatprep.subr.mxu0 %v277
    %384 = vmatpush1.msra.mxu0 %v276
    %385 = vmatprep.subr.mxu0 %v281
    %386 = vmatpush1.msra.mxu0 %v280
    %387 = vmatprep.subr.mxu0 %v285
    %388 = vmatpush1.msra.mxu0 %v284
    %389 = vmatprep.subr.mxu0 0.0
    %390 = vmatpush1.msra.mxu0 0.0
    %391 = vmatprep.subr.mxu0 0.0
    %392 = vmatpush1.msra.mxu0 0.0
    %393 = vmatprep.subr.mxu0 0.0
    %394 = vmatpush1.msra.mxu0 0.0
    %395 = vmatprep.subr.mxu0 0.0
    %396 = vmatpush1.msra.mxu0 0.0
    %397 = vmatprep.subr.mxu0 0.0
    %398 = vmatpush1.msra.mxu0 0.0
    %399 = vmatprep.subr.mxu0 0.0
    %400 = vmatpush1.msra.mxu0 0.0
    %401 = vmatprep.subr.mxu0 0.0
    %402 = vmatpush1.msra.mxu0 0.0
    %403 = vmatprep.subr.mxu0 0.0
    %404 = vmatpush1.msra.mxu0 0.0
    %405 = vmatprep.subr.mxu0 0.0
    %406 = vmatpush1.msra.mxu0 0.0
    %407 = vmatprep.subr.mxu0 0.0
    %408 = vmatpush1.msra.mxu0 0.0
    %409 = vmatprep.subr.mxu0 0.0
    %410 = vmatpush1.msra.mxu0 0.0
    %411 = vmatprep.subr.mxu0 0.0
    %412 = vmatpush1.msra.mxu0 0.0
    %413 = vmatprep.subr.mxu0 0.0
    %414 = vmatpush1.msra.mxu0 0.0
    %415 = vmatprep.subr.mxu0 0.0
    %416 = vmatpush1.msra.mxu0 0.0
    %417 = vmatprep.subr.mxu0 0.0
    %418 = vmatpush1.msra.mxu0 0.0
    %419 = vmatprep.subr.mxu0 0.0
    %420 = vmatpush1.msra.mxu0 0.0
    %421 = vmatprep.mubr.f32.mxu0 0.0
    %422 = vmatmul.mubr.f32.gmra.mrb[0].mxu0 0.0
    %v423 = vpop.f32.mrb[0].mxu0
    %v424 = vadd.f32 %v213, %v423
    %v425 = vpop.f32.mrb[0].mxu0
    %v426 = vadd.f32 %v217, %v425
    %427 = vdwg.mxu0
    %s428 = smul.u32 0, 4
    %s429 = smul.addr %s428, 8
    %s430 = scalar_lea.vmem [#allocation2], %s429
    %v431 = vld [vmem:[%s430] sm:$0xff]
    %v432 = vld [vmem:[%s430 + $0x8] sm:$0xff]
    %v433 = vld [vmem:[%s430 + $0x10] sm:$0xff]
    %v434 = vld [vmem:[%s430 + $0x18] sm:$0xff]
    %v435 = vld [vmem:[#allocation7] sm:$0xff]
    %v436 = vld [vmem:[#allocation7 + $0x8] sm:$0xff]
    %v437 = vld [vmem:[#allocation7 + $0x10] sm:$0xff]
    %v438 = vld [vmem:[#allocation7 + $0x18] sm:$0xff]
    %v439 = vld [vmem:[#allocation7 + $0x20] sm:$0xff]
    %v440 = vld [vmem:[#allocation7 + $0x28] sm:$0xff]
    %v441 = vld [vmem:[#allocation7 + $0x30] sm:$0xff]
    %v442 = vld [vmem:[#allocation7 + $0x38] sm:$0xff]
    %v443 = vld [vmem:[#allocation7 + $0x40] sm:$0xff]
    %v444 = vld [vmem:[#allocation7 + $0x48] sm:$0xff]
    %v445 = vld [vmem:[#allocation7 + $0x50] sm:$0xff]
    %v446 = vld [vmem:[#allocation7 + $0x58] sm:$0xff]
    %v447 = vld [vmem:[#allocation7 + $0x60] sm:$0xff]
    %v448 = vld [vmem:[#allocation7 + $0x68] sm:$0xff]
    %v449 = vld [vmem:[#allocation7 + $0x70] sm:$0xff]
    %v450 = vld [vmem:[#allocation7 + $0x78] sm:$0xff]
    %v451 = vld [vmem:[#allocation7 + $0x80] sm:$0xff]
    %v452 = vld [vmem:[#allocation7 + $0x88] sm:$0xff]
    %v453 = vld [vmem:[#allocation7 + $0x90] sm:$0xff]
    %v454 = vld [vmem:[#allocation7 + $0x98] sm:$0xff]
    %v455 = vld [vmem:[#allocation7 + $0xa0] sm:$0xff]
    %v456 = vld [vmem:[#allocation7 + $0xa8] sm:$0xff]
    %v457 = vld [vmem:[#allocation7 + $0xb0] sm:$0xff]
    %v458 = vld [vmem:[#allocation7 + $0xb8] sm:$0xff]
    %v459 = vld [vmem:[#allocation7 + $0xc0] sm:$0xff]
    %v460 = vld [vmem:[#allocation7 + $0xc8] sm:$0xff]
    %v461 = vld [vmem:[#allocation7 + $0xd0] sm:$0xff]
    %v462 = vld [vmem:[#allocation7 + $0xd8] sm:$0xff]
    %v463 = vld [vmem:[#allocation7 + $0xe0] sm:$0xff]
    %v464 = vld [vmem:[#allocation7 + $0xe8] sm:$0xff]
    %v465 = vld [vmem:[#allocation7 + $0xf0] sm:$0xff]
    %v466 = vld [vmem:[#allocation7 + $0xf8] sm:$0xff]
    %v467 = vld [vmem:[#allocation7 + $0x100] sm:$0xff]
    %v468 = vld [vmem:[#allocation7 + $0x108] sm:$0xff]
    %v469 = vld [vmem:[#allocation7 + $0x110] sm:$0xff]
    %v470 = vld [vmem:[#allocation7 + $0x118] sm:$0xff]
    %v471 = vld [vmem:[#allocation7 + $0x120] sm:$0xff]
    %v472 = vld [vmem:[#allocation7 + $0x128] sm:$0xff]
    %v473 = vld [vmem:[#allocation7 + $0x130] sm:$0xff]
    %v474 = vld [vmem:[#allocation7 + $0x138] sm:$0xff]
    %v475 = vld [vmem:[#allocation7 + $0x140] sm:$0xff]
    %v476 = vld [vmem:[#allocation7 + $0x148] sm:$0xff]
    %v477 = vld [vmem:[#allocation7 + $0x150] sm:$0xff]
    %v478 = vld [vmem:[#allocation7 + $0x158] sm:$0xff]
    %v479 = vld [vmem:[#allocation7 + $0x160] sm:$0xff]
    %v480 = vld [vmem:[#allocation7 + $0x168] sm:$0xff]
    %v481 = vld [vmem:[#allocation7 + $0x170] sm:$0xff]
    %v482 = vld [vmem:[#allocation7 + $0x178] sm:$0xff]
    %v483 = vld [vmem:[#allocation7 + $0x180] sm:$0xff]
    %v484 = vld [vmem:[#allocation7 + $0x188] sm:$0xff]
    %v485 = vld [vmem:[#allocation7 + $0x190] sm:$0xff]
    %v486 = vld [vmem:[#allocation7 + $0x198] sm:$0xff]
    %v487 = vld [vmem:[#allocation7 + $0x1a0] sm:$0xff]
    %v488 = vld [vmem:[#allocation7 + $0x1a8] sm:$0xff]
    %v489 = vld [vmem:[#allocation7 + $0x1b0] sm:$0xff]
    %v490 = vld [vmem:[#allocation7 + $0x1b8] sm:$0xff]
    %v491 = vld [vmem:[#allocation7 + $0x1c0] sm:$0xff]
    %v492 = vld [vmem:[#allocation7 + $0x1c8] sm:$0xff]
    %v493 = vld [vmem:[#allocation7 + $0x1d0] sm:$0xff]
    %v494 = vld [vmem:[#allocation7 + $0x1d8] sm:$0xff]
    %v495 = vld [vmem:[#allocation7 + $0x1e0] sm:$0xff]
    %v496 = vld [vmem:[#allocation7 + $0x1e8] sm:$0xff]
    %v497 = vld [vmem:[#allocation7 + $0x1f0] sm:$0xff]
    %v498 = vld [vmem:[#allocation7 + $0x1f8] sm:$0xff]
    %499 = vmatprep.subr.mxu0 %v436
    %500 = vmatpush1.msra.mxu0 %v435
    %501 = vmatprep.subr.mxu0 %v440
    %502 = vmatpush1.msra.mxu0 %v439
    %503 = vmatprep.subr.mxu0 %v444
    %504 = vmatpush1.msra.mxu0 %v443
    %505 = vmatprep.subr.mxu0 %v448
    %506 = vmatpush1.msra.mxu0 %v447
    %507 = vmatprep.subr.mxu0 %v452
    %508 = vmatpush1.msra.mxu0 %v451
    %509 = vmatprep.subr.mxu0 %v456
    %510 = vmatpush1.msra.mxu0 %v455
    %511 = vmatprep.subr.mxu0 %v460
    %512 = vmatpush1.msra.mxu0 %v459
    %513 = vmatprep.subr.mxu0 %v464
    %514 = vmatpush1.msra.mxu0 %v463
    %515 = vmatprep.subr.mxu0 %v468
    %516 = vmatpush1.msra.mxu0 %v467
    %517 = vmatprep.subr.mxu0 %v472
    %518 = vmatpush1.msra.mxu0 %v471
    %519 = vmatprep.subr.mxu0 %v476
    %520 = vmatpush1.msra.mxu0 %v475
    %521 = vmatprep.subr.mxu0 %v480
    %522 = vmatpush1.msra.mxu0 %v479
    %523 = vmatprep.subr.mxu0 %v484
    %524 = vmatpush1.msra.mxu0 %v483
    %525 = vmatprep.subr.mxu0 %v488
    %526 = vmatpush1.msra.mxu0 %v487
    %527 = vmatprep.subr.mxu0 %v492
    %528 = vmatpush1.msra.mxu0 %v491
    %529 = vmatprep.subr.mxu0 %v496
    %530 = vmatpush1.msra.mxu0 %v495
    %531 = vmatprep.subr.mxu0 0.0
    %532 = vmatpush1.msra.mxu0 0.0
    %533 = vmatprep.subr.mxu0 0.0
    %534 = vmatpush1.msra.mxu0 0.0
    %535 = vmatprep.subr.mxu0 0.0
    %536 = vmatpush1.msra.mxu0 0.0
    %537 = vmatprep.subr.mxu0 0.0
    %538 = vmatpush1.msra.mxu0 0.0
    %539 = vmatprep.subr.mxu0 0.0
    %540 = vmatpush1.msra.mxu0 0.0
    %541 = vmatprep.subr.mxu0 0.0
    %542 = vmatpush1.msra.mxu0 0.0
    %543 = vmatprep.subr.mxu0 0.0
    %544 = vmatpush1.msra.mxu0 0.0
    %545 = vmatprep.subr.mxu0 0.0
    %546 = vmatpush1.msra.mxu0 0.0
    %547 = vmatprep.subr.mxu0 0.0
    %548 = vmatpush1.msra.mxu0 0.0
    %549 = vmatprep.subr.mxu0 0.0
    %550 = vmatpush1.msra.mxu0 0.0
    %551 = vmatprep.subr.mxu0 0.0
    %552 = vmatpush1.msra.mxu0 0.0
    %553 = vmatprep.subr.mxu0 0.0
    %554 = vmatpush1.msra.mxu0 0.0
    %555 = vmatprep.subr.mxu0 0.0
    %556 = vmatpush1.msra.mxu0 0.0
    %557 = vmatprep.subr.mxu0 0.0
    %558 = vmatpush1.msra.mxu0 0.0
    %559 = vmatprep.subr.mxu0 0.0
    %560 = vmatpush1.msra.mxu0 0.0
    %561 = vmatprep.subr.mxu0 0.0
    %562 = vmatpush1.msra.mxu0 0.0
    %563 = vmatprep.mubr.f32.mxu0 0.0
    %564 = vmatmul.mubr.f32.gmra.mrb[0].mxu0 0.0
    %v565 = vpop.f32.mrb[0].mxu0
    %v566 = vadd.f32 0.0, %v565
    %v567 = vpop.f32.mrb[0].mxu0
    %v568 = vadd.f32 0.0, %v567
    %569 = vdwg.mxu0
    %570 = vmatprep.subr.mxu0 %v438
    %571 = vmatpush1.msra.mxu0 %v437
    %572 = vmatprep.subr.mxu0 %v442
    %573 = vmatpush1.msra.mxu0 %v441
    %574 = vmatprep.subr.mxu0 %v446
    %575 = vmatpush1.msra.mxu0 %v445
    %576 = vmatprep.subr.mxu0 %v450
    %577 = vmatpush1.msra.mxu0 %v449
    %578 = vmatprep.subr.mxu0 %v454
    %579 = vmatpush1.msra.mxu0 %v453
    %580 = vmatprep.subr.mxu0 %v458
    %581 = vmatpush1.msra.mxu0 %v457
    %582 = vmatprep.subr.mxu0 %v462
    %583 = vmatpush1.msra.mxu0 %v461
    %584 = vmatprep.subr.mxu0 %v466
    %585 = vmatpush1.msra.mxu0 %v465
    %586 = vmatprep.subr.mxu0 %v470
    %587 = vmatpush1.msra.mxu0 %v469
    %588 = vmatprep.subr.mxu0 %v474
    %589 = vmatpush1.msra.mxu0 %v473
    %590 = vmatprep.subr.mxu0 %v478
    %591 = vmatpush1.msra.mxu0 %v477
    %592 = vmatprep.subr.mxu0 %v482
    %593 = vmatpush1.msra.mxu0 %v481
    %594 = vmatprep.subr.mxu0 %v486
    %595 = vmatpush1.msra.mxu0 %v485
    %596 = vmatprep.subr.mxu0 %v490
    %597 = vmatpush1.msra.mxu0 %v489
    %598 = vmatprep.subr.mxu0 %v494
    %599 = vmatpush1.msra.mxu0 %v493
    %600 = vmatprep.subr.mxu0 %v498
    %601 = vmatpush1.msra.mxu0 %v497
    %602 = vmatprep.subr.mxu0 0.0
    %603 = vmatpush1.msra.mxu0 0.0
    %604 = vmatprep.subr.mxu0 0.0
    %605 = vmatpush1.msra.mxu0 0.0
    %606 = vmatprep.subr.mxu0 0.0
    %607 = vmatpush1.msra.mxu0 0.0
    %608 = vmatprep.subr.mxu0 0.0
    %609 = vmatpush1.msra.mxu0 0.0
    %610 = vmatprep.subr.mxu0 0.0
    %611 = vmatpush1.msra.mxu0 0.0
    %612 = vmatprep.subr.mxu0 0.0
    %613 = vmatpush1.msra.mxu0 0.0
    %614 = vmatprep.subr.mxu0 0.0
    %615 = vmatpush1.msra.mxu0 0.0
    %616 = vmatprep.subr.mxu0 0.0
    %617 = vmatpush1.msra.mxu0 0.0
    %618 = vmatprep.subr.mxu0 0.0
    %619 = vmatpush1.msra.mxu0 0.0
    %620 = vmatprep.subr.mxu0 0.0
    %621 = vmatpush1.msra.mxu0 0.0
    %622 = vmatprep.subr.mxu0 0.0
    %623 = vmatpush1.msra.mxu0 0.0
    %624 = vmatprep.subr.mxu0 0.0
    %625 = vmatpush1.msra.mxu0 0.0
    %626 = vmatprep.subr.mxu0 0.0
    %627 = vmatpush1.msra.mxu0 0.0
    %628 = vmatprep.subr.mxu0 0.0
    %629 = vmatpush1.msra.mxu0 0.0
    %630 = vmatprep.subr.mxu0 0.0
    %631 = vmatpush1.msra.mxu0 0.0
    %632 = vmatprep.subr.mxu0 0.0
    %633 = vmatpush1.msra.mxu0 0.0
    %634 = vmatprep.mubr.f32.mxu0 0.0
    %635 = vmatmul.mubr.f32.gmra.mrb[0].mxu0 0.0
    %v636 = vpop.f32.mrb[0].mxu0
    %v637 = vadd.f32 0.0, %v636
    %v638 = vpop.f32.mrb[0].mxu0
    %v639 = vadd.f32 0.0, %v638
    %640 = vdwg.mxu0
    %v641 = vadd.f32 %v431, %v566
    %v642 = vadd.f32 %v432, %v568
    %v643 = vadd.f32 %v433, %v637
    %v644 = vadd.f32 %v434, %v639
    %v645 = vmul.f32 %v641, 0.5
    %v646 = vmul.f32 %v642, 0.5
    %v647 = vmul.f32 %v643, 0.5
    %v648 = vtanh.pop %v645
    %v649 = vtanh.pop %v646
    %v650 = vtanh.pop %v647
    %v651 = vmul.f32 %v648, 0.5
    %v652 = vmul.f32 %v649, 0.5
    %v653 = vmul.f32 %v650, 0.5
    %v654 = vadd.f32 %v651, 0.5
    %v655 = vadd.f32 %v652, 0.5
    %v656 = vadd.f32 %v653, 0.5
    %v657 = vtanh.pop %v644
    %v658 = vmul.f32 %v655, 0.0
    %v659 = vmul.f32 %v654, %v657
    %v660 = vadd.f32 %v658, %v659
    %v661 = vtanh.pop %v660
    %v662 = vmul.f32 %v656, %v661
    %v663 = vld [vmem:[#allocation10] sm:$0xff]
    %v664 = vld [vmem:[#allocation10 + $0x8] sm:$0xff]
    %v665 = vld [vmem:[#allocation10 + $0x10] sm:$0xff]
    %v666 = vld [vmem:[#allocation10 + $0x18] sm:$0xff]
    %v667 = vld [vmem:[#allocation10 + $0x20] sm:$0xff]
    %v668 = vld [vmem:[#allocation10 + $0x28] sm:$0xff]
    %v669 = vld [vmem:[#allocation10 + $0x30] sm:$0xff]
    %v670 = vld [vmem:[#allocation10 + $0x38] sm:$0xff]
    %v671 = vld [vmem:[#allocation10 + $0x40] sm:$0xff]
    %v672 = vld [vmem:[#allocation10 + $0x48] sm:$0xff]
    %v673 = vld [vmem:[#allocation10 + $0x50] sm:$0xff]
    %v674 = vld [vmem:[#allocation10 + $0x58] sm:$0xff]
    %v675 = vld [vmem:[#allocation10 + $0x60] sm:$0xff]
    %v676 = vld [vmem:[#allocation10 + $0x68] sm:$0xff]
    %v677 = vld [vmem:[#allocation10 + $0x70] sm:$0xff]
    %v678 = vld [vmem:[#allocation10 + $0x78] sm:$0xff]
    %v679 = vld [vmem:[#allocation10 + $0x80] sm:$0xff]
    %v680 = vld [vmem:[#allocation10 + $0x88] sm:$0xff]
    %v681 = vld [vmem:[#allocation10 + $0x90] sm:$0xff]
    %v682 = vld [vmem:[#allocation10 + $0x98] sm:$0xff]
    %v683 = vld [vmem:[#allocation10 + $0xa0] sm:$0xff]
    %v684 = vld [vmem:[#allocation10 + $0xa8] sm:$0xff]
    %v685 = vld [vmem:[#allocation10 + $0xb0] sm:$0xff]
    %v686 = vld [vmem:[#allocation10 + $0xb8] sm:$0xff]
    %v687 = vld [vmem:[#allocation10 + $0xc0] sm:$0xff]
    %v688 = vld [vmem:[#allocation10 + $0xc8] sm:$0xff]
    %v689 = vld [vmem:[#allocation10 + $0xd0] sm:$0xff]
    %v690 = vld [vmem:[#allocation10 + $0xd8] sm:$0xff]
    %v691 = vld [vmem:[#allocation10 + $0xe0] sm:$0xff]
    %v692 = vld [vmem:[#allocation10 + $0xe8] sm:$0xff]
    %v693 = vld [vmem:[#allocation10 + $0xf0] sm:$0xff]
    %v694 = vld [vmem:[#allocation10 + $0xf8] sm:$0xff]
    %v695 = vld [vmem:[#allocation10 + $0x100] sm:$0xff]
    %v696 = vld [vmem:[#allocation10 + $0x108] sm:$0xff]
    %v697 = vld [vmem:[#allocation10 + $0x110] sm:$0xff]
    %v698 = vld [vmem:[#allocation10 + $0x118] sm:$0xff]
    %v699 = vld [vmem:[#allocation10 + $0x120] sm:$0xff]
    %v700 = vld [vmem:[#allocation10 + $0x128] sm:$0xff]
    %v701 = vld [vmem:[#allocation10 + $0x130] sm:$0xff]
    %v702 = vld [vmem:[#allocation10 + $0x138] sm:$0xff]
    %v703 = vld [vmem:[#allocation10 + $0x140] sm:$0xff]
    %v704 = vld [vmem:[#allocation10 + $0x148] sm:$0xff]
    %v705 = vld [vmem:[#allocation10 + $0x150] sm:$0xff]
    %v706 = vld [vmem:[#allocation10 + $0x158] sm:$0xff]
    %v707 = vld [vmem:[#allocation10 + $0x160] sm:$0xff]
    %v708 = vld [vmem:[#allocation10 + $0x168] sm:$0xff]
    %v709 = vld [vmem:[#allocation10 + $0x170] sm:$0xff]
    %v710 = vld [vmem:[#allocation10 + $0x178] sm:$0xff]
    %v711 = vld [vmem:[#allocation10 + $0x180] sm:$0xff]
    %v712 = vld [vmem:[#allocation10 + $0x188] sm:$0xff]
    %v713 = vld [vmem:[#allocation10 + $0x190] sm:$0xff]
    %v714 = vld [vmem:[#allocation10 + $0x198] sm:$0xff]
    %v715 = vld [vmem:[#allocation10 + $0x1a0] sm:$0xff]
    %v716 = vld [vmem:[#allocation10 + $0x1a8] sm:$0xff]
    %v717 = vld [vmem:[#allocation10 + $0x1b0] sm:$0xff]
    %v718 = vld [vmem:[#allocation10 + $0x1b8] sm:$0xff]
    %v719 = vld [vmem:[#allocation10 + $0x1c0] sm:$0xff]
    %v720 = vld [vmem:[#allocation10 + $0x1c8] sm:$0xff]
    %v721 = vld [vmem:[#allocation10 + $0x1d0] sm:$0xff]
    %v722 = vld [vmem:[#allocation10 + $0x1d8] sm:$0xff]
    %v723 = vld [vmem:[#allocation10 + $0x1e0] sm:$0xff]
    %v724 = vld [vmem:[#allocation10 + $0x1e8] sm:$0xff]
    %v725 = vld [vmem:[#allocation10 + $0x1f0] sm:$0xff]
    %v726 = vld [vmem:[#allocation10 + $0x1f8] sm:$0xff]
    %727 = vmatprep.subr.mxu0 %v664
    %728 = vmatpush1.msra.mxu0 %v663
    %729 = vmatprep.subr.mxu0 %v668
    %730 = vmatpush1.msra.mxu0 %v667
    %731 = vmatprep.subr.mxu0 %v672
    %732 = vmatpush1.msra.mxu0 %v671
    %733 = vmatprep.subr.mxu0 %v676
    %734 = vmatpush1.msra.mxu0 %v675
    %735 = vmatprep.subr.mxu0 %v680
    %736 = vmatpush1.msra.mxu0 %v679
    %737 = vmatprep.subr.mxu0 %v684
    %738 = vmatpush1.msra.mxu0 %v683
    %739 = vmatprep.subr.mxu0 %v688
    %740 = vmatpush1.msra.mxu0 %v687
    %741 = vmatprep.subr.mxu0 %v692
    %742 = vmatpush1.msra.mxu0 %v691
    %743 = vmatprep.subr.mxu0 %v696
    %744 = vmatpush1.msra.mxu0 %v695
    %745 = vmatprep.subr.mxu0 %v700
    %746 = vmatpush1.msra.mxu0 %v699
    %747 = vmatprep.subr.mxu0 %v704
    %748 = vmatpush1.msra.mxu0 %v703
    %749 = vmatprep.subr.mxu0 %v708
    %750 = vmatpush1.msra.mxu0 %v707
    %751 = vmatprep.subr.mxu0 %v712
    %752 = vmatpush1.msra.mxu0 %v711
    %753 = vmatprep.subr.mxu0 %v716
    %754 = vmatpush1.msra.mxu0 %v715
    %755 = vmatprep.subr.mxu0 %v720
    %756 = vmatpush1.msra.mxu0 %v719
    %757 = vmatprep.subr.mxu0 %v724
    %758 = vmatpush1.msra.mxu0 %v723
    %759 = vmatprep.subr.mxu0 0.0
    %760 = vmatpush1.msra.mxu0 0.0
    %761 = vmatprep.subr.mxu0 0.0
    %762 = vmatpush1.msra.mxu0 0.0
    %763 = vmatprep.subr.mxu0 0.0
    %764 = vmatpush1.msra.mxu0 0.0
    %765 = vmatprep.subr.mxu0 0.0
    %766 = vmatpush1.msra.mxu0 0.0
    %767 = vmatprep.subr.mxu0 0.0
    %768 = vmatpush1.msra.mxu0 0.0
    %769 = vmatprep.subr.mxu0 0.0
    %770 = vmatpush1.msra.mxu0 0.0
    %771 = vmatprep.subr.mxu0 0.0
    %772 = vmatpush1.msra.mxu0 0.0
    %773 = vmatprep.subr.mxu0 0.0
    %774 = vmatpush1.msra.mxu0 0.0
    %775 = vmatprep.subr.mxu0 0.0
    %776 = vmatpush1.msra.mxu0 0.0
    %777 = vmatprep.subr.mxu0 0.0
    %778 = vmatpush1.msra.mxu0 0.0
    %779 = vmatprep.subr.mxu0 0.0
    %780 = vmatpush1.msra.mxu0 0.0
    %781 = vmatprep.subr.mxu0 0.0
    %782 = vmatpush1.msra.mxu0 0.0
    %783 = vmatprep.subr.mxu0 0.0
    %784 = vmatpush1.msra.mxu0 0.0
    %785 = vmatprep.subr.mxu0 0.0
    %786 = vmatpush1.msra.mxu0 0.0
    %787 = vmatprep.subr.mxu0 0.0
    %788 = vmatpush1.msra.mxu0 0.0
    %789 = vmatprep.subr.mxu0 0.0
    %790 = vmatpush1.msra.mxu0 0.0
    %791 = vmatprep.mubr.f32.mxu0 0.0
    %792 = vmatmul.mubr.f32.gmra.mrb[0].mxu0 %v662
    %v793 = vpop.f32.mrb[0].mxu0
    %v794 = vadd.f32 %v353, %v793
    %v795 = vpop.f32.mrb[0].mxu0
    %v796 = vadd.f32 %v355, %v795
    %797 = vdwg.mxu0
    %798 = vmatprep.subr.mxu0 %v666
    %799 = vmatpush1.msra.mxu0 %v665
    %800 = vmatprep.subr.mxu0 %v670
    %801 = vmatpush1.msra.mxu0 %v669
    %802 = vmatprep.subr.mxu0 %v674
    %803 = vmatpush1.msra.mxu0 %v673
    %804 = vmatprep.subr.mxu0 %v678
    %805 = vmatpush1.msra.mxu0 %v677
    %806 = vmatprep.subr.mxu0 %v682
    %807 = vmatpush1.msra.mxu0 %v681
    %808 = vmatprep.subr.mxu0 %v686
    %809 = vmatpush1.msra.mxu0 %v685
    %810 = vmatprep.subr.mxu0 %v690
    %811 = vmatpush1.msra.mxu0 %v689
    %812 = vmatprep.subr.mxu0 %v694
    %813 = vmatpush1.msra.mxu0 %v693
    %814 = vmatprep.subr.mxu0 %v698
    %815 = vmatpush1.msra.mxu0 %v697
    %816 = vmatprep.subr.mxu0 %v702
    %817 = vmatpush1.msra.mxu0 %v701
    %818 = vmatprep.subr.mxu0 %v706
    %819 = vmatpush1.msra.mxu0 %v705
    %820 = vmatprep.subr.mxu0 %v710
    %821 = vmatpush1.msra.mxu0 %v709
    %822 = vmatprep.subr.mxu0 %v714
    %823 = vmatpush1.msra.mxu0 %v713
    %824 = vmatprep.subr.mxu0 %v718
    %825 = vmatpush1.msra.mxu0 %v717
    %826 = vmatprep.subr.mxu0 %v722
    %827 = vmatpush1.msra.mxu0 %v721
    %828 = vmatprep.subr.mxu0 %v726
    %829 = vmatpush1.msra.mxu0 %v725
    %830 = vmatprep.subr.mxu0 0.0
    %831 = vmatpush1.msra.mxu0 0.0
    %832 = vmatprep.subr.mxu0 0.0
    %833 = vmatpush1.msra.mxu0 0.0
    %834 = vmatprep.subr.mxu0 0.0
    %835 = vmatpush1.msra.mxu0 0.0
    %836 = vmatprep.subr.mxu0 0.0
    %837 = vmatpush1.msra.mxu0 0.0
    %838 = vmatprep.subr.mxu0 0.0
    %839 = vmatpush1.msra.mxu0 0.0
    %840 = vmatprep.subr.mxu0 0.0
    %841 = vmatpush1.msra.mxu0 0.0
    %842 = vmatprep.subr.mxu0 0.0
    %843 = vmatpush1.msra.mxu0 0.0
    %844 = vmatprep.subr.mxu0 0.0
    %845 = vmatpush1.msra.mxu0 0.0
    %846 = vmatprep.subr.mxu0 0.0
    %847 = vmatpush1.msra.mxu0 0.0
    %848 = vmatprep.subr.mxu0 0.0
    %849 = vmatpush1.msra.mxu0 0.0
    %850 = vmatprep.subr.mxu0 0.0
    %851 = vmatpush1.msra.mxu0 0.0
    %852 = vmatprep.subr.mxu0 0.0
    %853 = vmatpush1.msra.mxu0 0.0
    %854 = vmatprep.subr.mxu0 0.0
    %855 = vmatpush1.msra.mxu0 0.0
    %856 = vmatprep.subr.mxu0 0.0
    %857 = vmatpush1.msra.mxu0 0.0
    %858 = vmatprep.subr.mxu0 0.0
    %859 = vmatpush1.msra.mxu0 0.0
    %860 = vmatprep.subr.mxu0 0.0
    %861 = vmatpush1.msra.mxu0 0.0
    %862 = vmatprep.mubr.f32.mxu0 0.0
    %863 = vmatmul.mubr.f32.gmra.mrb[0].mxu0 %v662
    %v864 = vpop.f32.mrb[0].mxu0
    %v865 = vadd.f32 %v424, %v864
    %v866 = vpop.f32.mrb[0].mxu0
    %v867 = vadd.f32 %v426, %v866
    %868 = vdwg.mxu0
    %v869 = vmul.f32 %v794, 0.5
    %v870 = vmul.f32 %v796, 0.5
    %v871 = vmul.f32 %v865, 0.5
    %v872 = vtanh.pop %v869
    %v873 = vtanh.pop %v870
    %v874 = vtanh.pop %v871
    %v875 = vmul.f32 %v872, 0.5
    %v876 = vmul.f32 %v873, 0.5
    %v877 = vmul.f32 %v874, 0.5
    %v878 = vadd.f32 %v875, 0.5
    %v879 = vadd.f32 %v876, 0.5
    %v880 = vadd.f32 %v877, 0.5
    %v881 = vtanh.pop %v867
    %v882 = vmul.f32 %v879, 0.0
    %v883 = vmul.f32 %v878, %v881
    %v884 = vadd.f32 %v882, %v883
    %v885 = vtanh.pop %v884
    %v886 = vmul.f32 %v880, %v885
    %887 = vmatprep.subr.mxu0 %v223
    %888 = vmatpush1.msra.mxu0 %v222
    %889 = vmatprep.subr.mxu0 %v227
    %890 = vmatpush1.msra.mxu0 %v226
    %891 = vmatprep.subr.mxu0 %v231
    %892 = vmatpush1.msra.mxu0 %v230
    %893 = vmatprep.subr.mxu0 %v235
    %894 = vmatpush1.msra.mxu0 %v234
    %895 = vmatprep.subr.mxu0 %v239
    %896 = vmatpush1.msra.mxu0 %v238
    %897 = vmatprep.subr.mxu0 %v243
    %898 = vmatpush1.msra.mxu0 %v242
    %899 = vmatprep.subr.mxu0 %v247
    %900 = vmatpush1.msra.mxu0 %v246
    %901 = vmatprep.subr.mxu0 %v251
    %902 = vmatpush1.msra.mxu0 %v250
    %903 = vmatprep.subr.mxu0 %v255
    %904 = vmatpush1.msra.mxu0 %v254
    %905 = vmatprep.subr.mxu0 %v259
    %906 = vmatpush1.msra.mxu0 %v258
    %907 = vmatprep.subr.mxu0 %v263
    %908 = vmatpush1.msra.mxu0 %v262
    %909 = vmatprep.subr.mxu0 %v267
    %910 = vmatpush1.msra.mxu0 %v266
    %911 = vmatprep.subr.mxu0 %v271
    %912 = vmatpush1.msra.mxu0 %v270
    %913 = vmatprep.subr.mxu0 %v275
    %914 = vmatpush1.msra.mxu0 %v274
    %915 = vmatprep.subr.mxu0 %v279
    %916 = vmatpush1.msra.mxu0 %v278
    %917 = vmatprep.subr.mxu0 %v283
    %918 = vmatpush1.msra.mxu0 %v282
    %919 = vmatprep.subr.mxu0 0.0
    %920 = vmatpush1.msra.mxu0 0.0
    %921 = vmatprep.subr.mxu0 0.0
    %922 = vmatpush1.msra.mxu0 0.0
    %923 = vmatprep.subr.mxu0 0.0
    %924 = vmatpush1.msra.mxu0 0.0
    %925 = vmatprep.subr.mxu0 0.0
    %926 = vmatpush1.msra.mxu0 0.0
    %927 = vmatprep.subr.mxu0 0.0
    %928 = vmatpush1.msra.mxu0 0.0
    %929 = vmatprep.subr.mxu0 0.0
    %930 = vmatpush1.msra.mxu0 0.0
    %931 = vmatprep.subr.mxu0 0.0
    %932 = vmatpush1.msra.mxu0 0.0
    %933 = vmatprep.subr.mxu0 0.0
    %934 = vmatpush1.msra.mxu0 0.0
    %935 = vmatprep.subr.mxu0 0.0
    %936 = vmatpush1.msra.mxu0 0.0
    %937 = vmatprep.subr.mxu0 0.0
    %938 = vmatpush1.msra.mxu0 0.0
    %939 = vmatprep.subr.mxu0 0.0
    %940 = vmatpush1.msra.mxu0 0.0
    %941 = vmatprep.subr.mxu0 0.0
    %942 = vmatpush1.msra.mxu0 0.0
    %943 = vmatprep.subr.mxu0 0.0
    %944 = vmatpush1.msra.mxu0 0.0
    %945 = vmatprep.subr.mxu0 0.0
    %946 = vmatpush1.msra.mxu0 0.0
    %947 = vmatprep.subr.mxu0 0.0
    %948 = vmatpush1.msra.mxu0 0.0
    %949 = vmatprep.subr.mxu0 0.0
    %950 = vmatpush1.msra.mxu0 0.0
    %951 = vmatprep.mubr.f32.mxu0 0.0
    %952 = vmatmul.mubr.f32.gmra.mrb[0].mxu0 %v886
    %v953 = vpop.f32.mrb[0].mxu0
    %v954 = vadd.f32 %v205, %v953
    %v955 = vpop.f32.mrb[0].mxu0
    %v956 = vadd.f32 %v209, %v955
    %957 = vdwg.mxu0
    %958 = vmatprep.subr.mxu0 %v225
    %959 = vmatpush1.msra.mxu0 %v224
    %960 = vmatprep.subr.mxu0 %v229
    %961 = vmatpush1.msra.mxu0 %v228
    %962 = vmatprep.subr.mxu0 %v233
    %963 = vmatpush1.msra.mxu0 %v232
    %964 = vmatprep.subr.mxu0 %v237
    %965 = vmatpush1.msra.mxu0 %v236
    %966 = vmatprep.subr.mxu0 %v241
    %967 = vmatpush1.msra.mxu0 %v240
    %968 = vmatprep.subr.mxu0 %v245
    %969 = vmatpush1.msra.mxu0 %v244
    %970 = vmatprep.subr.mxu0 %v249
    %971 = vmatpush1.msra.mxu0 %v248
    %972 = vmatprep.subr.mxu0 %v253
    %973 = vmatpush1.msra.mxu0 %v252
    %974 = vmatprep.subr.mxu0 %v257
    %975 = vmatpush1.msra.mxu0 %v256
    %976 = vmatprep.subr.mxu0 %v261
    %977 = vmatpush1.msra.mxu0 %v260
    %978 = vmatprep.subr.mxu0 %v265
    %979 = vmatpush1.msra.mxu0 %v264
    %980 = vmatprep.subr.mxu0 %v269
    %981 = vmatpush1.msra.mxu0 %v268
    %982 = vmatprep.subr.mxu0 %v273
    %983 = vmatpush1.msra.mxu0 %v272
    %984 = vmatprep.subr.mxu0 %v277
    %985 = vmatpush1.msra.mxu0 %v276
    %986 = vmatprep.subr.mxu0 %v281
    %987 = vmatpush1.msra.mxu0 %v280
    %988 = vmatprep.subr.mxu0 %v285
    %989 = vmatpush1.msra.mxu0 %v284
    %990 = vmatprep.subr.mxu0 0.0
    %991 = vmatpush1.msra.mxu0 0.0
    %992 = vmatprep.subr.mxu0 0.0
    %993 = vmatpush1.msra.mxu0 0.0
    %994 = vmatprep.subr.mxu0 0.0
    %995 = vmatpush1.msra.mxu0 0.0
    %996 = vmatprep.subr.mxu0 0.0
    %997 = vmatpush1.msra.mxu0 0.0
    %998 = vmatprep.subr.mxu0 0.0
    %999 = vmatpush1.msra.mxu0 0.0
    %1000 = vmatprep.subr.mxu0 0.0
    %1001 = vmatpush1.msra.mxu0 0.0
    %1002 = vmatprep.subr.mxu0 0.0
    %1003 = vmatpush1.msra.mxu0 0.0
    %1004 = vmatprep.subr.mxu0 0.0
    %1005 = vmatpush1.msra.mxu0 0.0
    %1006 = vmatprep.subr.mxu0 0.0
    %1007 = vmatpush1.msra.mxu0 0.0
    %1008 = vmatprep.subr.mxu0 0.0
    %1009 = vmatpush1.msra.mxu0 0.0
    %1010 = vmatprep.subr.mxu0 0.0
    %1011 = vmatpush1.msra.mxu0 0.0
    %1012 = vmatprep.subr.mxu0 0.0
    %1013 = vmatpush1.msra.mxu0 0.0
    %1014 = vmatprep.subr.mxu0 0.0
    %1015 = vmatpush1.msra.mxu0 0.0
    %1016 = vmatprep.subr.mxu0 0.0
    %1017 = vmatpush1.msra.mxu0 0.0
    %1018 = vmatprep.subr.mxu0 0.0
    %1019 = vmatpush1.msra.mxu0 0.0
    %1020 = vmatprep.subr.mxu0 0.0
    %1021 = vmatpush1.msra.mxu0 0.0
    %1022 = vmatprep.mubr.f32.mxu0 0.0
    %1023 = vmatmul.mubr.f32.gmra.mrb[0].mxu0 %v886
    %v1024 = vpop.f32.mrb[0].mxu0
    %v1025 = vadd.f32 %v213, %v1024
    %v1026 = vpop.f32.mrb[0].mxu0
    %v1027 = vadd.f32 %v217, %v1026
    %1028 = vdwg.mxu0
    %s1029 = smul.u32 1, 4
    %s1030 = smul.addr %s1029, 8
    %s1031 = scalar_lea.vmem [#allocation2], %s1030
    %v1032 = vld [vmem:[%s1031] sm:$0xff]
    %v1033 = vld [vmem:[%s1031 + $0x8] sm:$0xff]
    %v1034 = vld [vmem:[%s1031 + $0x10] sm:$0xff]
    %v1035 = vld [vmem:[%s1031 + $0x18] sm:$0xff]
    %1036 = vmatprep.subr.mxu0 %v436
    %1037 = vmatpush1.msra.mxu0 %v435
    %1038 = vmatprep.subr.mxu0 %v440
    %1039 = vmatpush1.msra.mxu0 %v439
    %1040 = vmatprep.subr.mxu0 %v444
    %1041 = vmatpush1.msra.mxu0 %v443
    %1042 = vmatprep.subr.mxu0 %v448
    %1043 = vmatpush1.msra.mxu0 %v447
    %1044 = vmatprep.subr.mxu0 %v452
    %1045 = vmatpush1.msra.mxu0 %v451
    %1046 = vmatprep.subr.mxu0 %v456
    %1047 = vmatpush1.msra.mxu0 %v455
    %1048 = vmatprep.subr.mxu0 %v460
    %1049 = vmatpush1.msra.mxu0 %v459
    %1050 = vmatprep.subr.mxu0 %v464
    %1051 = vmatpush1.msra.mxu0 %v463
    %1052 = vmatprep.subr.mxu0 %v468
    %1053 = vmatpush1.msra.mxu0 %v467
    %1054 = vmatprep.subr.mxu0 %v472
    %1055 = vmatpush1.msra.mxu0 %v471
    %1056 = vmatprep.subr.mxu0 %v476
    %1057 = vmatpush1.msra.mxu0 %v475
    %1058 = vmatprep.subr.mxu0 %v480
    %1059 = vmatpush1.msra.mxu0 %v479
    %1060 = vmatprep.subr.mxu0 %v484
    %1061 = vmatpush1.msra.mxu0 %v483
    %1062 = vmatprep.subr.mxu0 %v488
    %1063 = vmatpush1.msra.mxu0 %v487
    %1064 = vmatprep.subr.mxu0 %v492
    %1065 = vmatpush1.msra.mxu0 %v491
    %1066 = vmatprep.subr.mxu0 %v496
    %1067 = vmatpush1.msra.mxu0 %v495
    %1068 = vmatprep.subr.mxu0 0.0
    %1069 = vmatpush1.msra.mxu0 0.0
    %1070 = vmatprep.subr.mxu0 0.0
    %1071 = vmatpush1.msra.mxu0 0.0
    %1072 = vmatprep.subr.mxu0 0.0
    %1073 = vmatpush1.msra.mxu0 0.0
    %1074 = vmatprep.subr.mxu0 0.0
    %1075 = vmatpush1.msra.mxu0 0.0
    %1076 = vmatprep.subr.mxu0 0.0
    %1077 = vmatpush1.msra.mxu0 0.0
    %1078 = vmatprep.subr.mxu0 0.0
    %1079 = vmatpush1.msra.mxu0 0.0
    %1080 = vmatprep.subr.mxu0 0.0
    %1081 = vmatpush1.msra.mxu0 0.0
    %1082 = vmatprep.subr.mxu0 0.0
    %1083 = vmatpush1.msra.mxu0 0.0
    %1084 = vmatprep.subr.mxu0 0.0
    %1085 = vmatpush1.msra.mxu0 0.0
    %1086 = vmatprep.subr.mxu0 0.0
    %1087 = vmatpush1.msra.mxu0 0.0
    %1088 = vmatprep.subr.mxu0 0.0
    %1089 = vmatpush1.msra.mxu0 0.0
    %1090 = vmatprep.subr.mxu0 0.0
    %1091 = vmatpush1.msra.mxu0 0.0
    %1092 = vmatprep.subr.mxu0 0.0
    %1093 = vmatpush1.msra.mxu0 0.0
    %1094 = vmatprep.subr.mxu0 0.0
    %1095 = vmatpush1.msra.mxu0 0.0
    %1096 = vmatprep.subr.mxu0 0.0
    %1097 = vmatpush1.msra.mxu0 0.0
    %1098 = vmatprep.subr.mxu0 0.0
    %1099 = vmatpush1.msra.mxu0 0.0
    %1100 = vmatprep.mubr.f32.mxu0 0.0
    %1101 = vmatmul.mubr.f32.gmra.mrb[0].mxu0 %v662
    %v1102 = vpop.f32.mrb[0].mxu0
    %v1103 = vadd.f32 0.0, %v1102
    %v1104 = vpop.f32.mrb[0].mxu0
    %v1105 = vadd.f32 0.0, %v1104
    %1106 = vdwg.mxu0
    %1107 = vmatprep.subr.mxu0 %v438
    %1108 = vmatpush1.msra.mxu0 %v437
    %1109 = vmatprep.subr.mxu0 %v442
    %1110 = vmatpush1.msra.mxu0 %v441
    %1111 = vmatprep.subr.mxu0 %v446
    %1112 = vmatpush1.msra.mxu0 %v445
    %1113 = vmatprep.subr.mxu0 %v450
    %1114 = vmatpush1.msra.mxu0 %v449
    %1115 = vmatprep.subr.mxu0 %v454
    %1116 = vmatpush1.msra.mxu0 %v453
    %1117 = vmatprep.subr.mxu0 %v458
    %1118 = vmatpush1.msra.mxu0 %v457
    %1119 = vmatprep.subr.mxu0 %v462
    %1120 = vmatpush1.msra.mxu0 %v461
    %1121 = vmatprep.subr.mxu0 %v466
    %1122 = vmatpush1.msra.mxu0 %v465
    %1123 = vmatprep.subr.mxu0 %v470
    %1124 = vmatpush1.msra.mxu0 %v469
    %1125 = vmatprep.subr.mxu0 %v474
    %1126 = vmatpush1.msra.mxu0 %v473
    %1127 = vmatprep.subr.mxu0 %v478
    %1128 = vmatpush1.msra.mxu0 %v477
    %1129 = vmatprep.subr.mxu0 %v482
    %1130 = vmatpush1.msra.mxu0 %v481
    %1131 = vmatprep.subr.mxu0 %v486
    %1132 = vmatpush1.msra.mxu0 %v485
    %1133 = vmatprep.subr.mxu0 %v490
    %1134 = vmatpush1.msra.mxu0 %v489
    %1135 = vmatprep.subr.mxu0 %v494
    %1136 = vmatpush1.msra.mxu0 %v493
    %1137 = vmatprep.subr.mxu0 %v498
    %1138 = vmatpush1.msra.mxu0 %v497
    %1139 = vmatprep.subr.mxu0 0.0
    %1140 = vmatpush1.msra.mxu0 0.0
    %1141 = vmatprep.subr.mxu0 0.0
    %1142 = vmatpush1.msra.mxu0 0.0
    %1143 = vmatprep.subr.mxu0 0.0
    %1144 = vmatpush1.msra.mxu0 0.0
    %1145 = vmatprep.subr.mxu0 0.0
    %1146 = vmatpush1.msra.mxu0 0.0
    %1147 = vmatprep.subr.mxu0 0.0
    %1148 = vmatpush1.msra.mxu0 0.0
    %1149 = vmatprep.subr.mxu0 0.0
    %1150 = vmatpush1.msra.mxu0 0.0
    %1151 = vmatprep.subr.mxu0 0.0
    %1152 = vmatpush1.msra.mxu0 0.0
    %1153 = vmatprep.subr.mxu0 0.0
    %1154 = vmatpush1.msra.mxu0 0.0
    %1155 = vmatprep.subr.mxu0 0.0
    %1156 = vmatpush1.msra.mxu0 0.0
    %1157 = vmatprep.subr.mxu0 0.0
    %1158 = vmatpush1.msra.mxu0 0.0
    %1159 = vmatprep.subr.mxu0 0.0
    %1160 = vmatpush1.msra.mxu0 0.0
    %1161 = vmatprep.subr.mxu0 0.0
    %1162 = vmatpush1.msra.mxu0 0.0
    %1163 = vmatprep.subr.mxu0 0.0
    %1164 = vmatpush1.msra.mxu0 0.0
    %1165 = vmatprep.subr.mxu0 0.0
    %1166 = vmatpush1.msra.mxu0 0.0
    %1167 = vmatprep.subr.mxu0 0.0
    %1168 = vmatpush1.msra.mxu0 0.0
    %1169 = vmatprep.subr.mxu0 0.0
    %1170 = vmatpush1.msra.mxu0 0.0
    %1171 = vmatprep.mubr.f32.mxu0 0.0
    %1172 = vmatmul.mubr.f32.gmra.mrb[0].mxu0 %v662
    %v1173 = vpop.f32.mrb[0].mxu0
    %v1174 = vadd.f32 0.0, %v1173
    %v1175 = vpop.f32.mrb[0].mxu0
    %v1176 = vadd.f32 0.0, %v1175
    %1177 = vdwg.mxu0
    %v1178 = vadd.f32 %v1032, %v1103
    %v1179 = vadd.f32 %v1033, %v1105
    %v1180 = vadd.f32 %v1034, %v1174
    %v1181 = vadd.f32 %v1035, %v1176
    %v1182 = vmul.f32 %v1178, 0.5
    %v1183 = vmul.f32 %v1179, 0.5
    %v1184 = vmul.f32 %v1180, 0.5
    %v1185 = vtanh.pop %v1182
    %v1186 = vtanh.pop %v1183
    %v1187 = vtanh.pop %v1184
    %v1188 = vmul.f32 %v1185, 0.5
    %v1189 = vmul.f32 %v1186, 0.5
    %v1190 = vmul.f32 %v1187, 0.5
    %v1191 = vadd.f32 %v1188, 0.5
    %v1192 = vadd.f32 %v1189, 0.5
    %v1193 = vadd.f32 %v1190, 0.5
    %v1194 = vtanh.pop %v1181
    %v1195 = vmul.f32 %v1192, %v660
    %v1196 = vmul.f32 %v1191, %v1194
    %v1197 = vadd.f32 %v1195, %v1196
    %v1198 = vtanh.pop %v1197
    %v1199 = vmul.f32 %v1193, %v1198
    %1200 = vmatprep.subr.mxu0 %v664
    %1201 = vmatpush1.msra.mxu0 %v663
    %1202 = vmatprep.subr.mxu0 %v668
    %1203 = vmatpush1.msra.mxu0 %v667
    %1204 = vmatprep.subr.mxu0 %v672
    %1205 = vmatpush1.msra.mxu0 %v671
    %1206 = vmatprep.subr.mxu0 %v676
    %1207 = vmatpush1.msra.mxu0 %v675
    %1208 = vmatprep.subr.mxu0 %v680
    %1209 = vmatpush1.msra.mxu0 %v679
    %1210 = vmatprep.subr.mxu0 %v684
    %1211 = vmatpush1.msra.mxu0 %v683
    %1212 = vmatprep.subr.mxu0 %v688
    %1213 = vmatpush1.msra.mxu0 %v687
    %1214 = vmatprep.subr.mxu0 %v692
    %1215 = vmatpush1.msra.mxu0 %v691
    %1216 = vmatprep.subr.mxu0 %v696
    %1217 = vmatpush1.msra.mxu0 %v695
    %1218 = vmatprep.subr.mxu0 %v700
    %1219 = vmatpush1.msra.mxu0 %v699
    %1220 = vmatprep.subr.mxu0 %v704
    %1221 = vmatpush1.msra.mxu0 %v703
    %1222 = vmatprep.subr.mxu0 %v708
    %1223 = vmatpush1.msra.mxu0 %v707
    %1224 = vmatprep.subr.mxu0 %v712
    %1225 = vmatpush1.msra.mxu0 %v711
    %1226 = vmatprep.subr.mxu0 %v716
    %1227 = vmatpush1.msra.mxu0 %v715
    %1228 = vmatprep.subr.mxu0 %v720
    %1229 = vmatpush1.msra.mxu0 %v719
    %1230 = vmatprep.subr.mxu0 %v724
    %1231 = vmatpush1.msra.mxu0 %v723
    %1232 = vmatprep.subr.mxu0 0.0
    %1233 = vmatpush1.msra.mxu0 0.0
    %1234 = vmatprep.subr.mxu0 0.0
    %1235 = vmatpush1.msra.mxu0 0.0
    %1236 = vmatprep.subr.mxu0 0.0
    %1237 = vmatpush1.msra.mxu0 0.0
    %1238 = vmatprep.subr.mxu0 0.0
    %1239 = vmatpush1.msra.mxu0 0.0
    %1240 = vmatprep.subr.mxu0 0.0
    %1241 = vmatpush1.msra.mxu0 0.0
    %1242 = vmatprep.subr.mxu0 0.0
    %1243 = vmatpush1.msra.mxu0 0.0
    %1244 = vmatprep.subr.mxu0 0.0
    %1245 = vmatpush1.msra.mxu0 0.0
    %1246 = vmatprep.subr.mxu0 0.0
    %1247 = vmatpush1.msra.mxu0 0.0
    %1248 = vmatprep.subr.mxu0 0.0
    %1249 = vmatpush1.msra.mxu0 0.0
    %1250 = vmatprep.subr.mxu0 0.0
    %1251 = vmatpush1.msra.mxu0 0.0
    %1252 = vmatprep.subr.mxu0 0.0
    %1253 = vmatpush1.msra.mxu0 0.0
    %1254 = vmatprep.subr.mxu0 0.0
    %1255 = vmatpush1.msra.mxu0 0.0
    %1256 = vmatprep.subr.mxu0 0.0
    %1257 = vmatpush1.msra.mxu0 0.0
    %1258 = vmatprep.subr.mxu0 0.0
    %1259 = vmatpush1.msra.mxu0 0.0
    %1260 = vmatprep.subr.mxu0 0.0
    %1261 = vmatpush1.msra.mxu0 0.0
    %1262 = vmatprep.subr.mxu0 0.0
    %1263 = vmatpush1.msra.mxu0 0.0
    %1264 = vmatprep.mubr.f32.mxu0 0.0
    %1265 = vmatmul.mubr.f32.gmra.mrb[0].mxu0 %v1199
    %v1266 = vpop.f32.mrb[0].mxu0
    %v1267 = vadd.f32 %v954, %v1266
    %v1268 = vpop.f32.mrb[0].mxu0
    %v1269 = vadd.f32 %v956, %v1268
    %1270 = vdwg.mxu0
    %1271 = vmatprep.subr.mxu0 %v666
    %1272 = vmatpush1.msra.mxu0 %v665
    %1273 = vmatprep.subr.mxu0 %v670
    %1274 = vmatpush1.msra.mxu0 %v669
    %1275 = vmatprep.subr.mxu0 %v674
    %1276 = vmatpush1.msra.mxu0 %v673
    %1277 = vmatprep.subr.mxu0 %v678
    %1278 = vmatpush1.msra.mxu0 %v677
    %1279 = vmatprep.subr.mxu0 %v682
    %1280 = vmatpush1.msra.mxu0 %v681
    %1281 = vmatprep.subr.mxu0 %v686
    %1282 = vmatpush1.msra.mxu0 %v685
    %1283 = vmatprep.subr.mxu0 %v690
    %1284 = vmatpush1.msra.mxu0 %v689
    %1285 = vmatprep.subr.mxu0 %v694
    %1286 = vmatpush1.msra.mxu0 %v693
    %1287 = vmatprep.subr.mxu0 %v698
    %1288 = vmatpush1.msra.mxu0 %v697
    %1289 = vmatprep.subr.mxu0 %v702
    %1290 = vmatpush1.msra.mxu0 %v701
    %1291 = vmatprep.subr.mxu0 %v706
    %1292 = vmatpush1.msra.mxu0 %v705
    %1293 = vmatprep.subr.mxu0 %v710
    %1294 = vmatpush1.msra.mxu0 %v709
    %1295 = vmatprep.subr.mxu0 %v714
    %1296 = vmatpush1.msra.mxu0 %v713
    %1297 = vmatprep.subr.mxu0 %v718
    %1298 = vmatpush1.msra.mxu0 %v717
    %1299 = vmatprep.subr.mxu0 %v722
    %1300 = vmatpush1.msra.mxu0 %v721
    %1301 = vmatprep.subr.mxu0 %v726
    %1302 = vmatpush1.msra.mxu0 %v725
    %1303 = vmatprep.subr.mxu0 0.0
    %1304 = vmatpush1.msra.mxu0 0.0
    %1305 = vmatprep.subr.mxu0 0.0
    %1306 = vmatpush1.msra.mxu0 0.0
    %1307 = vmatprep.subr.mxu0 0.0
    %1308 = vmatpush1.msra.mxu0 0.0
    %1309 = vmatprep.subr.mxu0 0.0
    %1310 = vmatpush1.msra.mxu0 0.0
    %1311 = vmatprep.subr.mxu0 0.0
    %1312 = vmatpush1.msra.mxu0 0.0
    %1313 = vmatprep.subr.mxu0 0.0
    %1314 = vmatpush1.msra.mxu0 0.0
    %1315 = vmatprep.subr.mxu0 0.0
    %1316 = vmatpush1.msra.mxu0 0.0
    %1317 = vmatprep.subr.mxu0 0.0
    %1318 = vmatpush1.msra.mxu0 0.0
    %1319 = vmatprep.subr.mxu0 0.0
    %1320 = vmatpush1.msra.mxu0 0.0
    %1321 = vmatprep.subr.mxu0 0.0
    %1322 = vmatpush1.msra.mxu0 0.0
    %1323 = vmatprep.subr.mxu0 0.0
    %1324 = vmatpush1.msra.mxu0 0.0
    %1325 = vmatprep.subr.mxu0 0.0
    %1326 = vmatpush1.msra.mxu0 0.0
    %1327 = vmatprep.subr.mxu0 0.0
    %1328 = vmatpush1.msra.mxu0 0.0
    %1329 = vmatprep.subr.mxu0 0.0
    %1330 = vmatpush1.msra.mxu0 0.0
    %1331 = vmatprep.subr.mxu0 0.0
    %1332 = vmatpush1.msra.mxu0 0.0
    %1333 = vmatprep.subr.mxu0 0.0
    %1334 = vmatpush1.msra.mxu0 0.0
    %1335 = vmatprep.mubr.f32.mxu0 0.0
    %1336 = vmatmul.mubr.f32.gmra.mrb[0].mxu0 %v1199
    %v1337 = vpop.f32.mrb[0].mxu0
    %v1338 = vadd.f32 %v1025, %v1337
    %v1339 = vpop.f32.mrb[0].mxu0
    %v1340 = vadd.f32 %v1027, %v1339
    %1341 = vdwg.mxu0
    %v1342 = vmul.f32 %v1267, 0.5
    %v1343 = vmul.f32 %v1269, 0.5
    %v1344 = vmul.f32 %v1338, 0.5
    %v1345 = vtanh.pop %v1342
    %v1346 = vtanh.pop %v1343
    %v1347 = vtanh.pop %v1344
    %v1348 = vmul.f32 %v1345, 0.5
    %v1349 = vmul.f32 %v1346, 0.5
    %v1350 = vmul.f32 %v1347, 0.5
    %v1351 = vadd.f32 %v1348, 0.5
    %v1352 = vadd.f32 %v1349, 0.5
    %v1353 = vadd.f32 %v1350, 0.5
    %v1354 = vtanh.pop %v1340
    %v1355 = vmul.f32 %v1352, %v884
    %v1356 = vmul.f32 %v1351, %v1354
    %v1357 = vadd.f32 %v1355, %v1356
    %v1358 = vtanh.pop %v1357
    %v1359 = vmul.f32 %v1353, %v1358
    %1360 = vmatprep.subr.mxu0 %v223
    %1361 = vmatpush1.msra.mxu0 %v222
    %1362 = vmatprep.subr.mxu0 %v227
    %1363 = vmatpush1.msra.mxu0 %v226
    %1364 = vmatprep.subr.mxu0 %v231
    %1365 = vmatpush1.msra.mxu0 %v230
    %1366 = vmatprep.subr.mxu0 %v235
    %1367 = vmatpush1.msra.mxu0 %v234
    %1368 = vmatprep.subr.mxu0 %v239
    %1369 = vmatpush1.msra.mxu0 %v238
    %1370 = vmatprep.subr.mxu0 %v243
    %1371 = vmatpush1.msra.mxu0 %v242
    %1372 = vmatprep.subr.mxu0 %v247
    %1373 = vmatpush1.msra.mxu0 %v246
    %1374 = vmatprep.subr.mxu0 %v251
    %1375 = vmatpush1.msra.mxu0 %v250
    %1376 = vmatprep.subr.mxu0 %v255
    %1377 = vmatpush1.msra.mxu0 %v254
    %1378 = vmatprep.subr.mxu0 %v259
    %1379 = vmatpush1.msra.mxu0 %v258
    %1380 = vmatprep.subr.mxu0 %v263
    %1381 = vmatpush1.msra.mxu0 %v262
    %1382 = vmatprep.subr.mxu0 %v267
    %1383 = vmatpush1.msra.mxu0 %v266
    %1384 = vmatprep.subr.mxu0 %v271
    %1385 = vmatpush1.msra.mxu0 %v270
    %1386 = vmatprep.subr.mxu0 %v275
    %1387 = vmatpush1.msra.mxu0 %v274
    %1388 = vmatprep.subr.mxu0 %v279
    %1389 = vmatpush1.msra.mxu0 %v278
    %1390 = vmatprep.subr.mxu0 %v283
    %1391 = vmatpush1.msra.mxu0 %v282
    %1392 = vmatprep.subr.mxu0 0.0
    %1393 = vmatpush1.msra.mxu0 0.0
    %1394 = vmatprep.subr.mxu0 0.0
    %1395 = vmatpush1.msra.mxu0 0.0
    %1396 = vmatprep.subr.mxu0 0.0
    %1397 = vmatpush1.msra.mxu0 0.0
    %1398 = vmatprep.subr.mxu0 0.0
    %1399 = vmatpush1.msra.mxu0 0.0
    %1400 = vmatprep.subr.mxu0 0.0
    %1401 = vmatpush1.msra.mxu0 0.0
    %1402 = vmatprep.subr.mxu0 0.0
    %1403 = vmatpush1.msra.mxu0 0.0
    %1404 = vmatprep.subr.mxu0 0.0
    %1405 = vmatpush1.msra.mxu0 0.0
    %1406 = vmatprep.subr.mxu0 0.0
    %1407 = vmatpush1.msra.mxu0 0.0
    %1408 = vmatprep.subr.mxu0 0.0
    %1409 = vmatpush1.msra.mxu0 0.0
    %1410 = vmatprep.subr.mxu0 0.0
    %1411 = vmatpush1.msra.mxu0 0.0
    %1412 = vmatprep.subr.mxu0 0.0
    %1413 = vmatpush1.msra.mxu0 0.0
    %1414 = vmatprep.subr.mxu0 0.0
    %1415 = vmatpush1.msra.mxu0 0.0
    %1416 = vmatprep.subr.mxu0 0.0
    %1417 = vmatpush1.msra.mxu0 0.0
    %1418 = vmatprep.subr.mxu0 0.0
    %1419 = vmatpush1.msra.mxu0 0.0
    %1420 = vmatprep.subr.mxu0 0.0
    %1421 = vmatpush1.msra.mxu0 0.0
    %1422 = vmatprep.subr.mxu0 0.0
    %1423 = vmatpush1.msra.mxu0 0.0
    %1424 = vmatprep.mubr.f32.mxu0 0.0
    %1425 = vmatmul.mubr.f32.gmra.mrb[0].mxu0 %v1359
    %v1426 = vpop.f32.mrb[0].mxu0
    %v1427 = vadd.f32 %v205, %v1426
    %v1428 = vpop.f32.mrb[0].mxu0
    %v1429 = vadd.f32 %v209, %v1428
    %1430 = vdwg.mxu0
    %1431 = vmatprep.subr.mxu0 %v225
    %1432 = vmatpush1.msra.mxu0 %v224
    %1433 = vmatprep.subr.mxu0 %v229
    %1434 = vmatpush1.msra.mxu0 %v228
    %1435 = vmatprep.subr.mxu0 %v233
    %1436 = vmatpush1.msra.mxu0 %v232
    %1437 = vmatprep.subr.mxu0 %v237
    %1438 = vmatpush1.msra.mxu0 %v236
    %1439 = vmatprep.subr.mxu0 %v241
    %1440 = vmatpush1.msra.mxu0 %v240
    %1441 = vmatprep.subr.mxu0 %v245
    %1442 = vmatpush1.msra.mxu0 %v244
    %1443 = vmatprep.subr.mxu0 %v249
    %1444 = vmatpush1.msra.mxu0 %v248
    %1445 = vmatprep.subr.mxu0 %v253
    %1446 = vmatpush1.msra.mxu0 %v252
    %1447 = vmatprep.subr.mxu0 %v257
    %1448 = vmatpush1.msra.mxu0 %v256
    %1449 = vmatprep.subr.mxu0 %v261
    %1450 = vmatpush1.msra.mxu0 %v260
    %1451 = vmatprep.subr.mxu0 %v265
    %1452 = vmatpush1.msra.mxu0 %v264
    %1453 = vmatprep.subr.mxu0 %v269
    %1454 = vmatpush1.msra.mxu0 %v268
    %1455 = vmatprep.subr.mxu0 %v273
    %1456 = vmatpush1.msra.mxu0 %v272
    %1457 = vmatprep.subr.mxu0 %v277
    %1458 = vmatpush1.msra.mxu0 %v276
    %1459 = vmatprep.subr.mxu0 %v281
    %1460 = vmatpush1.msra.mxu0 %v280
    %1461 = vmatprep.subr.mxu0 %v285
    %1462 = vmatpush1.msra.mxu0 %v284
    %1463 = vmatprep.subr.mxu0 0.0
    %1464 = vmatpush1.msra.mxu0 0.0
    %1465 = vmatprep.subr.mxu0 0.0
    %1466 = vmatpush1.msra.mxu0 0.0
    %1467 = vmatprep.subr.mxu0 0.0
    %1468 = vmatpush1.msra.mxu0 0.0
    %1469 = vmatprep.subr.mxu0 0.0
    %1470 = vmatpush1.msra.mxu0 0.0
    %1471 = vmatprep.subr.mxu0 0.0
    %1472 = vmatpush1.msra.mxu0 0.0
    %1473 = vmatprep.subr.mxu0 0.0
    %1474 = vmatpush1.msra.mxu0 0.0
    %1475 = vmatprep.subr.mxu0 0.0
    %1476 = vmatpush1.msra.mxu0 0.0
    %1477 = vmatprep.subr.mxu0 0.0
    %1478 = vmatpush1.msra.mxu0 0.0
    %1479 = vmatprep.subr.mxu0 0.0
    %1480 = vmatpush1.msra.mxu0 0.0
    %1481 = vmatprep.subr.mxu0 0.0
    %1482 = vmatpush1.msra.mxu0 0.0
    %1483 = vmatprep.subr.mxu0 0.0
    %1484 = vmatpush1.msra.mxu0 0.0
    %1485 = vmatprep.subr.mxu0 0.0
    %1486 = vmatpush1.msra.mxu0 0.0
    %1487 = vmatprep.subr.mxu0 0.0
    %1488 = vmatpush1.msra.mxu0 0.0
    %1489 = vmatprep.subr.mxu0 0.0
    %1490 = vmatpush1.msra.mxu0 0.0
    %1491 = vmatprep.subr.mxu0 0.0
    %1492 = vmatpush1.msra.mxu0 0.0
    %1493 = vmatprep.subr.mxu0 0.0
    %1494 = vmatpush1.msra.mxu0 0.0
    %1495 = vmatprep.mubr.f32.mxu0 0.0
    %1496 = vmatmul.mubr.f32.gmra.mrb[0].mxu0 %v1359
    %v1497 = vpop.f32.mrb[0].mxu0
    %v1498 = vadd.f32 %v213, %v1497
    %v1499 = vpop.f32.mrb[0].mxu0
    %v1500 = vadd.f32 %v217, %v1499
    %1501 = vdwg.mxu0
    %s1502 = smul.u32 2, 4
    %s1503 = smul.addr %s1502, 8
    %s1504 = scalar_lea.vmem [#allocation2], %s1503
    %v1505 = vld [vmem:[%s1504] sm:$0xff]
    %v1506 = vld [vmem:[%s1504 + $0x8] sm:$0xff]
    %v1507 = vld [vmem:[%s1504 + $0x10] sm:$0xff]
    %v1508 = vld [vmem:[%s1504 + $0x18] sm:$0xff]
    %1509 = vmatprep.subr.mxu0 %v436
    %1510 = vmatpush1.msra.mxu0 %v435
    %1511 = vmatprep.subr.mxu0 %v440
    %1512 = vmatpush1.msra.mxu0 %v439
    %1513 = vmatprep.subr.mxu0 %v444
    %1514 = vmatpush1.msra.mxu0 %v443
    %1515 = vmatprep.subr.mxu0 %v448
    %1516 = vmatpush1.msra.mxu0 %v447
    %1517 = vmatprep.subr.mxu0 %v452
    %1518 = vmatpush1.msra.mxu0 %v451
    %1519 = vmatprep.subr.mxu0 %v456
    %1520 = vmatpush1.msra.mxu0 %v455
    %1521 = vmatprep.subr.mxu0 %v460
    %1522 = vmatpush1.msra.mxu0 %v459
    %1523 = vmatprep.subr.mxu0 %v464
    %1524 = vmatpush1.msra.mxu0 %v463
    %1525 = vmatprep.subr.mxu0 %v468
    %1526 = vmatpush1.msra.mxu0 %v467
    %1527 = vmatprep.subr.mxu0 %v472
    %1528 = vmatpush1.msra.mxu0 %v471
    %1529 = vmatprep.subr.mxu0 %v476
    %1530 = vmatpush1.msra.mxu0 %v475
    %1531 = vmatprep.subr.mxu0 %v480
    %1532 = vmatpush1.msra.mxu0 %v479
    %1533 = vmatprep.subr.mxu0 %v484
    %1534 = vmatpush1.msra.mxu0 %v483
    %1535 = vmatprep.subr.mxu0 %v488
    %1536 = vmatpush1.msra.mxu0 %v487
    %1537 = vmatprep.subr.mxu0 %v492
    %1538 = vmatpush1.msra.mxu0 %v491
    %1539 = vmatprep.subr.mxu0 %v496
    %1540 = vmatpush1.msra.mxu0 %v495
    %1541 = vmatprep.subr.mxu0 0.0
    %1542 = vmatpush1.msra.mxu0 0.0
    %1543 = vmatprep.subr.mxu0 0.0
    %1544 = vmatpush1.msra.mxu0 0.0
    %1545 = vmatprep.subr.mxu0 0.0
    %1546 = vmatpush1.msra.mxu0 0.0
    %1547 = vmatprep.subr.mxu0 0.0
    %1548 = vmatpush1.msra.mxu0 0.0
    %1549 = vmatprep.subr.mxu0 0.0
    %1550 = vmatpush1.msra.mxu0 0.0
    %1551 = vmatprep.subr.mxu0 0.0
    %1552 = vmatpush1.msra.mxu0 0.0
    %1553 = vmatprep.subr.mxu0 0.0
    %1554 = vmatpush1.msra.mxu0 0.0
    %1555 = vmatprep.subr.mxu0 0.0
    %1556 = vmatpush1.msra.mxu0 0.0
    %1557 = vmatprep.subr.mxu0 0.0
    %1558 = vmatpush1.msra.mxu0 0.0
    %1559 = vmatprep.subr.mxu0 0.0
    %1560 = vmatpush1.msra.mxu0 0.0
    %1561 = vmatprep.subr.mxu0 0.0
    %1562 = vmatpush1.msra.mxu0 0.0
    %1563 = vmatprep.subr.mxu0 0.0
    %1564 = vmatpush1.msra.mxu0 0.0
    %1565 = vmatprep.subr.mxu0 0.0
    %1566 = vmatpush1.msra.mxu0 0.0
    %1567 = vmatprep.subr.mxu0 0.0
    %1568 = vmatpush1.msra.mxu0 0.0
    %1569 = vmatprep.subr.mxu0 0.0
    %1570 = vmatpush1.msra.mxu0 0.0
    %1571 = vmatprep.subr.mxu0 0.0
    %1572 = vmatpush1.msra.mxu0 0.0
    %1573 = vmatprep.mubr.f32.mxu0 0.0
    %1574 = vmatmul.mubr.f32.gmra.mrb[0].mxu0 %v1199
    %v1575 = vpop.f32.mrb[0].mxu0
    %v1576 = vadd.f32 0.0, %v1575
    %v1577 = vpop.f32.mrb[0].mxu0
    %v1578 = vadd.f32 0.0, %v1577
    %1579 = vdwg.mxu0
    %1580 = vmatprep.subr.mxu0 %v438
    %1581 = vmatpush1.msra.mxu0 %v437
    %1582 = vmatprep.subr.mxu0 %v442
    %1583 = vmatpush1.msra.mxu0 %v441
    %1584 = vmatprep.subr.mxu0 %v446
    %1585 = vmatpush1.msra.mxu0 %v445
    %1586 = vmatprep.subr.mxu0 %v450
    %1587 = vmatpush1.msra.mxu0 %v449
    %1588 = vmatprep.subr.mxu0 %v454
    %1589 = vmatpush1.msra.mxu0 %v453
    %1590 = vmatprep.subr.mxu0 %v458
    %1591 = vmatpush1.msra.mxu0 %v457
    %1592 = vmatprep.subr.mxu0 %v462
    %1593 = vmatpush1.msra.mxu0 %v461
    %1594 = vmatprep.subr.mxu0 %v466
    %1595 = vmatpush1.msra.mxu0 %v465
    %1596 = vmatprep.subr.mxu0 %v470
    %1597 = vmatpush1.msra.mxu0 %v469
    %1598 = vmatprep.subr.mxu0 %v474
    %1599 = vmatpush1.msra.mxu0 %v473
    %1600 = vmatprep.subr.mxu0 %v478
    %1601 = vmatpush1.msra.mxu0 %v477
    %1602 = vmatprep.subr.mxu0 %v482
    %1603 = vmatpush1.msra.mxu0 %v481
    %1604 = vmatprep.subr.mxu0 %v486
    %1605 = vmatpush1.msra.mxu0 %v485
    %1606 = vmatprep.subr.mxu0 %v490
    %1607 = vmatpush1.msra.mxu0 %v489
    %1608 = vmatprep.subr.mxu0 %v494
    %1609 = vmatpush1.msra.mxu0 %v493
    %1610 = vmatprep.subr.mxu0 %v498
    %1611 = vmatpush1.msra.mxu0 %v497
    %1612 = vmatprep.subr.mxu0 0.0
    %1613 = vmatpush1.msra.mxu0 0.0
    %1614 = vmatprep.subr.mxu0 0.0
    %1615 = vmatpush1.msra.mxu0 0.0
    %1616 = vmatprep.subr.mxu0 0.0
    %1617 = vmatpush1.msra.mxu0 0.0
    %1618 = vmatprep.subr.mxu0 0.0
    %1619 = vmatpush1.msra.mxu0 0.0
    %1620 = vmatprep.subr.mxu0 0.0
    %1621 = vmatpush1.msra.mxu0 0.0
    %1622 = vmatprep.subr.mxu0 0.0
    %1623 = vmatpush1.msra.mxu0 0.0
    %1624 = vmatprep.subr.mxu0 0.0
    %1625 = vmatpush1.msra.mxu0 0.0
    %1626 = vmatprep.subr.mxu0 0.0
    %1627 = vmatpush1.msra.mxu0 0.0
    %1628 = vmatprep.subr.mxu0 0.0
    %1629 = vmatpush1.msra.mxu0 0.0
    %1630 = vmatprep.subr.mxu0 0.0
    %1631 = vmatpush1.msra.mxu0 0.0
    %1632 = vmatprep.subr.mxu0 0.0
    %1633 = vmatpush1.msra.mxu0 0.0
    %1634 = vmatprep.subr.mxu0 0.0
    %1635 = vmatpush1.msra.mxu0 0.0
    %1636 = vmatprep.subr.mxu0 0.0
    %1637 = vmatpush1.msra.mxu0 0.0
    %1638 = vmatprep.subr.mxu0 0.0
    %1639 = vmatpush1.msra.mxu0 0.0
    %1640 = vmatprep.subr.mxu0 0.0
    %1641 = vmatpush1.msra.mxu0 0.0
    %1642 = vmatprep.subr.mxu0 0.0
    %1643 = vmatpush1.msra.mxu0 0.0
    %1644 = vmatprep.mubr.f32.mxu0 0.0
    %1645 = vmatmul.mubr.f32.gmra.mrb[0].mxu0 %v1199
    %v1646 = vpop.f32.mrb[0].mxu0
    %v1647 = vadd.f32 0.0, %v1646
    %v1648 = vpop.f32.mrb[0].mxu0
    %v1649 = vadd.f32 0.0, %v1648
    %1650 = vdwg.mxu0
    %v1651 = vadd.f32 %v1505, %v1576
    %v1652 = vadd.f32 %v1506, %v1578
    %v1653 = vadd.f32 %v1507, %v1647
    %v1654 = vadd.f32 %v1508, %v1649
    %v1655 = vmul.f32 %v1651, 0.5
    %v1656 = vmul.f32 %v1652, 0.5
    %v1657 = vmul.f32 %v1653, 0.5
    %v1658 = vtanh.pop %v1655
    %v1659 = vtanh.pop %v1656
    %v1660 = vtanh.pop %v1657
    %v1661 = vmul.f32 %v1658, 0.5
    %v1662 = vmul.f32 %v1659, 0.5
    %v1663 = vmul.f32 %v1660, 0.5
    %v1664 = vadd.f32 %v1661, 0.5
    %v1665 = vadd.f32 %v1662, 0.5
    %v1666 = vadd.f32 %v1663, 0.5
    %v1667 = vtanh.pop %v1654
    %v1668 = vmul.f32 %v1665, %v1197
    %v1669 = vmul.f32 %v1664, %v1667
    %v1670 = vadd.f32 %v1668, %v1669
    %v1671 = vtanh.pop %v1670
    %v1672 = vmul.f32 %v1666, %v1671
    %1673 = vmatprep.subr.mxu0 %v664
    %1674 = vmatpush1.msra.mxu0 %v663
    %1675 = vmatprep.subr.mxu0 %v668
    %1676 = vmatpush1.msra.mxu0 %v667
    %1677 = vmatprep.subr.mxu0 %v672
    %1678 = vmatpush1.msra.mxu0 %v671
    %1679 = vmatprep.subr.mxu0 %v676
    %1680 = vmatpush1.msra.mxu0 %v675
    %1681 = vmatprep.subr.mxu0 %v680
    %1682 = vmatpush1.msra.mxu0 %v679
    %1683 = vmatprep.subr.mxu0 %v684
    %1684 = vmatpush1.msra.mxu0 %v683
    %1685 = vmatprep.subr.mxu0 %v688
    %1686 = vmatpush1.msra.mxu0 %v687
    %1687 = vmatprep.subr.mxu0 %v692
    %1688 = vmatpush1.msra.mxu0 %v691
    %1689 = vmatprep.subr.mxu0 %v696
    %1690 = vmatpush1.msra.mxu0 %v695
    %1691 = vmatprep.subr.mxu0 %v700
    %1692 = vmatpush1.msra.mxu0 %v699
    %1693 = vmatprep.subr.mxu0 %v704
    %1694 = vmatpush1.msra.mxu0 %v703
    %1695 = vmatprep.subr.mxu0 %v708
    %1696 = vmatpush1.msra.mxu0 %v707
    %1697 = vmatprep.subr.mxu0 %v712
    %1698 = vmatpush1.msra.mxu0 %v711
    %1699 = vmatprep.subr.mxu0 %v716
    %1700 = vmatpush1.msra.mxu0 %v715
    %1701 = vmatprep.subr.mxu0 %v720
    %1702 = vmatpush1.msra.mxu0 %v719
    %1703 = vmatprep.subr.mxu0 %v724
    %1704 = vmatpush1.msra.mxu0 %v723
    %1705 = vmatprep.subr.mxu0 0.0
    %1706 = vmatpush1.msra.mxu0 0.0
    %1707 = vmatprep.subr.mxu0 0.0
    %1708 = vmatpush1.msra.mxu0 0.0
    %1709 = vmatprep.subr.mxu0 0.0
    %1710 = vmatpush1.msra.mxu0 0.0
    %1711 = vmatprep.subr.mxu0 0.0
    %1712 = vmatpush1.msra.mxu0 0.0
    %1713 = vmatprep.subr.mxu0 0.0
    %1714 = vmatpush1.msra.mxu0 0.0
    %1715 = vmatprep.subr.mxu0 0.0
    %1716 = vmatpush1.msra.mxu0 0.0
    %1717 = vmatprep.subr.mxu0 0.0
    %1718 = vmatpush1.msra.mxu0 0.0
    %1719 = vmatprep.subr.mxu0 0.0
    %1720 = vmatpush1.msra.mxu0 0.0
    %1721 = vmatprep.subr.mxu0 0.0
    %1722 = vmatpush1.msra.mxu0 0.0
    %1723 = vmatprep.subr.mxu0 0.0
    %1724 = vmatpush1.msra.mxu0 0.0
    %1725 = vmatprep.subr.mxu0 0.0
    %1726 = vmatpush1.msra.mxu0 0.0
    %1727 = vmatprep.subr.mxu0 0.0
    %1728 = vmatpush1.msra.mxu0 0.0
    %1729 = vmatprep.subr.mxu0 0.0
    %1730 = vmatpush1.msra.mxu0 0.0
    %1731 = vmatprep.subr.mxu0 0.0
    %1732 = vmatpush1.msra.mxu0 0.0
    %1733 = vmatprep.subr.mxu0 0.0
    %1734 = vmatpush1.msra.mxu0 0.0
    %1735 = vmatprep.subr.mxu0 0.0
    %1736 = vmatpush1.msra.mxu0 0.0
    %1737 = vmatprep.mubr.f32.mxu0 0.0
    %1738 = vmatmul.mubr.f32.gmra.mrb[0].mxu0 %v1672
    %v1739 = vpop.f32.mrb[0].mxu0
    %v1740 = vadd.f32 %v1427, %v1739
    %v1741 = vpop.f32.mrb[0].mxu0
    %v1742 = vadd.f32 %v1429, %v1741
    %1743 = vdwg.mxu0
    %1744 = vmatprep.subr.mxu0 %v666
    %1745 = vmatpush1.msra.mxu0 %v665
    %1746 = vmatprep.subr.mxu0 %v670
    %1747 = vmatpush1.msra.mxu0 %v669
    %1748 = vmatprep.subr.mxu0 %v674
    %1749 = vmatpush1.msra.mxu0 %v673
    %1750 = vmatprep.subr.mxu0 %v678
    %1751 = vmatpush1.msra.mxu0 %v677
    %1752 = vmatprep.subr.mxu0 %v682
    %1753 = vmatpush1.msra.mxu0 %v681
    %1754 = vmatprep.subr.mxu0 %v686
    %1755 = vmatpush1.msra.mxu0 %v685
    %1756 = vmatprep.subr.mxu0 %v690
    %1757 = vmatpush1.msra.mxu0 %v689
    %1758 = vmatprep.subr.mxu0 %v694
    %1759 = vmatpush1.msra.mxu0 %v693
    %1760 = vmatprep.subr.mxu0 %v698
    %1761 = vmatpush1.msra.mxu0 %v697
    %1762 = vmatprep.subr.mxu0 %v702
    %1763 = vmatpush1.msra.mxu0 %v701
    %1764 = vmatprep.subr.mxu0 %v706
    %1765 = vmatpush1.msra.mxu0 %v705
    %1766 = vmatprep.subr.mxu0 %v710
    %1767 = vmatpush1.msra.mxu0 %v709
    %1768 = vmatprep.subr.mxu0 %v714
    %1769 = vmatpush1.msra.mxu0 %v713
    %1770 = vmatprep.subr.mxu0 %v718
    %1771 = vmatpush1.msra.mxu0 %v717
    %1772 = vmatprep.subr.mxu0 %v722
    %1773 = vmatpush1.msra.mxu0 %v721
    %1774 = vmatprep.subr.mxu0 %v726
    %1775 = vmatpush1.msra.mxu0 %v725
    %1776 = vmatprep.subr.mxu0 0.0
    %1777 = vmatpush1.msra.mxu0 0.0
    %1778 = vmatprep.subr.mxu0 0.0
    %1779 = vmatpush1.msra.mxu0 0.0
    %1780 = vmatprep.subr.mxu0 0.0
    %1781 = vmatpush1.msra.mxu0 0.0
    %1782 = vmatprep.subr.mxu0 0.0
    %1783 = vmatpush1.msra.mxu0 0.0
    %1784 = vmatprep.subr.mxu0 0.0
    %1785 = vmatpush1.msra.mxu0 0.0
    %1786 = vmatprep.subr.mxu0 0.0
    %1787 = vmatpush1.msra.mxu0 0.0
    %1788 = vmatprep.subr.mxu0 0.0
    %1789 = vmatpush1.msra.mxu0 0.0
    %1790 = vmatprep.subr.mxu0 0.0
    %1791 = vmatpush1.msra.mxu0 0.0
    %1792 = vmatprep.subr.mxu0 0.0
    %1793 = vmatpush1.msra.mxu0 0.0
    %1794 = vmatprep.subr.mxu0 0.0
    %1795 = vmatpush1.msra.mxu0 0.0
    %1796 = vmatprep.subr.mxu0 0.0
    %1797 = vmatpush1.msra.mxu0 0.0
    %1798 = vmatprep.subr.mxu0 0.0
    %1799 = vmatpush1.msra.mxu0 0.0
    %1800 = vmatprep.subr.mxu0 0.0
    %1801 = vmatpush1.msra.mxu0 0.0
    %1802 = vmatprep.subr.mxu0 0.0
    %1803 = vmatpush1.msra.mxu0 0.0
    %1804 = vmatprep.subr.mxu0 0.0
    %1805 = vmatpush1.msra.mxu0 0.0
    %1806 = vmatprep.subr.mxu0 0.0
    %1807 = vmatpush1.msra.mxu0 0.0
    %1808 = vmatprep.mubr.f32.mxu0 0.0
    %1809 = vmatmul.mubr.f32.gmra.mrb[0].mxu0 %v1672
    %v1810 = vpop.f32.mrb[0].mxu0
    %v1811 = vadd.f32 %v1498, %v1810
    %v1812 = vpop.f32.mrb[0].mxu0
    %v1813 = vadd.f32 %v1500, %v1812
    %1814 = vdwg.mxu0
    %v1815 = vmul.f32 %v1740, 0.5
    %v1816 = vmul.f32 %v1742, 0.5
    %v1817 = vmul.f32 %v1811, 0.5
    %v1818 = vtanh.pop %v1815
    %v1819 = vtanh.pop %v1816
    %v1820 = vtanh.pop %v1817
    %v1821 = vmul.f32 %v1818, 0.5
    %v1822 = vmul.f32 %v1819, 0.5
    %v1823 = vmul.f32 %v1820, 0.5
    %v1824 = vadd.f32 %v1821, 0.5
    %v1825 = vadd.f32 %v1822, 0.5
    %v1826 = vadd.f32 %v1823, 0.5
    %v1827 = vtanh.pop %v1813
    %v1828 = vmul.f32 %v1825, %v1357
    %v1829 = vmul.f32 %v1824, %v1827
    %v1830 = vadd.f32 %v1828, %v1829
    %v1831 = vtanh.pop %v1830
    %v1832 = vmul.f32 %v1826, %v1831
    %1833 = vmatprep.subr.mxu0 %v223
    %1834 = vmatpush1.msra.mxu0 %v222
    %1835 = vmatprep.subr.mxu0 %v227
    %1836 = vmatpush1.msra.mxu0 %v226
    %1837 = vmatprep.subr.mxu0 %v231
    %1838 = vmatpush1.msra.mxu0 %v230
    %1839 = vmatprep.subr.mxu0 %v235
    %1840 = vmatpush1.msra.mxu0 %v234
    %1841 = vmatprep.subr.mxu0 %v239
    %1842 = vmatpush1.msra.mxu0 %v238
    %1843 = vmatprep.subr.mxu0 %v243
    %1844 = vmatpush1.msra.mxu0 %v242
    %1845 = vmatprep.subr.mxu0 %v247
    %1846 = vmatpush1.msra.mxu0 %v246
    %1847 = vmatprep.subr.mxu0 %v251
    %1848 = vmatpush1.msra.mxu0 %v250
    %1849 = vmatprep.subr.mxu0 %v255
    %1850 = vmatpush1.msra.mxu0 %v254
    %1851 = vmatprep.subr.mxu0 %v259
    %1852 = vmatpush1.msra.mxu0 %v258
    %1853 = vmatprep.subr.mxu0 %v263
    %1854 = vmatpush1.msra.mxu0 %v262
    %1855 = vmatprep.subr.mxu0 %v267
    %1856 = vmatpush1.msra.mxu0 %v266
    %1857 = vmatprep.subr.mxu0 %v271
    %1858 = vmatpush1.msra.mxu0 %v270
    %1859 = vmatprep.subr.mxu0 %v275
    %1860 = vmatpush1.msra.mxu0 %v274
    %1861 = vmatprep.subr.mxu0 %v279
    %1862 = vmatpush1.msra.mxu0 %v278
    %1863 = vmatprep.subr.mxu0 %v283
    %1864 = vmatpush1.msra.mxu0 %v282
    %1865 = vmatprep.subr.mxu0 0.0
    %1866 = vmatpush1.msra.mxu0 0.0
    %1867 = vmatprep.subr.mxu0 0.0
    %1868 = vmatpush1.msra.mxu0 0.0
    %1869 = vmatprep.subr.mxu0 0.0
    %1870 = vmatpush1.msra.mxu0 0.0
    %1871 = vmatprep.subr.mxu0 0.0
    %1872 = vmatpush1.msra.mxu0 0.0
    %1873 = vmatprep.subr.mxu0 0.0
    %1874 = vmatpush1.msra.mxu0 0.0
    %1875 = vmatprep.subr.mxu0 0.0
    %1876 = vmatpush1.msra.mxu0 0.0
    %1877 = vmatprep.subr.mxu0 0.0
    %1878 = vmatpush1.msra.mxu0 0.0
    %1879 = vmatprep.subr.mxu0 0.0
    %1880 = vmatpush1.msra.mxu0 0.0
    %1881 = vmatprep.subr.mxu0 0.0
    %1882 = vmatpush1.msra.mxu0 0.0
    %1883 = vmatprep.subr.mxu0 0.0
    %1884 = vmatpush1.msra.mxu0 0.0
    %1885 = vmatprep.subr.mxu0 0.0
    %1886 = vmatpush1.msra.mxu0 0.0
    %1887 = vmatprep.subr.mxu0 0.0
    %1888 = vmatpush1.msra.mxu0 0.0
    %1889 = vmatprep.subr.mxu0 0.0
    %1890 = vmatpush1.msra.mxu0 0.0
    %1891 = vmatprep.subr.mxu0 0.0
    %1892 = vmatpush1.msra.mxu0 0.0
    %1893 = vmatprep.subr.mxu0 0.0
    %1894 = vmatpush1.msra.mxu0 0.0
    %1895 = vmatprep.subr.mxu0 0.0
    %1896 = vmatpush1.msra.mxu0 0.0
    %1897 = vmatprep.mubr.f32.mxu0 0.0
    %1898 = vmatmul.mubr.f32.gmra.mrb[0].mxu0 %v1832
    %v1899 = vpop.f32.mrb[0].mxu0
    %v1900 = vadd.f32 %v205, %v1899
    %v1901 = vpop.f32.mrb[0].mxu0
    %v1902 = vadd.f32 %v209, %v1901
    %1903 = vdwg.mxu0
    %1904 = vmatprep.subr.mxu0 %v225
    %1905 = vmatpush1.msra.mxu0 %v224
    %1906 = vmatprep.subr.mxu0 %v229
    %1907 = vmatpush1.msra.mxu0 %v228
    %1908 = vmatprep.subr.mxu0 %v233
    %1909 = vmatpush1.msra.mxu0 %v232
    %1910 = vmatprep.subr.mxu0 %v237
    %1911 = vmatpush1.msra.mxu0 %v236
    %1912 = vmatprep.subr.mxu0 %v241
    %1913 = vmatpush1.msra.mxu0 %v240
    %1914 = vmatprep.subr.mxu0 %v245
    %1915 = vmatpush1.msra.mxu0 %v244
    %1916 = vmatprep.subr.mxu0 %v249
    %1917 = vmatpush1.msra.mxu0 %v248
    %1918 = vmatprep.subr.mxu0 %v253
    %1919 = vmatpush1.msra.mxu0 %v252
    %1920 = vmatprep.subr.mxu0 %v257
    %1921 = vmatpush1.msra.mxu0 %v256
    %1922 = vmatprep.subr.mxu0 %v261
    %1923 = vmatpush1.msra.mxu0 %v260
    %1924 = vmatprep.subr.mxu0 %v265
    %1925 = vmatpush1.msra.mxu0 %v264
    %1926 = vmatprep.subr.mxu0 %v269
    %1927 = vmatpush1.msra.mxu0 %v268
    %1928 = vmatprep.subr.mxu0 %v273
    %1929 = vmatpush1.msra.mxu0 %v272
    %1930 = vmatprep.subr.mxu0 %v277
    %1931 = vmatpush1.msra.mxu0 %v276
    %1932 = vmatprep.subr.mxu0 %v281
    %1933 = vmatpush1.msra.mxu0 %v280
    %1934 = vmatprep.subr.mxu0 %v285
    %1935 = vmatpush1.msra.mxu0 %v284
    %1936 = vmatprep.subr.mxu0 0.0
    %1937 = vmatpush1.msra.mxu0 0.0
    %1938 = vmatprep.subr.mxu0 0.0
    %1939 = vmatpush1.msra.mxu0 0.0
    %1940 = vmatprep.subr.mxu0 0.0
    %1941 = vmatpush1.msra.mxu0 0.0
    %1942 = vmatprep.subr.mxu0 0.0
    %1943 = vmatpush1.msra.mxu0 0.0
    %1944 = vmatprep.subr.mxu0 0.0
    %1945 = vmatpush1.msra.mxu0 0.0
    %1946 = vmatprep.subr.mxu0 0.0
    %1947 = vmatpush1.msra.mxu0 0.0
    %1948 = vmatprep.subr.mxu0 0.0
    %1949 = vmatpush1.msra.mxu0 0.0
    %1950 = vmatprep.subr.mxu0 0.0
    %1951 = vmatpush1.msra.mxu0 0.0
    %1952 = vmatprep.subr.mxu0 0.0
    %1953 = vmatpush1.msra.mxu0 0.0
    %1954 = vmatprep.subr.mxu0 0.0
    %1955 = vmatpush1.msra.mxu0 0.0
    %1956 = vmatprep.subr.mxu0 0.0
    %1957 = vmatpush1.msra.mxu0 0.0
    %1958 = vmatprep.subr.mxu0 0.0
    %1959 = vmatpush1.msra.mxu0 0.0
    %1960 = vmatprep.subr.mxu0 0.0
    %1961 = vmatpush1.msra.mxu0 0.0
    %1962 = vmatprep.subr.mxu0 0.0
    %1963 = vmatpush1.msra.mxu0 0.0
    %1964 = vmatprep.subr.mxu0 0.0
    %1965 = vmatpush1.msra.mxu0 0.0
    %1966 = vmatprep.subr.mxu0 0.0
    %1967 = vmatpush1.msra.mxu0 0.0
    %1968 = vmatprep.mubr.f32.mxu0 0.0
    %1969 = vmatmul.mubr.f32.gmra.mrb[0].mxu0 %v1832
    %v1970 = vpop.f32.mrb[0].mxu0
    %v1971 = vadd.f32 %v213, %v1970
    %v1972 = vpop.f32.mrb[0].mxu0
    %v1973 = vadd.f32 %v217, %v1972
    %1974 = vdwg.mxu0
    %s1975 = smul.u32 3, 4
    %s1976 = smul.addr %s1975, 8
    %s1977 = scalar_lea.vmem [#allocation2], %s1976
    %v1978 = vld [vmem:[%s1977] sm:$0xff]
    %v1979 = vld [vmem:[%s1977 + $0x8] sm:$0xff]
    %v1980 = vld [vmem:[%s1977 + $0x10] sm:$0xff]
    %v1981 = vld [vmem:[%s1977 + $0x18] sm:$0xff]
    %1982 = vmatprep.subr.mxu0 %v436
    %1983 = vmatpush1.msra.mxu0 %v435
    %1984 = vmatprep.subr.mxu0 %v440
    %1985 = vmatpush1.msra.mxu0 %v439
    %1986 = vmatprep.subr.mxu0 %v444
    %1987 = vmatpush1.msra.mxu0 %v443
    %1988 = vmatprep.subr.mxu0 %v448
    %1989 = vmatpush1.msra.mxu0 %v447
    %1990 = vmatprep.subr.mxu0 %v452
    %1991 = vmatpush1.msra.mxu0 %v451
    %1992 = vmatprep.subr.mxu0 %v456
    %1993 = vmatpush1.msra.mxu0 %v455
    %1994 = vmatprep.subr.mxu0 %v460
    %1995 = vmatpush1.msra.mxu0 %v459
    %1996 = vmatprep.subr.mxu0 %v464
    %1997 = vmatpush1.msra.mxu0 %v463
    %1998 = vmatprep.subr.mxu0 %v468
    %1999 = vmatpush1.msra.mxu0 %v467
    %2000 = vmatprep.subr.mxu0 %v472
    %2001 = vmatpush1.msra.mxu0 %v471
    %2002 = vmatprep.subr.mxu0 %v476
    %2003 = vmatpush1.msra.mxu0 %v475
    %2004 = vmatprep.subr.mxu0 %v480
    %2005 = vmatpush1.msra.mxu0 %v479
    %2006 = vmatprep.subr.mxu0 %v484
    %2007 = vmatpush1.msra.mxu0 %v483
    %2008 = vmatprep.subr.mxu0 %v488
    %2009 = vmatpush1.msra.mxu0 %v487
    %2010 = vmatprep.subr.mxu0 %v492
    %2011 = vmatpush1.msra.mxu0 %v491
    %2012 = vmatprep.subr.mxu0 %v496
    %2013 = vmatpush1.msra.mxu0 %v495
    %2014 = vmatprep.subr.mxu0 0.0
    %2015 = vmatpush1.msra.mxu0 0.0
    %2016 = vmatprep.subr.mxu0 0.0
    %2017 = vmatpush1.msra.mxu0 0.0
    %2018 = vmatprep.subr.mxu0 0.0
    %2019 = vmatpush1.msra.mxu0 0.0
    %2020 = vmatprep.subr.mxu0 0.0
    %2021 = vmatpush1.msra.mxu0 0.0
    %2022 = vmatprep.subr.mxu0 0.0
    %2023 = vmatpush1.msra.mxu0 0.0
    %2024 = vmatprep.subr.mxu0 0.0
    %2025 = vmatpush1.msra.mxu0 0.0
    %2026 = vmatprep.subr.mxu0 0.0
    %2027 = vmatpush1.msra.mxu0 0.0
    %2028 = vmatprep.subr.mxu0 0.0
    %2029 = vmatpush1.msra.mxu0 0.0
    %2030 = vmatprep.subr.mxu0 0.0
    %2031 = vmatpush1.msra.mxu0 0.0
    %2032 = vmatprep.subr.mxu0 0.0
    %2033 = vmatpush1.msra.mxu0 0.0
    %2034 = vmatprep.subr.mxu0 0.0
    %2035 = vmatpush1.msra.mxu0 0.0
    %2036 = vmatprep.subr.mxu0 0.0
    %2037 = vmatpush1.msra.mxu0 0.0
    %2038 = vmatprep.subr.mxu0 0.0
    %2039 = vmatpush1.msra.mxu0 0.0
    %2040 = vmatprep.subr.mxu0 0.0
    %2041 = vmatpush1.msra.mxu0 0.0
    %2042 = vmatprep.subr.mxu0 0.0
    %2043 = vmatpush1.msra.mxu0 0.0
    %2044 = vmatprep.subr.mxu0 0.0
    %2045 = vmatpush1.msra.mxu0 0.0
    %2046 = vmatprep.mubr.f32.mxu0 0.0
    %2047 = vmatmul.mubr.f32.gmra.mrb[0].mxu0 %v1672
    %v2048 = vpop.f32.mrb[0].mxu0
    %v2049 = vadd.f32 0.0, %v2048
    %v2050 = vpop.f32.mrb[0].mxu0
    %v2051 = vadd.f32 0.0, %v2050
    %2052 = vdwg.mxu0
    %2053 = vmatprep.subr.mxu0 %v438
    %2054 = vmatpush1.msra.mxu0 %v437
    %2055 = vmatprep.subr.mxu0 %v442
    %2056 = vmatpush1.msra.mxu0 %v441
    %2057 = vmatprep.subr.mxu0 %v446
    %2058 = vmatpush1.msra.mxu0 %v445
    %2059 = vmatprep.subr.mxu0 %v450
    %2060 = vmatpush1.msra.mxu0 %v449
    %2061 = vmatprep.subr.mxu0 %v454
    %2062 = vmatpush1.msra.mxu0 %v453
    %2063 = vmatprep.subr.mxu0 %v458
    %2064 = vmatpush1.msra.mxu0 %v457
    %2065 = vmatprep.subr.mxu0 %v462
    %2066 = vmatpush1.msra.mxu0 %v461
    %2067 = vmatprep.subr.mxu0 %v466
    %2068 = vmatpush1.msra.mxu0 %v465
    %2069 = vmatprep.subr.mxu0 %v470
    %2070 = vmatpush1.msra.mxu0 %v469
    %2071 = vmatprep.subr.mxu0 %v474
    %2072 = vmatpush1.msra.mxu0 %v473
    %2073 = vmatprep.subr.mxu0 %v478
    %2074 = vmatpush1.msra.mxu0 %v477
    %2075 = vmatprep.subr.mxu0 %v482
    %2076 = vmatpush1.msra.mxu0 %v481
    %2077 = vmatprep.subr.mxu0 %v486
    %2078 = vmatpush1.msra.mxu0 %v485
    %2079 = vmatprep.subr.mxu0 %v490
    %2080 = vmatpush1.msra.mxu0 %v489
    %2081 = vmatprep.subr.mxu0 %v494
    %2082 = vmatpush1.msra.mxu0 %v493
    %2083 = vmatprep.subr.mxu0 %v498
    %2084 = vmatpush1.msra.mxu0 %v497
    %2085 = vmatprep.subr.mxu0 0.0
    %2086 = vmatpush1.msra.mxu0 0.0
    %2087 = vmatprep.subr.mxu0 0.0
    %2088 = vmatpush1.msra.mxu0 0.0
    %2089 = vmatprep.subr.mxu0 0.0
    %2090 = vmatpush1.msra.mxu0 0.0
    %2091 = vmatprep.subr.mxu0 0.0
    %2092 = vmatpush1.msra.mxu0 0.0
    %2093 = vmatprep.subr.mxu0 0.0
    %2094 = vmatpush1.msra.mxu0 0.0
    %2095 = vmatprep.subr.mxu0 0.0
    %2096 = vmatpush1.msra.mxu0 0.0
    %2097 = vmatprep.subr.mxu0 0.0
    %2098 = vmatpush1.msra.mxu0 0.0
    %2099 = vmatprep.subr.mxu0 0.0
    %2100 = vmatpush1.msra.mxu0 0.0
    %2101 = vmatprep.subr.mxu0 0.0
    %2102 = vmatpush1.msra.mxu0 0.0
    %2103 = vmatprep.subr.mxu0 0.0
    %2104 = vmatpush1.msra.mxu0 0.0
    %2105 = vmatprep.subr.mxu0 0.0
    %2106 = vmatpush1.msra.mxu0 0.0
    %2107 = vmatprep.subr.mxu0 0.0
    %2108 = vmatpush1.msra.mxu0 0.0
    %2109 = vmatprep.subr.mxu0 0.0
    %2110 = vmatpush1.msra.mxu0 0.0
    %2111 = vmatprep.subr.mxu0 0.0
    %2112 = vmatpush1.msra.mxu0 0.0
    %2113 = vmatprep.subr.mxu0 0.0
    %2114 = vmatpush1.msra.mxu0 0.0
    %2115 = vmatprep.subr.mxu0 0.0
    %2116 = vmatpush1.msra.mxu0 0.0
    %2117 = vmatprep.mubr.f32.mxu0 0.0
    %2118 = vmatmul.mubr.f32.gmra.mrb[0].mxu0 %v1672
    %v2119 = vpop.f32.mrb[0].mxu0
    %v2120 = vadd.f32 0.0, %v2119
    %v2121 = vpop.f32.mrb[0].mxu0
    %v2122 = vadd.f32 0.0, %v2121
    %2123 = vdwg.mxu0
    %v2124 = vadd.f32 %v1978, %v2049
    %v2125 = vadd.f32 %v1979, %v2051
    %v2126 = vadd.f32 %v1980, %v2120
    %v2127 = vadd.f32 %v1981, %v2122
    %v2128 = vmul.f32 %v2124, 0.5
    %v2129 = vmul.f32 %v2125, 0.5
    %v2130 = vmul.f32 %v2126, 0.5
    %v2131 = vtanh.pop %v2128
    %v2132 = vtanh.pop %v2129
    %v2133 = vtanh.pop %v2130
    %v2134 = vmul.f32 %v2131, 0.5
    %v2135 = vmul.f32 %v2132, 0.5
    %v2136 = vmul.f32 %v2133, 0.5
    %v2137 = vadd.f32 %v2134, 0.5
    %v2138 = vadd.f32 %v2135, 0.5
    %v2139 = vadd.f32 %v2136, 0.5
    %v2140 = vtanh.pop %v2127
    %v2141 = vmul.f32 %v2138, %v1670
    %v2142 = vmul.f32 %v2137, %v2140
    %v2143 = vadd.f32 %v2141, %v2142
    %v2144 = vtanh.pop %v2143
    %v2145 = vmul.f32 %v2139, %v2144
    %2146 = vmatprep.subr.mxu0 %v664
    %2147 = vmatpush1.msra.mxu0 %v663
    %2148 = vmatprep.subr.mxu0 %v668
    %2149 = vmatpush1.msra.mxu0 %v667
    %2150 = vmatprep.subr.mxu0 %v672
    %2151 = vmatpush1.msra.mxu0 %v671
    %2152 = vmatprep.subr.mxu0 %v676
    %2153 = vmatpush1.msra.mxu0 %v675
    %2154 = vmatprep.subr.mxu0 %v680
    %2155 = vmatpush1.msra.mxu0 %v679
    %2156 = vmatprep.subr.mxu0 %v684
    %2157 = vmatpush1.msra.mxu0 %v683
    %2158 = vmatprep.subr.mxu0 %v688
    %2159 = vmatpush1.msra.mxu0 %v687
    %2160 = vmatprep.subr.mxu0 %v692
    %2161 = vmatpush1.msra.mxu0 %v691
    %2162 = vmatprep.subr.mxu0 %v696
    %2163 = vmatpush1.msra.mxu0 %v695
    %2164 = vmatprep.subr.mxu0 %v700
    %2165 = vmatpush1.msra.mxu0 %v699
    %2166 = vmatprep.subr.mxu0 %v704
    %2167 = vmatpush1.msra.mxu0 %v703
    %2168 = vmatprep.subr.mxu0 %v708
    %2169 = vmatpush1.msra.mxu0 %v707
    %2170 = vmatprep.subr.mxu0 %v712
    %2171 = vmatpush1.msra.mxu0 %v711
    %2172 = vmatprep.subr.mxu0 %v716
    %2173 = vmatpush1.msra.mxu0 %v715
    %2174 = vmatprep.subr.mxu0 %v720
    %2175 = vmatpush1.msra.mxu0 %v719
    %2176 = vmatprep.subr.mxu0 %v724
    %2177 = vmatpush1.msra.mxu0 %v723
    %2178 = vmatprep.subr.mxu0 0.0
    %2179 = vmatpush1.msra.mxu0 0.0
    %2180 = vmatprep.subr.mxu0 0.0
    %2181 = vmatpush1.msra.mxu0 0.0
    %2182 = vmatprep.subr.mxu0 0.0
    %2183 = vmatpush1.msra.mxu0 0.0
    %2184 = vmatprep.subr.mxu0 0.0
    %2185 = vmatpush1.msra.mxu0 0.0
    %2186 = vmatprep.subr.mxu0 0.0
    %2187 = vmatpush1.msra.mxu0 0.0
    %2188 = vmatprep.subr.mxu0 0.0
    %2189 = vmatpush1.msra.mxu0 0.0
    %2190 = vmatprep.subr.mxu0 0.0
    %2191 = vmatpush1.msra.mxu0 0.0
    %2192 = vmatprep.subr.mxu0 0.0
    %2193 = vmatpush1.msra.mxu0 0.0
    %2194 = vmatprep.subr.mxu0 0.0
    %2195 = vmatpush1.msra.mxu0 0.0
    %2196 = vmatprep.subr.mxu0 0.0
    %2197 = vmatpush1.msra.mxu0 0.0
    %2198 = vmatprep.subr.mxu0 0.0
    %2199 = vmatpush1.msra.mxu0 0.0
    %2200 = vmatprep.subr.mxu0 0.0
    %2201 = vmatpush1.msra.mxu0 0.0
    %2202 = vmatprep.subr.mxu0 0.0
    %2203 = vmatpush1.msra.mxu0 0.0
    %2204 = vmatprep.subr.mxu0 0.0
    %2205 = vmatpush1.msra.mxu0 0.0
    %2206 = vmatprep.subr.mxu0 0.0
    %2207 = vmatpush1.msra.mxu0 0.0
    %2208 = vmatprep.subr.mxu0 0.0
    %2209 = vmatpush1.msra.mxu0 0.0
    %2210 = vmatprep.mubr.f32.mxu0 0.0
    %2211 = vmatmul.mubr.f32.gmra.mrb[0].mxu0 %v2145
    %v2212 = vpop.f32.mrb[0].mxu0
    %v2213 = vadd.f32 %v1900, %v2212
    %v2214 = vpop.f32.mrb[0].mxu0
    %v2215 = vadd.f32 %v1902, %v2214
    %2216 = vdwg.mxu0
    %2217 = vmatprep.subr.mxu0 %v666
    %2218 = vmatpush1.msra.mxu0 %v665
    %2219 = vmatprep.subr.mxu0 %v670
    %2220 = vmatpush1.msra.mxu0 %v669
    %2221 = vmatprep.subr.mxu0 %v674
    %2222 = vmatpush1.msra.mxu0 %v673
    %2223 = vmatprep.subr.mxu0 %v678
    %2224 = vmatpush1.msra.mxu0 %v677
    %2225 = vmatprep.subr.mxu0 %v682
    %2226 = vmatpush1.msra.mxu0 %v681
    %2227 = vmatprep.subr.mxu0 %v686
    %2228 = vmatpush1.msra.mxu0 %v685
    %2229 = vmatprep.subr.mxu0 %v690
    %2230 = vmatpush1.msra.mxu0 %v689
    %2231 = vmatprep.subr.mxu0 %v694
    %2232 = vmatpush1.msra.mxu0 %v693
    %2233 = vmatprep.subr.mxu0 %v698
    %2234 = vmatpush1.msra.mxu0 %v697
    %2235 = vmatprep.subr.mxu0 %v702
    %2236 = vmatpush1.msra.mxu0 %v701
    %2237 = vmatprep.subr.mxu0 %v706
    %2238 = vmatpush1.msra.mxu0 %v705
    %2239 = vmatprep.subr.mxu0 %v710
    %2240 = vmatpush1.msra.mxu0 %v709
    %2241 = vmatprep.subr.mxu0 %v714
    %2242 = vmatpush1.msra.mxu0 %v713
    %2243 = vmatprep.subr.mxu0 %v718
    %2244 = vmatpush1.msra.mxu0 %v717
    %2245 = vmatprep.subr.mxu0 %v722
    %2246 = vmatpush1.msra.mxu0 %v721
    %2247 = vmatprep.subr.mxu0 %v726
    %2248 = vmatpush1.msra.mxu0 %v725
    %2249 = vmatprep.subr.mxu0 0.0
    %2250 = vmatpush1.msra.mxu0 0.0
    %2251 = vmatprep.subr.mxu0 0.0
    %2252 = vmatpush1.msra.mxu0 0.0
    %2253 = vmatprep.subr.mxu0 0.0
    %2254 = vmatpush1.msra.mxu0 0.0
    %2255 = vmatprep.subr.mxu0 0.0
    %2256 = vmatpush1.msra.mxu0 0.0
    %2257 = vmatprep.subr.mxu0 0.0
    %2258 = vmatpush1.msra.mxu0 0.0
    %2259 = vmatprep.subr.mxu0 0.0
    %2260 = vmatpush1.msra.mxu0 0.0
    %2261 = vmatprep.subr.mxu0 0.0
    %2262 = vmatpush1.msra.mxu0 0.0
    %2263 = vmatprep.subr.mxu0 0.0
    %2264 = vmatpush1.msra.mxu0 0.0
    %2265 = vmatprep.subr.mxu0 0.0
    %2266 = vmatpush1.msra.mxu0 0.0
    %2267 = vmatprep.subr.mxu0 0.0
    %2268 = vmatpush1.msra.mxu0 0.0
    %2269 = vmatprep.subr.mxu0 0.0
    %2270 = vmatpush1.msra.mxu0 0.0
    %2271 = vmatprep.subr.mxu0 0.0
    %2272 = vmatpush1.msra.mxu0 0.0
    %2273 = vmatprep.subr.mxu0 0.0
    %2274 = vmatpush1.msra.mxu0 0.0
    %2275 = vmatprep.subr.mxu0 0.0
    %2276 = vmatpush1.msra.mxu0 0.0
    %2277 = vmatprep.subr.mxu0 0.0
    %2278 = vmatpush1.msra.mxu0 0.0
    %2279 = vmatprep.subr.mxu0 0.0
    %2280 = vmatpush1.msra.mxu0 0.0
    %2281 = vmatprep.mubr.f32.mxu0 0.0
    %2282 = vmatmul.mubr.f32.gmra.mrb[0].mxu0 %v2145
    %v2283 = vpop.f32.mrb[0].mxu0
    %v2284 = vadd.f32 %v1971, %v2283
    %v2285 = vpop.f32.mrb[0].mxu0
    %v2286 = vadd.f32 %v1973, %v2285
    %2287 = vdwg.mxu0
    %v2288 = vmul.f32 %v2213, 0.5
    %v2289 = vmul.f32 %v2215, 0.5
    %v2290 = vmul.f32 %v2284, 0.5
    %v2291 = vtanh.pop %v2288
    %v2292 = vtanh.pop %v2289
    %v2293 = vtanh.pop %v2290
    %v2294 = vmul.f32 %v2291, 0.5
    %v2295 = vmul.f32 %v2292, 0.5
    %v2296 = vmul.f32 %v2293, 0.5
    %v2297 = vadd.f32 %v2294, 0.5
    %v2298 = vadd.f32 %v2295, 0.5
    %v2299 = vadd.f32 %v2296, 0.5
    %v2300 = vtanh.pop %v2286
    %v2301 = vmul.f32 %v2298, %v1830
    %v2302 = vmul.f32 %v2297, %v2300
    %v2303 = vadd.f32 %v2301, %v2302
    %v2304 = vtanh.pop %v2303
    %v2305 = vmul.f32 %v2299, %v2304
    %2306 = vmatprep.subr.mxu0 %v223
    %2307 = vmatpush1.msra.mxu0 %v222
    %2308 = vmatprep.subr.mxu0 %v227
    %2309 = vmatpush1.msra.mxu0 %v226
    %2310 = vmatprep.subr.mxu0 %v231
    %2311 = vmatpush1.msra.mxu0 %v230
    %2312 = vmatprep.subr.mxu0 %v235
    %2313 = vmatpush1.msra.mxu0 %v234
    %2314 = vmatprep.subr.mxu0 %v239
    %2315 = vmatpush1.msra.mxu0 %v238
    %2316 = vmatprep.subr.mxu0 %v243
    %2317 = vmatpush1.msra.mxu0 %v242
    %2318 = vmatprep.subr.mxu0 %v247
    %2319 = vmatpush1.msra.mxu0 %v246
    %2320 = vmatprep.subr.mxu0 %v251
    %2321 = vmatpush1.msra.mxu0 %v250
    %2322 = vmatprep.subr.mxu0 %v255
    %2323 = vmatpush1.msra.mxu0 %v254
    %2324 = vmatprep.subr.mxu0 %v259
    %2325 = vmatpush1.msra.mxu0 %v258
    %2326 = vmatprep.subr.mxu0 %v263
    %2327 = vmatpush1.msra.mxu0 %v262
    %2328 = vmatprep.subr.mxu0 %v267
    %2329 = vmatpush1.msra.mxu0 %v266
    %2330 = vmatprep.subr.mxu0 %v271
    %2331 = vmatpush1.msra.mxu0 %v270
    %2332 = vmatprep.subr.mxu0 %v275
    %2333 = vmatpush1.msra.mxu0 %v274
    %2334 = vmatprep.subr.mxu0 %v279
    %2335 = vmatpush1.msra.mxu0 %v278
    %2336 = vmatprep.subr.mxu0 %v283
    %2337 = vmatpush1.msra.mxu0 %v282
    %2338 = vmatprep.subr.mxu0 0.0
    %2339 = vmatpush1.msra.mxu0 0.0
    %2340 = vmatprep.subr.mxu0 0.0
    %2341 = vmatpush1.msra.mxu0 0.0
    %2342 = vmatprep.subr.mxu0 0.0
    %2343 = vmatpush1.msra.mxu0 0.0
    %2344 = vmatprep.subr.mxu0 0.0
    %2345 = vmatpush1.msra.mxu0 0.0
    %2346 = vmatprep.subr.mxu0 0.0
    %2347 = vmatpush1.msra.mxu0 0.0
    %2348 = vmatprep.subr.mxu0 0.0
    %2349 = vmatpush1.msra.mxu0 0.0
    %2350 = vmatprep.subr.mxu0 0.0
    %2351 = vmatpush1.msra.mxu0 0.0
    %2352 = vmatprep.subr.mxu0 0.0
    %2353 = vmatpush1.msra.mxu0 0.0
    %2354 = vmatprep.subr.mxu0 0.0
    %2355 = vmatpush1.msra.mxu0 0.0
    %2356 = vmatprep.subr.mxu0 0.0
    %2357 = vmatpush1.msra.mxu0 0.0
    %2358 = vmatprep.subr.mxu0 0.0
    %2359 = vmatpush1.msra.mxu0 0.0
    %2360 = vmatprep.subr.mxu0 0.0
    %2361 = vmatpush1.msra.mxu0 0.0
    %2362 = vmatprep.subr.mxu0 0.0
    %2363 = vmatpush1.msra.mxu0 0.0
    %2364 = vmatprep.subr.mxu0 0.0
    %2365 = vmatpush1.msra.mxu0 0.0
    %2366 = vmatprep.subr.mxu0 0.0
    %2367 = vmatpush1.msra.mxu0 0.0
    %2368 = vmatprep.subr.mxu0 0.0
    %2369 = vmatpush1.msra.mxu0 0.0
    %2370 = vmatprep.mubr.f32.mxu0 0.0
    %2371 = vmatmul.mubr.f32.gmra.mrb[0].mxu0 %v2305
    %v2372 = vpop.f32.mrb[0].mxu0
    %v2373 = vadd.f32 %v205, %v2372
    %v2374 = vpop.f32.mrb[0].mxu0
    %v2375 = vadd.f32 %v209, %v2374
    %2376 = vdwg.mxu0
    %2377 = vmatprep.subr.mxu0 %v225
    %2378 = vmatpush1.msra.mxu0 %v224
    %2379 = vmatprep.subr.mxu0 %v229
    %2380 = vmatpush1.msra.mxu0 %v228
    %2381 = vmatprep.subr.mxu0 %v233
    %2382 = vmatpush1.msra.mxu0 %v232
    %2383 = vmatprep.subr.mxu0 %v237
    %2384 = vmatpush1.msra.mxu0 %v236
    %2385 = vmatprep.subr.mxu0 %v241
    %2386 = vmatpush1.msra.mxu0 %v240
    %2387 = vmatprep.subr.mxu0 %v245
    %2388 = vmatpush1.msra.mxu0 %v244
    %2389 = vmatprep.subr.mxu0 %v249
    %2390 = vmatpush1.msra.mxu0 %v248
    %2391 = vmatprep.subr.mxu0 %v253
    %2392 = vmatpush1.msra.mxu0 %v252
    %2393 = vmatprep.subr.mxu0 %v257
    %2394 = vmatpush1.msra.mxu0 %v256
    %2395 = vmatprep.subr.mxu0 %v261
    %2396 = vmatpush1.msra.mxu0 %v260
    %2397 = vmatprep.subr.mxu0 %v265
    %2398 = vmatpush1.msra.mxu0 %v264
    %2399 = vmatprep.subr.mxu0 %v269
    %2400 = vmatpush1.msra.mxu0 %v268
    %2401 = vmatprep.subr.mxu0 %v273
    %2402 = vmatpush1.msra.mxu0 %v272
    %2403 = vmatprep.subr.mxu0 %v277
    %2404 = vmatpush1.msra.mxu0 %v276
    %2405 = vmatprep.subr.mxu0 %v281
    %2406 = vmatpush1.msra.mxu0 %v280
    %2407 = vmatprep.subr.mxu0 %v285
    %2408 = vmatpush1.msra.mxu0 %v284
    %2409 = vmatprep.subr.mxu0 0.0
    %2410 = vmatpush1.msra.mxu0 0.0
    %2411 = vmatprep.subr.mxu0 0.0
    %2412 = vmatpush1.msra.mxu0 0.0
    %2413 = vmatprep.subr.mxu0 0.0
    %2414 = vmatpush1.msra.mxu0 0.0
    %2415 = vmatprep.subr.mxu0 0.0
    %2416 = vmatpush1.msra.mxu0 0.0
    %2417 = vmatprep.subr.mxu0 0.0
    %2418 = vmatpush1.msra.mxu0 0.0
    %2419 = vmatprep.subr.mxu0 0.0
    %2420 = vmatpush1.msra.mxu0 0.0
    %2421 = vmatprep.subr.mxu0 0.0
    %2422 = vmatpush1.msra.mxu0 0.0
    %2423 = vmatprep.subr.mxu0 0.0
    %2424 = vmatpush1.msra.mxu0 0.0
    %2425 = vmatprep.subr.mxu0 0.0
    %2426 = vmatpush1.msra.mxu0 0.0
    %2427 = vmatprep.subr.mxu0 0.0
    %2428 = vmatpush1.msra.mxu0 0.0
    %2429 = vmatprep.subr.mxu0 0.0
    %2430 = vmatpush1.msra.mxu0 0.0
    %2431 = vmatprep.subr.mxu0 0.0
    %2432 = vmatpush1.msra.mxu0 0.0
    %2433 = vmatprep.subr.mxu0 0.0
    %2434 = vmatpush1.msra.mxu0 0.0
    %2435 = vmatprep.subr.mxu0 0.0
    %2436 = vmatpush1.msra.mxu0 0.0
    %2437 = vmatprep.subr.mxu0 0.0
    %2438 = vmatpush1.msra.mxu0 0.0
    %2439 = vmatprep.subr.mxu0 0.0
    %2440 = vmatpush1.msra.mxu0 0.0
    %2441 = vmatprep.mubr.f32.mxu0 0.0
    %2442 = vmatmul.mubr.f32.gmra.mrb[0].mxu0 %v2305
    %v2443 = vpop.f32.mrb[0].mxu0
    %v2444 = vadd.f32 %v213, %v2443
    %v2445 = vpop.f32.mrb[0].mxu0
    %v2446 = vadd.f32 %v217, %v2445
    %2447 = vdwg.mxu0
    %s2448 = smul.u32 4, 4
    %s2449 = smul.addr %s2448, 8
    %s2450 = scalar_lea.vmem [#allocation2], %s2449
    %v2451 = vld [vmem:[%s2450] sm:$0xff]
    %v2452 = vld [vmem:[%s2450 + $0x8] sm:$0xff]
    %v2453 = vld [vmem:[%s2450 + $0x10] sm:$0xff]
    %v2454 = vld [vmem:[%s2450 + $0x18] sm:$0xff]
    %2455 = vmatprep.subr.mxu0 %v436
    %2456 = vmatpush1.msra.mxu0 %v435
    %2457 = vmatprep.subr.mxu0 %v440
    %2458 = vmatpush1.msra.mxu0 %v439
    %2459 = vmatprep.subr.mxu0 %v444
    %2460 = vmatpush1.msra.mxu0 %v443
    %2461 = vmatprep.subr.mxu0 %v448
    %2462 = vmatpush1.msra.mxu0 %v447
    %2463 = vmatprep.subr.mxu0 %v452
    %2464 = vmatpush1.msra.mxu0 %v451
    %2465 = vmatprep.subr.mxu0 %v456
    %2466 = vmatpush1.msra.mxu0 %v455
    %2467 = vmatprep.subr.mxu0 %v460
    %2468 = vmatpush1.msra.mxu0 %v459
    %2469 = vmatprep.subr.mxu0 %v464
    %2470 = vmatpush1.msra.mxu0 %v463
    %2471 = vmatprep.subr.mxu0 %v468
    %2472 = vmatpush1.msra.mxu0 %v467
    %2473 = vmatprep.subr.mxu0 %v472
    %2474 = vmatpush1.msra.mxu0 %v471
    %2475 = vmatprep.subr.mxu0 %v476
    %2476 = vmatpush1.msra.mxu0 %v475
    %2477 = vmatprep.subr.mxu0 %v480
    %2478 = vmatpush1.msra.mxu0 %v479
    %2479 = vmatprep.subr.mxu0 %v484
    %2480 = vmatpush1.msra.mxu0 %v483
    %2481 = vmatprep.subr.mxu0 %v488
    %2482 = vmatpush1.msra.mxu0 %v487
    %2483 = vmatprep.subr.mxu0 %v492
    %2484 = vmatpush1.msra.mxu0 %v491
    %2485 = vmatprep.subr.mxu0 %v496
    %2486 = vmatpush1.msra.mxu0 %v495
    %2487 = vmatprep.subr.mxu0 0.0
    %2488 = vmatpush1.msra.mxu0 0.0
    %2489 = vmatprep.subr.mxu0 0.0
    %2490 = vmatpush1.msra.mxu0 0.0
    %2491 = vmatprep.subr.mxu0 0.0
    %2492 = vmatpush1.msra.mxu0 0.0
    %2493 = vmatprep.subr.mxu0 0.0
    %2494 = vmatpush1.msra.mxu0 0.0
    %2495 = vmatprep.subr.mxu0 0.0
    %2496 = vmatpush1.msra.mxu0 0.0
    %2497 = vmatprep.subr.mxu0 0.0
    %2498 = vmatpush1.msra.mxu0 0.0
    %2499 = vmatprep.subr.mxu0 0.0
    %2500 = vmatpush1.msra.mxu0 0.0
    %2501 = vmatprep.subr.mxu0 0.0
    %2502 = vmatpush1.msra.mxu0 0.0
    %2503 = vmatprep.subr.mxu0 0.0
    %2504 = vmatpush1.msra.mxu0 0.0
    %2505 = vmatprep.subr.mxu0 0.0
    %2506 = vmatpush1.msra.mxu0 0.0
    %2507 = vmatprep.subr.mxu0 0.0
    %2508 = vmatpush1.msra.mxu0 0.0
    %2509 = vmatprep.subr.mxu0 0.0
    %2510 = vmatpush1.msra.mxu0 0.0
    %2511 = vmatprep.subr.mxu0 0.0
    %2512 = vmatpush1.msra.mxu0 0.0
    %2513 = vmatprep.subr.mxu0 0.0
    %2514 = vmatpush1.msra.mxu0 0.0
    %2515 = vmatprep.subr.mxu0 0.0
    %2516 = vmatpush1.msra.mxu0 0.0
    %2517 = vmatprep.subr.mxu0 0.0
    %2518 = vmatpush1.msra.mxu0 0.0
    %2519 = vmatprep.mubr.f32.mxu0 0.0
    %2520 = vmatmul.mubr.f32.gmra.mrb[0].mxu0 %v2145
    %v2521 = vpop.f32.mrb[0].mxu0
    %v2522 = vadd.f32 0.0, %v2521
    %v2523 = vpop.f32.mrb[0].mxu0
    %v2524 = vadd.f32 0.0, %v2523
    %2525 = vdwg.mxu0
    %2526 = vmatprep.subr.mxu0 %v438
    %2527 = vmatpush1.msra.mxu0 %v437
    %2528 = vmatprep.subr.mxu0 %v442
    %2529 = vmatpush1.msra.mxu0 %v441
    %2530 = vmatprep.subr.mxu0 %v446
    %2531 = vmatpush1.msra.mxu0 %v445
    %2532 = vmatprep.subr.mxu0 %v450
    %2533 = vmatpush1.msra.mxu0 %v449
    %2534 = vmatprep.subr.mxu0 %v454
    %2535 = vmatpush1.msra.mxu0 %v453
    %2536 = vmatprep.subr.mxu0 %v458
    %2537 = vmatpush1.msra.mxu0 %v457
    %2538 = vmatprep.subr.mxu0 %v462
    %2539 = vmatpush1.msra.mxu0 %v461
    %2540 = vmatprep.subr.mxu0 %v466
    %2541 = vmatpush1.msra.mxu0 %v465
    %2542 = vmatprep.subr.mxu0 %v470
    %2543 = vmatpush1.msra.mxu0 %v469
    %2544 = vmatprep.subr.mxu0 %v474
    %2545 = vmatpush1.msra.mxu0 %v473
    %2546 = vmatprep.subr.mxu0 %v478
    %2547 = vmatpush1.msra.mxu0 %v477
    %2548 = vmatprep.subr.mxu0 %v482
    %2549 = vmatpush1.msra.mxu0 %v481
    %2550 = vmatprep.subr.mxu0 %v486
    %2551 = vmatpush1.msra.mxu0 %v485
    %2552 = vmatprep.subr.mxu0 %v490
    %2553 = vmatpush1.msra.mxu0 %v489
    %2554 = vmatprep.subr.mxu0 %v494
    %2555 = vmatpush1.msra.mxu0 %v493
    %2556 = vmatprep.subr.mxu0 %v498
    %2557 = vmatpush1.msra.mxu0 %v497
    %2558 = vmatprep.subr.mxu0 0.0
    %2559 = vmatpush1.msra.mxu0 0.0
    %2560 = vmatprep.subr.mxu0 0.0
    %2561 = vmatpush1.msra.mxu0 0.0
    %2562 = vmatprep.subr.mxu0 0.0
    %2563 = vmatpush1.msra.mxu0 0.0
    %2564 = vmatprep.subr.mxu0 0.0
    %2565 = vmatpush1.msra.mxu0 0.0
    %2566 = vmatprep.subr.mxu0 0.0
    %2567 = vmatpush1.msra.mxu0 0.0
    %2568 = vmatprep.subr.mxu0 0.0
    %2569 = vmatpush1.msra.mxu0 0.0
    %2570 = vmatprep.subr.mxu0 0.0
    %2571 = vmatpush1.msra.mxu0 0.0
    %2572 = vmatprep.subr.mxu0 0.0
    %2573 = vmatpush1.msra.mxu0 0.0
    %2574 = vmatprep.subr.mxu0 0.0
    %2575 = vmatpush1.msra.mxu0 0.0
    %2576 = vmatprep.subr.mxu0 0.0
    %2577 = vmatpush1.msra.mxu0 0.0
    %2578 = vmatprep.subr.mxu0 0.0
    %2579 = vmatpush1.msra.mxu0 0.0
    %2580 = vmatprep.subr.mxu0 0.0
    %2581 = vmatpush1.msra.mxu0 0.0
    %2582 = vmatprep.subr.mxu0 0.0
    %2583 = vmatpush1.msra.mxu0 0.0
    %2584 = vmatprep.subr.mxu0 0.0
    %2585 = vmatpush1.msra.mxu0 0.0
    %2586 = vmatprep.subr.mxu0 0.0
    %2587 = vmatpush1.msra.mxu0 0.0
    %2588 = vmatprep.subr.mxu0 0.0
    %2589 = vmatpush1.msra.mxu0 0.0
    %2590 = vmatprep.mubr.f32.mxu0 0.0
    %2591 = vmatmul.mubr.f32.gmra.mrb[0].mxu0 %v2145
    %v2592 = vpop.f32.mrb[0].mxu0
    %v2593 = vadd.f32 0.0, %v2592
    %v2594 = vpop.f32.mrb[0].mxu0
    %v2595 = vadd.f32 0.0, %v2594
    %2596 = vdwg.mxu0
    %v2597 = vadd.f32 %v2451, %v2522
    %v2598 = vadd.f32 %v2452, %v2524
    %v2599 = vadd.f32 %v2453, %v2593
    %v2600 = vadd.f32 %v2454, %v2595
    %v2601 = vmul.f32 %v2597, 0.5
    %v2602 = vmul.f32 %v2598, 0.5
    %v2603 = vmul.f32 %v2599, 0.5
    %v2604 = vtanh.pop %v2601
    %v2605 = vtanh.pop %v2602
    %v2606 = vtanh.pop %v2603
    %v2607 = vmul.f32 %v2604, 0.5
    %v2608 = vmul.f32 %v2605, 0.5
    %v2609 = vmul.f32 %v2606, 0.5
    %v2610 = vadd.f32 %v2607, 0.5
    %v2611 = vadd.f32 %v2608, 0.5
    %v2612 = vadd.f32 %v2609, 0.5
    %v2613 = vtanh.pop %v2600
    %v2614 = vmul.f32 %v2611, %v2143
    %v2615 = vmul.f32 %v2610, %v2613
    %v2616 = vadd.f32 %v2614, %v2615
    %v2617 = vtanh.pop %v2616
    %v2618 = vmul.f32 %v2612, %v2617
    %2619 = vmatprep.subr.mxu0 %v664
    %2620 = vmatpush1.msra.mxu0 %v663
    %2621 = vmatprep.subr.mxu0 %v668
    %2622 = vmatpush1.msra.mxu0 %v667
    %2623 = vmatprep.subr.mxu0 %v672
    %2624 = vmatpush1.msra.mxu0 %v671
    %2625 = vmatprep.subr.mxu0 %v676
    %2626 = vmatpush1.msra.mxu0 %v675
    %2627 = vmatprep.subr.mxu0 %v680
    %2628 = vmatpush1.msra.mxu0 %v679
    %2629 = vmatprep.subr.mxu0 %v684
    %2630 = vmatpush1.msra.mxu0 %v683
    %2631 = vmatprep.subr.mxu0 %v688
    %2632 = vmatpush1.msra.mxu0 %v687
    %2633 = vmatprep.subr.mxu0 %v692
    %2634 = vmatpush1.msra.mxu0 %v691
    %2635 = vmatprep.subr.mxu0 %v696
    %2636 = vmatpush1.msra.mxu0 %v695
    %2637 = vmatprep.subr.mxu0 %v700
    %2638 = vmatpush1.msra.mxu0 %v699
    %2639 = vmatprep.subr.mxu0 %v704
    %2640 = vmatpush1.msra.mxu0 %v703
    %2641 = vmatprep.subr.mxu0 %v708
    %2642 = vmatpush1.msra.mxu0 %v707
    %2643 = vmatprep.subr.mxu0 %v712
    %2644 = vmatpush1.msra.mxu0 %v711
    %2645 = vmatprep.subr.mxu0 %v716
    %2646 = vmatpush1.msra.mxu0 %v715
    %2647 = vmatprep.subr.mxu0 %v720
    %2648 = vmatpush1.msra.mxu0 %v719
    %2649 = vmatprep.subr.mxu0 %v724
    %2650 = vmatpush1.msra.mxu0 %v723
    %2651 = vmatprep.subr.mxu0 0.0
    %2652 = vmatpush1.msra.mxu0 0.0
    %2653 = vmatprep.subr.mxu0 0.0
    %2654 = vmatpush1.msra.mxu0 0.0
    %2655 = vmatprep.subr.mxu0 0.0
    %2656 = vmatpush1.msra.mxu0 0.0
    %2657 = vmatprep.subr.mxu0 0.0
    %2658 = vmatpush1.msra.mxu0 0.0
    %2659 = vmatprep.subr.mxu0 0.0
    %2660 = vmatpush1.msra.mxu0 0.0
    %2661 = vmatprep.subr.mxu0 0.0
    %2662 = vmatpush1.msra.mxu0 0.0
    %2663 = vmatprep.subr.mxu0 0.0
    %2664 = vmatpush1.msra.mxu0 0.0
    %2665 = vmatprep.subr.mxu0 0.0
    %2666 = vmatpush1.msra.mxu0 0.0
    %2667 = vmatprep.subr.mxu0 0.0
    %2668 = vmatpush1.msra.mxu0 0.0
    %2669 = vmatprep.subr.mxu0 0.0
    %2670 = vmatpush1.msra.mxu0 0.0
    %2671 = vmatprep.subr.mxu0 0.0
    %2672 = vmatpush1.msra.mxu0 0.0
    %2673 = vmatprep.subr.mxu0 0.0
    %2674 = vmatpush1.msra.mxu0 0.0
    %2675 = vmatprep.subr.mxu0 0.0
    %2676 = vmatpush1.msra.mxu0 0.0
    %2677 = vmatprep.subr.mxu0 0.0
    %2678 = vmatpush1.msra.mxu0 0.0
    %2679 = vmatprep.subr.mxu0 0.0
    %2680 = vmatpush1.msra.mxu0 0.0
    %2681 = vmatprep.subr.mxu0 0.0
    %2682 = vmatpush1.msra.mxu0 0.0
    %2683 = vmatprep.mubr.f32.mxu0 0.0
    %2684 = vmatmul.mubr.f32.gmra.mrb[0].mxu0 %v2618
    %v2685 = vpop.f32.mrb[0].mxu0
    %v2686 = vadd.f32 %v2373, %v2685
    %v2687 = vpop.f32.mrb[0].mxu0
    %v2688 = vadd.f32 %v2375, %v2687
    %2689 = vdwg.mxu0
    %2690 = vmatprep.subr.mxu0 %v666
    %2691 = vmatpush1.msra.mxu0 %v665
    %2692 = vmatprep.subr.mxu0 %v670
    %2693 = vmatpush1.msra.mxu0 %v669
    %2694 = vmatprep.subr.mxu0 %v674
    %2695 = vmatpush1.msra.mxu0 %v673
    %2696 = vmatprep.subr.mxu0 %v678
    %2697 = vmatpush1.msra.mxu0 %v677
    %2698 = vmatprep.subr.mxu0 %v682
    %2699 = vmatpush1.msra.mxu0 %v681
    %2700 = vmatprep.subr.mxu0 %v686
    %2701 = vmatpush1.msra.mxu0 %v685
    %2702 = vmatprep.subr.mxu0 %v690
    %2703 = vmatpush1.msra.mxu0 %v689
    %2704 = vmatprep.subr.mxu0 %v694
    %2705 = vmatpush1.msra.mxu0 %v693
    %2706 = vmatprep.subr.mxu0 %v698
    %2707 = vmatpush1.msra.mxu0 %v697
    %2708 = vmatprep.subr.mxu0 %v702
    %2709 = vmatpush1.msra.mxu0 %v701
    %2710 = vmatprep.subr.mxu0 %v706
    %2711 = vmatpush1.msra.mxu0 %v705
    %2712 = vmatprep.subr.mxu0 %v710
    %2713 = vmatpush1.msra.mxu0 %v709
    %2714 = vmatprep.subr.mxu0 %v714
    %2715 = vmatpush1.msra.mxu0 %v713
    %2716 = vmatprep.subr.mxu0 %v718
    %2717 = vmatpush1.msra.mxu0 %v717
    %2718 = vmatprep.subr.mxu0 %v722
    %2719 = vmatpush1.msra.mxu0 %v721
    %2720 = vmatprep.subr.mxu0 %v726
    %2721 = vmatpush1.msra.mxu0 %v725
    %2722 = vmatprep.subr.mxu0 0.0
    %2723 = vmatpush1.msra.mxu0 0.0
    %2724 = vmatprep.subr.mxu0 0.0
    %2725 = vmatpush1.msra.mxu0 0.0
    %2726 = vmatprep.subr.mxu0 0.0
    %2727 = vmatpush1.msra.mxu0 0.0
    %2728 = vmatprep.subr.mxu0 0.0
    %2729 = vmatpush1.msra.mxu0 0.0
    %2730 = vmatprep.subr.mxu0 0.0
    %2731 = vmatpush1.msra.mxu0 0.0
    %2732 = vmatprep.subr.mxu0 0.0
    %2733 = vmatpush1.msra.mxu0 0.0
    %2734 = vmatprep.subr.mxu0 0.0
    %2735 = vmatpush1.msra.mxu0 0.0
    %2736 = vmatprep.subr.mxu0 0.0
    %2737 = vmatpush1.msra.mxu0 0.0
    %2738 = vmatprep.subr.mxu0 0.0
    %2739 = vmatpush1.msra.mxu0 0.0
    %2740 = vmatprep.subr.mxu0 0.0
    %2741 = vmatpush1.msra.mxu0 0.0
    %2742 = vmatprep.subr.mxu0 0.0
    %2743 = vmatpush1.msra.mxu0 0.0
    %2744 = vmatprep.subr.mxu0 0.0
    %2745 = vmatpush1.msra.mxu0 0.0
    %2746 = vmatprep.subr.mxu0 0.0
    %2747 = vmatpush1.msra.mxu0 0.0
    %2748 = vmatprep.subr.mxu0 0.0
    %2749 = vmatpush1.msra.mxu0 0.0
    %2750 = vmatprep.subr.mxu0 0.0
    %2751 = vmatpush1.msra.mxu0 0.0
    %2752 = vmatprep.subr.mxu0 0.0
    %2753 = vmatpush1.msra.mxu0 0.0
    %2754 = vmatprep.mubr.f32.mxu0 0.0
    %2755 = vmatmul.mubr.f32.gmra.mrb[0].mxu0 %v2618
    %v2756 = vpop.f32.mrb[0].mxu0
    %v2757 = vadd.f32 %v2444, %v2756
    %v2758 = vpop.f32.mrb[0].mxu0
    %v2759 = vadd.f32 %v2446, %v2758
    %2760 = vdwg.mxu0
    %v2761 = vmul.f32 %v2686, 0.5
    %v2762 = vmul.f32 %v2688, 0.5
    %v2763 = vmul.f32 %v2757, 0.5
    %v2764 = vtanh.pop %v2761
    %v2765 = vtanh.pop %v2762
    %v2766 = vtanh.pop %v2763
    %v2767 = vmul.f32 %v2764, 0.5
    %v2768 = vmul.f32 %v2765, 0.5
    %v2769 = vmul.f32 %v2766, 0.5
    %v2770 = vadd.f32 %v2767, 0.5
    %v2771 = vadd.f32 %v2768, 0.5
    %v2772 = vadd.f32 %v2769, 0.5
    %v2773 = vtanh.pop %v2759
    %v2774 = vmul.f32 %v2771, %v2303
    %v2775 = vmul.f32 %v2770, %v2773
    %v2776 = vadd.f32 %v2774, %v2775
    %v2777 = vtanh.pop %v2776
    %v2778 = vmul.f32 %v2772, %v2777
    %2779 = vmatprep.subr.mxu0 %v223
    %2780 = vmatpush1.msra.mxu0 %v222
    %2781 = vmatprep.subr.mxu0 %v227
    %2782 = vmatpush1.msra.mxu0 %v226
    %2783 = vmatprep.subr.mxu0 %v231
    %2784 = vmatpush1.msra.mxu0 %v230
    %2785 = vmatprep.subr.mxu0 %v235
    %2786 = vmatpush1.msra.mxu0 %v234
    %2787 = vmatprep.subr.mxu0 %v239
    %2788 = vmatpush1.msra.mxu0 %v238
    %2789 = vmatprep.subr.mxu0 %v243
    %2790 = vmatpush1.msra.mxu0 %v242
    %2791 = vmatprep.subr.mxu0 %v247
    %2792 = vmatpush1.msra.mxu0 %v246
    %2793 = vmatprep.subr.mxu0 %v251
    %2794 = vmatpush1.msra.mxu0 %v250
    %2795 = vmatprep.subr.mxu0 %v255
    %2796 = vmatpush1.msra.mxu0 %v254
    %2797 = vmatprep.subr.mxu0 %v259
    %2798 = vmatpush1.msra.mxu0 %v258
    %2799 = vmatprep.subr.mxu0 %v263
    %2800 = vmatpush1.msra.mxu0 %v262
    %2801 = vmatprep.subr.mxu0 %v267
    %2802 = vmatpush1.msra.mxu0 %v266
    %2803 = vmatprep.subr.mxu0 %v271
    %2804 = vmatpush1.msra.mxu0 %v270
    %2805 = vmatprep.subr.mxu0 %v275
    %2806 = vmatpush1.msra.mxu0 %v274
    %2807 = vmatprep.subr.mxu0 %v279
    %2808 = vmatpush1.msra.mxu0 %v278
    %2809 = vmatprep.subr.mxu0 %v283
    %2810 = vmatpush1.msra.mxu0 %v282
    %2811 = vmatprep.subr.mxu0 0.0
    %2812 = vmatpush1.msra.mxu0 0.0
    %2813 = vmatprep.subr.mxu0 0.0
    %2814 = vmatpush1.msra.mxu0 0.0
    %2815 = vmatprep.subr.mxu0 0.0
    %2816 = vmatpush1.msra.mxu0 0.0
    %2817 = vmatprep.subr.mxu0 0.0
    %2818 = vmatpush1.msra.mxu0 0.0
    %2819 = vmatprep.subr.mxu0 0.0
    %2820 = vmatpush1.msra.mxu0 0.0
    %2821 = vmatprep.subr.mxu0 0.0
    %2822 = vmatpush1.msra.mxu0 0.0
    %2823 = vmatprep.subr.mxu0 0.0
    %2824 = vmatpush1.msra.mxu0 0.0
    %2825 = vmatprep.subr.mxu0 0.0
    %2826 = vmatpush1.msra.mxu0 0.0
    %2827 = vmatprep.subr.mxu0 0.0
    %2828 = vmatpush1.msra.mxu0 0.0
    %2829 = vmatprep.subr.mxu0 0.0
    %2830 = vmatpush1.msra.mxu0 0.0
    %2831 = vmatprep.subr.mxu0 0.0
    %2832 = vmatpush1.msra.mxu0 0.0
    %2833 = vmatprep.subr.mxu0 0.0
    %2834 = vmatpush1.msra.mxu0 0.0
    %2835 = vmatprep.subr.mxu0 0.0
    %2836 = vmatpush1.msra.mxu0 0.0
    %2837 = vmatprep.subr.mxu0 0.0
    %2838 = vmatpush1.msra.mxu0 0.0
    %2839 = vmatprep.subr.mxu0 0.0
    %2840 = vmatpush1.msra.mxu0 0.0
    %2841 = vmatprep.subr.mxu0 0.0
    %2842 = vmatpush1.msra.mxu0 0.0
    %2843 = vmatprep.mubr.f32.mxu0 0.0
    %2844 = vmatmul.mubr.f32.gmra.mrb[0].mxu0 %v2778
    %v2845 = vpop.f32.mrb[0].mxu0
    %v2846 = vadd.f32 %v205, %v2845
    %v2847 = vpop.f32.mrb[0].mxu0
    %v2848 = vadd.f32 %v209, %v2847
    %2849 = vdwg.mxu0
    %2850 = vmatprep.subr.mxu0 %v225
    %2851 = vmatpush1.msra.mxu0 %v224
    %2852 = vmatprep.subr.mxu0 %v229
    %2853 = vmatpush1.msra.mxu0 %v228
    %2854 = vmatprep.subr.mxu0 %v233
    %2855 = vmatpush1.msra.mxu0 %v232
    %2856 = vmatprep.subr.mxu0 %v237
    %2857 = vmatpush1.msra.mxu0 %v236
    %2858 = vmatprep.subr.mxu0 %v241
    %2859 = vmatpush1.msra.mxu0 %v240
    %2860 = vmatprep.subr.mxu0 %v245
    %2861 = vmatpush1.msra.mxu0 %v244
    %2862 = vmatprep.subr.mxu0 %v249
    %2863 = vmatpush1.msra.mxu0 %v248
    %2864 = vmatprep.subr.mxu0 %v253
    %2865 = vmatpush1.msra.mxu0 %v252
    %2866 = vmatprep.subr.mxu0 %v257
    %2867 = vmatpush1.msra.mxu0 %v256
    %2868 = vmatprep.subr.mxu0 %v261
    %2869 = vmatpush1.msra.mxu0 %v260
    %2870 = vmatprep.subr.mxu0 %v265
    %2871 = vmatpush1.msra.mxu0 %v264
    %2872 = vmatprep.subr.mxu0 %v269
    %2873 = vmatpush1.msra.mxu0 %v268
    %2874 = vmatprep.subr.mxu0 %v273
    %2875 = vmatpush1.msra.mxu0 %v272
    %2876 = vmatprep.subr.mxu0 %v277
    %2877 = vmatpush1.msra.mxu0 %v276
    %2878 = vmatprep.subr.mxu0 %v281
    %2879 = vmatpush1.msra.mxu0 %v280
    %2880 = vmatprep.subr.mxu0 %v285
    %2881 = vmatpush1.msra.mxu0 %v284
    %2882 = vmatprep.subr.mxu0 0.0
    %2883 = vmatpush1.msra.mxu0 0.0
    %2884 = vmatprep.subr.mxu0 0.0
    %2885 = vmatpush1.msra.mxu0 0.0
    %2886 = vmatprep.subr.mxu0 0.0
    %2887 = vmatpush1.msra.mxu0 0.0
    %2888 = vmatprep.subr.mxu0 0.0
    %2889 = vmatpush1.msra.mxu0 0.0
    %2890 = vmatprep.subr.mxu0 0.0
    %2891 = vmatpush1.msra.mxu0 0.0
    %2892 = vmatprep.subr.mxu0 0.0
    %2893 = vmatpush1.msra.mxu0 0.0
    %2894 = vmatprep.subr.mxu0 0.0
    %2895 = vmatpush1.msra.mxu0 0.0
    %2896 = vmatprep.subr.mxu0 0.0
    %2897 = vmatpush1.msra.mxu0 0.0
    %2898 = vmatprep.subr.mxu0 0.0
    %2899 = vmatpush1.msra.mxu0 0.0
    %2900 = vmatprep.subr.mxu0 0.0
    %2901 = vmatpush1.msra.mxu0 0.0
    %2902 = vmatprep.subr.mxu0 0.0
    %2903 = vmatpush1.msra.mxu0 0.0
    %2904 = vmatprep.subr.mxu0 0.0
    %2905 = vmatpush1.msra.mxu0 0.0
    %2906 = vmatprep.subr.mxu0 0.0
    %2907 = vmatpush1.msra.mxu0 0.0
    %2908 = vmatprep.subr.mxu0 0.0
    %2909 = vmatpush1.msra.mxu0 0.0
    %2910 = vmatprep.subr.mxu0 0.0
    %2911 = vmatpush1.msra.mxu0 0.0
    %2912 = vmatprep.subr.mxu0 0.0
    %2913 = vmatpush1.msra.mxu0 0.0
    %2914 = vmatprep.mubr.f32.mxu0 0.0
    %2915 = vmatmul.mubr.f32.gmra.mrb[0].mxu0 %v2778
    %v2916 = vpop.f32.mrb[0].mxu0
    %v2917 = vadd.f32 %v213, %v2916
    %v2918 = vpop.f32.mrb[0].mxu0
    %v2919 = vadd.f32 %v217, %v2918
    %2920 = vdwg.mxu0
    %s2921 = smul.u32 5, 4
    %s2922 = smul.addr %s2921, 8
    %s2923 = scalar_lea.vmem [#allocation2], %s2922
    %v2924 = vld [vmem:[%s2923] sm:$0xff]
    %v2925 = vld [vmem:[%s2923 + $0x8] sm:$0xff]
    %v2926 = vld [vmem:[%s2923 + $0x10] sm:$0xff]
    %v2927 = vld [vmem:[%s2923 + $0x18] sm:$0xff]
    %2928 = vmatprep.subr.mxu0 %v436
    %2929 = vmatpush1.msra.mxu0 %v435
    %2930 = vmatprep.subr.mxu0 %v440
    %2931 = vmatpush1.msra.mxu0 %v439
    %2932 = vmatprep.subr.mxu0 %v444
    %2933 = vmatpush1.msra.mxu0 %v443
    %2934 = vmatprep.subr.mxu0 %v448
    %2935 = vmatpush1.msra.mxu0 %v447
    %2936 = vmatprep.subr.mxu0 %v452
    %2937 = vmatpush1.msra.mxu0 %v451
    %2938 = vmatprep.subr.mxu0 %v456
    %2939 = vmatpush1.msra.mxu0 %v455
    %2940 = vmatprep.subr.mxu0 %v460
    %2941 = vmatpush1.msra.mxu0 %v459
    %2942 = vmatprep.subr.mxu0 %v464
    %2943 = vmatpush1.msra.mxu0 %v463
    %2944 = vmatprep.subr.mxu0 %v468
    %2945 = vmatpush1.msra.mxu0 %v467
    %2946 = vmatprep.subr.mxu0 %v472
    %2947 = vmatpush1.msra.mxu0 %v471
    %2948 = vmatprep.subr.mxu0 %v476
    %2949 = vmatpush1.msra.mxu0 %v475
    %2950 = vmatprep.subr.mxu0 %v480
    %2951 = vmatpush1.msra.mxu0 %v479
    %2952 = vmatprep.subr.mxu0 %v484
    %2953 = vmatpush1.msra.mxu0 %v483
    %2954 = vmatprep.subr.mxu0 %v488
    %2955 = vmatpush1.msra.mxu0 %v487
    %2956 = vmatprep.subr.mxu0 %v492
    %2957 = vmatpush1.msra.mxu0 %v491
    %2958 = vmatprep.subr.mxu0 %v496
    %2959 = vmatpush1.msra.mxu0 %v495
    %2960 = vmatprep.subr.mxu0 0.0
    %2961 = vmatpush1.msra.mxu0 0.0
    %2962 = vmatprep.subr.mxu0 0.0
    %2963 = vmatpush1.msra.mxu0 0.0
    %2964 = vmatprep.subr.mxu0 0.0
    %2965 = vmatpush1.msra.mxu0 0.0
    %2966 = vmatprep.subr.mxu0 0.0
    %2967 = vmatpush1.msra.mxu0 0.0
    %2968 = vmatprep.subr.mxu0 0.0
    %2969 = vmatpush1.msra.mxu0 0.0
    %2970 = vmatprep.subr.mxu0 0.0
    %2971 = vmatpush1.msra.mxu0 0.0
    %2972 = vmatprep.subr.mxu0 0.0
    %2973 = vmatpush1.msra.mxu0 0.0
    %2974 = vmatprep.subr.mxu0 0.0
    %2975 = vmatpush1.msra.mxu0 0.0
    %2976 = vmatprep.subr.mxu0 0.0
    %2977 = vmatpush1.msra.mxu0 0.0
    %2978 = vmatprep.subr.mxu0 0.0
    %2979 = vmatpush1.msra.mxu0 0.0
    %2980 = vmatprep.subr.mxu0 0.0
    %2981 = vmatpush1.msra.mxu0 0.0
    %2982 = vmatprep.subr.mxu0 0.0
    %2983 = vmatpush1.msra.mxu0 0.0
    %2984 = vmatprep.subr.mxu0 0.0
    %2985 = vmatpush1.msra.mxu0 0.0
    %2986 = vmatprep.subr.mxu0 0.0
    %2987 = vmatpush1.msra.mxu0 0.0
    %2988 = vmatprep.subr.mxu0 0.0
    %2989 = vmatpush1.msra.mxu0 0.0
    %2990 = vmatprep.subr.mxu0 0.0
    %2991 = vmatpush1.msra.mxu0 0.0
    %2992 = vmatprep.mubr.f32.mxu0 0.0
    %2993 = vmatmul.mubr.f32.gmra.mrb[0].mxu0 %v2618
    %v2994 = vpop.f32.mrb[0].mxu0
    %v2995 = vadd.f32 0.0, %v2994
    %v2996 = vpop.f32.mrb[0].mxu0
    %v2997 = vadd.f32 0.0, %v2996
    %2998 = vdwg.mxu0
    %2999 = vmatprep.subr.mxu0 %v438
    %3000 = vmatpush1.msra.mxu0 %v437
    %3001 = vmatprep.subr.mxu0 %v442
    %3002 = vmatpush1.msra.mxu0 %v441
    %3003 = vmatprep.subr.mxu0 %v446
    %3004 = vmatpush1.msra.mxu0 %v445
    %3005 = vmatprep.subr.mxu0 %v450
    %3006 = vmatpush1.msra.mxu0 %v449
    %3007 = vmatprep.subr.mxu0 %v454
    %3008 = vmatpush1.msra.mxu0 %v453
    %3009 = vmatprep.subr.mxu0 %v458
    %3010 = vmatpush1.msra.mxu0 %v457
    %3011 = vmatprep.subr.mxu0 %v462
    %3012 = vmatpush1.msra.mxu0 %v461
    %3013 = vmatprep.subr.mxu0 %v466
    %3014 = vmatpush1.msra.mxu0 %v465
    %3015 = vmatprep.subr.mxu0 %v470
    %3016 = vmatpush1.msra.mxu0 %v469
    %3017 = vmatprep.subr.mxu0 %v474
    %3018 = vmatpush1.msra.mxu0 %v473
    %3019 = vmatprep.subr.mxu0 %v478
    %3020 = vmatpush1.msra.mxu0 %v477
    %3021 = vmatprep.subr.mxu0 %v482
    %3022 = vmatpush1.msra.mxu0 %v481
    %3023 = vmatprep.subr.mxu0 %v486
    %3024 = vmatpush1.msra.mxu0 %v485
    %3025 = vmatprep.subr.mxu0 %v490
    %3026 = vmatpush1.msra.mxu0 %v489
    %3027 = vmatprep.subr.mxu0 %v494
    %3028 = vmatpush1.msra.mxu0 %v493
    %3029 = vmatprep.subr.mxu0 %v498
    %3030 = vmatpush1.msra.mxu0 %v497
    %3031 = vmatprep.subr.mxu0 0.0
    %3032 = vmatpush1.msra.mxu0 0.0
    %3033 = vmatprep.subr.mxu0 0.0
    %3034 = vmatpush1.msra.mxu0 0.0
    %3035 = vmatprep.subr.mxu0 0.0
    %3036 = vmatpush1.msra.mxu0 0.0
    %3037 = vmatprep.subr.mxu0 0.0
    %3038 = vmatpush1.msra.mxu0 0.0
    %3039 = vmatprep.subr.mxu0 0.0
    %3040 = vmatpush1.msra.mxu0 0.0
    %3041 = vmatprep.subr.mxu0 0.0
    %3042 = vmatpush1.msra.mxu0 0.0
    %3043 = vmatprep.subr.mxu0 0.0
    %3044 = vmatpush1.msra.mxu0 0.0
    %3045 = vmatprep.subr.mxu0 0.0
    %3046 = vmatpush1.msra.mxu0 0.0
    %3047 = vmatprep.subr.mxu0 0.0
    %3048 = vmatpush1.msra.mxu0 0.0
    %3049 = vmatprep.subr.mxu0 0.0
    %3050 = vmatpush1.msra.mxu0 0.0
    %3051 = vmatprep.subr.mxu0 0.0
    %3052 = vmatpush1.msra.mxu0 0.0
    %3053 = vmatprep.subr.mxu0 0.0
    %3054 = vmatpush1.msra.mxu0 0.0
    %3055 = vmatprep.subr.mxu0 0.0
    %3056 = vmatpush1.msra.mxu0 0.0
    %3057 = vmatprep.subr.mxu0 0.0
    %3058 = vmatpush1.msra.mxu0 0.0
    %3059 = vmatprep.subr.mxu0 0.0
    %3060 = vmatpush1.msra.mxu0 0.0
    %3061 = vmatprep.subr.mxu0 0.0
    %3062 = vmatpush1.msra.mxu0 0.0
    %3063 = vmatprep.mubr.f32.mxu0 0.0
    %3064 = vmatmul.mubr.f32.gmra.mrb[0].mxu0 %v2618
    %v3065 = vpop.f32.mrb[0].mxu0
    %v3066 = vadd.f32 0.0, %v3065
    %v3067 = vpop.f32.mrb[0].mxu0
    %v3068 = vadd.f32 0.0, %v3067
    %3069 = vdwg.mxu0
    %v3070 = vadd.f32 %v2924, %v2995
    %v3071 = vadd.f32 %v2925, %v2997
    %v3072 = vadd.f32 %v2926, %v3066
    %v3073 = vadd.f32 %v2927, %v3068
    %v3074 = vmul.f32 %v3070, 0.5
    %v3075 = vmul.f32 %v3071, 0.5
    %v3076 = vmul.f32 %v3072, 0.5
    %v3077 = vtanh.pop %v3074
    %v3078 = vtanh.pop %v3075
    %v3079 = vtanh.pop %v3076
    %v3080 = vmul.f32 %v3077, 0.5
    %v3081 = vmul.f32 %v3078, 0.5
    %v3082 = vmul.f32 %v3079, 0.5
    %v3083 = vadd.f32 %v3080, 0.5
    %v3084 = vadd.f32 %v3081, 0.5
    %v3085 = vadd.f32 %v3082, 0.5
    %v3086 = vtanh.pop %v3073
    %v3087 = vmul.f32 %v3084, %v2616
    %v3088 = vmul.f32 %v3083, %v3086
    %v3089 = vadd.f32 %v3087, %v3088
    %v3090 = vtanh.pop %v3089
    %v3091 = vmul.f32 %v3085, %v3090
    %3092 = vmatprep.subr.mxu0 %v664
    %3093 = vmatpush1.msra.mxu0 %v663
    %3094 = vmatprep.subr.mxu0 %v668
    %3095 = vmatpush1.msra.mxu0 %v667
    %3096 = vmatprep.subr.mxu0 %v672
    %3097 = vmatpush1.msra.mxu0 %v671
    %3098 = vmatprep.subr.mxu0 %v676
    %3099 = vmatpush1.msra.mxu0 %v675
    %3100 = vmatprep.subr.mxu0 %v680
    %3101 = vmatpush1.msra.mxu0 %v679
    %3102 = vmatprep.subr.mxu0 %v684
    %3103 = vmatpush1.msra.mxu0 %v683
    %3104 = vmatprep.subr.mxu0 %v688
    %3105 = vmatpush1.msra.mxu0 %v687
    %3106 = vmatprep.subr.mxu0 %v692
    %3107 = vmatpush1.msra.mxu0 %v691
    %3108 = vmatprep.subr.mxu0 %v696
    %3109 = vmatpush1.msra.mxu0 %v695
    %3110 = vmatprep.subr.mxu0 %v700
    %3111 = vmatpush1.msra.mxu0 %v699
    %3112 = vmatprep.subr.mxu0 %v704
    %3113 = vmatpush1.msra.mxu0 %v703
    %3114 = vmatprep.subr.mxu0 %v708
    %3115 = vmatpush1.msra.mxu0 %v707
    %3116 = vmatprep.subr.mxu0 %v712
    %3117 = vmatpush1.msra.mxu0 %v711
    %3118 = vmatprep.subr.mxu0 %v716
    %3119 = vmatpush1.msra.mxu0 %v715
    %3120 = vmatprep.subr.mxu0 %v720
    %3121 = vmatpush1.msra.mxu0 %v719
    %3122 = vmatprep.subr.mxu0 %v724
    %3123 = vmatpush1.msra.mxu0 %v723
    %3124 = vmatprep.subr.mxu0 0.0
    %3125 = vmatpush1.msra.mxu0 0.0
    %3126 = vmatprep.subr.mxu0 0.0
    %3127 = vmatpush1.msra.mxu0 0.0
    %3128 = vmatprep.subr.mxu0 0.0
    %3129 = vmatpush1.msra.mxu0 0.0
    %3130 = vmatprep.subr.mxu0 0.0
    %3131 = vmatpush1.msra.mxu0 0.0
    %3132 = vmatprep.subr.mxu0 0.0
    %3133 = vmatpush1.msra.mxu0 0.0
    %3134 = vmatprep.subr.mxu0 0.0
    %3135 = vmatpush1.msra.mxu0 0.0
    %3136 = vmatprep.subr.mxu0 0.0
    %3137 = vmatpush1.msra.mxu0 0.0
    %3138 = vmatprep.subr.mxu0 0.0
    %3139 = vmatpush1.msra.mxu0 0.0
    %3140 = vmatprep.subr.mxu0 0.0
    %3141 = vmatpush1.msra.mxu0 0.0
    %3142 = vmatprep.subr.mxu0 0.0
    %3143 = vmatpush1.msra.mxu0 0.0
    %3144 = vmatprep.subr.mxu0 0.0
    %3145 = vmatpush1.msra.mxu0 0.0
    %3146 = vmatprep.subr.mxu0 0.0
    %3147 = vmatpush1.msra.mxu0 0.0
    %3148 = vmatprep.subr.mxu0 0.0
    %3149 = vmatpush1.msra.mxu0 0.0
    %3150 = vmatprep.subr.mxu0 0.0
    %3151 = vmatpush1.msra.mxu0 0.0
    %3152 = vmatprep.subr.mxu0 0.0
    %3153 = vmatpush1.msra.mxu0 0.0
    %3154 = vmatprep.subr.mxu0 0.0
    %3155 = vmatpush1.msra.mxu0 0.0
    %3156 = vmatprep.mubr.f32.mxu0 0.0
    %3157 = vmatmul.mubr.f32.gmra.mrb[0].mxu0 %v3091
    %v3158 = vpop.f32.mrb[0].mxu0
    %v3159 = vadd.f32 %v2846, %v3158
    %v3160 = vpop.f32.mrb[0].mxu0
    %v3161 = vadd.f32 %v2848, %v3160
    %3162 = vdwg.mxu0
    %3163 = vmatprep.subr.mxu0 %v666
    %3164 = vmatpush1.msra.mxu0 %v665
    %3165 = vmatprep.subr.mxu0 %v670
    %3166 = vmatpush1.msra.mxu0 %v669
    %3167 = vmatprep.subr.mxu0 %v674
    %3168 = vmatpush1.msra.mxu0 %v673
    %3169 = vmatprep.subr.mxu0 %v678
    %3170 = vmatpush1.msra.mxu0 %v677
    %3171 = vmatprep.subr.mxu0 %v682
    %3172 = vmatpush1.msra.mxu0 %v681
    %3173 = vmatprep.subr.mxu0 %v686
    %3174 = vmatpush1.msra.mxu0 %v685
    %3175 = vmatprep.subr.mxu0 %v690
    %3176 = vmatpush1.msra.mxu0 %v689
    %3177 = vmatprep.subr.mxu0 %v694
    %3178 = vmatpush1.msra.mxu0 %v693
    %3179 = vmatprep.subr.mxu0 %v698
    %3180 = vmatpush1.msra.mxu0 %v697
    %3181 = vmatprep.subr.mxu0 %v702
    %3182 = vmatpush1.msra.mxu0 %v701
    %3183 = vmatprep.subr.mxu0 %v706
    %3184 = vmatpush1.msra.mxu0 %v705
    %3185 = vmatprep.subr.mxu0 %v710
    %3186 = vmatpush1.msra.mxu0 %v709
    %3187 = vmatprep.subr.mxu0 %v714
    %3188 = vmatpush1.msra.mxu0 %v713
    %3189 = vmatprep.subr.mxu0 %v718
    %3190 = vmatpush1.msra.mxu0 %v717
    %3191 = vmatprep.subr.mxu0 %v722
    %3192 = vmatpush1.msra.mxu0 %v721
    %3193 = vmatprep.subr.mxu0 %v726
    %3194 = vmatpush1.msra.mxu0 %v725
    %3195 = vmatprep.subr.mxu0 0.0
    %3196 = vmatpush1.msra.mxu0 0.0
    %3197 = vmatprep.subr.mxu0 0.0
    %3198 = vmatpush1.msra.mxu0 0.0
    %3199 = vmatprep.subr.mxu0 0.0
    %3200 = vmatpush1.msra.mxu0 0.0
    %3201 = vmatprep.subr.mxu0 0.0
    %3202 = vmatpush1.msra.mxu0 0.0
    %3203 = vmatprep.subr.mxu0 0.0
    %3204 = vmatpush1.msra.mxu0 0.0
    %3205 = vmatprep.subr.mxu0 0.0
    %3206 = vmatpush1.msra.mxu0 0.0
    %3207 = vmatprep.subr.mxu0 0.0
    %3208 = vmatpush1.msra.mxu0 0.0
    %3209 = vmatprep.subr.mxu0 0.0
    %3210 = vmatpush1.msra.mxu0 0.0
    %3211 = vmatprep.subr.mxu0 0.0
    %3212 = vmatpush1.msra.mxu0 0.0
    %3213 = vmatprep.subr.mxu0 0.0
    %3214 = vmatpush1.msra.mxu0 0.0
    %3215 = vmatprep.subr.mxu0 0.0
    %3216 = vmatpush1.msra.mxu0 0.0
    %3217 = vmatprep.subr.mxu0 0.0
    %3218 = vmatpush1.msra.mxu0 0.0
    %3219 = vmatprep.subr.mxu0 0.0
    %3220 = vmatpush1.msra.mxu0 0.0
    %3221 = vmatprep.subr.mxu0 0.0
    %3222 = vmatpush1.msra.mxu0 0.0
    %3223 = vmatprep.subr.mxu0 0.0
    %3224 = vmatpush1.msra.mxu0 0.0
    %3225 = vmatprep.subr.mxu0 0.0
    %3226 = vmatpush1.msra.mxu0 0.0
    %3227 = vmatprep.mubr.f32.mxu0 0.0
    %3228 = vmatmul.mubr.f32.gmra.mrb[0].mxu0 %v3091
    %v3229 = vpop.f32.mrb[0].mxu0
    %v3230 = vadd.f32 %v2917, %v3229
    %v3231 = vpop.f32.mrb[0].mxu0
    %v3232 = vadd.f32 %v2919, %v3231
    %3233 = vdwg.mxu0
    %v3234 = vmul.f32 %v3159, 0.5
    %v3235 = vmul.f32 %v3161, 0.5
    %v3236 = vmul.f32 %v3230, 0.5
    %v3237 = vtanh.pop %v3234
    %v3238 = vtanh.pop %v3235
    %v3239 = vtanh.pop %v3236
    %v3240 = vmul.f32 %v3237, 0.5
    %v3241 = vmul.f32 %v3238, 0.5
    %v3242 = vmul.f32 %v3239, 0.5
    %v3243 = vadd.f32 %v3240, 0.5
    %v3244 = vadd.f32 %v3241, 0.5
    %v3245 = vadd.f32 %v3242, 0.5
    %v3246 = vtanh.pop %v3232
    %v3247 = vmul.f32 %v3244, %v2776
    %v3248 = vmul.f32 %v3243, %v3246
    %v3249 = vadd.f32 %v3247, %v3248
    %v3250 = vtanh.pop %v3249
    %v3251 = vmul.f32 %v3245, %v3250
    %3252 = vmatprep.subr.mxu0 %v223
    %3253 = vmatpush1.msra.mxu0 %v222
    %3254 = vmatprep.subr.mxu0 %v227
    %3255 = vmatpush1.msra.mxu0 %v226
    %3256 = vmatprep.subr.mxu0 %v231
    %3257 = vmatpush1.msra.mxu0 %v230
    %3258 = vmatprep.subr.mxu0 %v235
    %3259 = vmatpush1.msra.mxu0 %v234
    %3260 = vmatprep.subr.mxu0 %v239
    %3261 = vmatpush1.msra.mxu0 %v238
    %3262 = vmatprep.subr.mxu0 %v243
    %3263 = vmatpush1.msra.mxu0 %v242
    %3264 = vmatprep.subr.mxu0 %v247
    %3265 = vmatpush1.msra.mxu0 %v246
    %3266 = vmatprep.subr.mxu0 %v251
    %3267 = vmatpush1.msra.mxu0 %v250
    %3268 = vmatprep.subr.mxu0 %v255
    %3269 = vmatpush1.msra.mxu0 %v254
    %3270 = vmatprep.subr.mxu0 %v259
    %3271 = vmatpush1.msra.mxu0 %v258
    %3272 = vmatprep.subr.mxu0 %v263
    %3273 = vmatpush1.msra.mxu0 %v262
    %3274 = vmatprep.subr.mxu0 %v267
    %3275 = vmatpush1.msra.mxu0 %v266
    %3276 = vmatprep.subr.mxu0 %v271
    %3277 = vmatpush1.msra.mxu0 %v270
    %3278 = vmatprep.subr.mxu0 %v275
    %3279 = vmatpush1.msra.mxu0 %v274
    %3280 = vmatprep.subr.mxu0 %v279
    %3281 = vmatpush1.msra.mxu0 %v278
    %3282 = vmatprep.subr.mxu0 %v283
    %3283 = vmatpush1.msra.mxu0 %v282
    %3284 = vmatprep.subr.mxu0 0.0
    %3285 = vmatpush1.msra.mxu0 0.0
    %3286 = vmatprep.subr.mxu0 0.0
    %3287 = vmatpush1.msra.mxu0 0.0
    %3288 = vmatprep.subr.mxu0 0.0
    %3289 = vmatpush1.msra.mxu0 0.0
    %3290 = vmatprep.subr.mxu0 0.0
    %3291 = vmatpush1.msra.mxu0 0.0
    %3292 = vmatprep.subr.mxu0 0.0
    %3293 = vmatpush1.msra.mxu0 0.0
    %3294 = vmatprep.subr.mxu0 0.0
    %3295 = vmatpush1.msra.mxu0 0.0
    %3296 = vmatprep.subr.mxu0 0.0
    %3297 = vmatpush1.msra.mxu0 0.0
    %3298 = vmatprep.subr.mxu0 0.0
    %3299 = vmatpush1.msra.mxu0 0.0
    %3300 = vmatprep.subr.mxu0 0.0
    %3301 = vmatpush1.msra.mxu0 0.0
    %3302 = vmatprep.subr.mxu0 0.0
    %3303 = vmatpush1.msra.mxu0 0.0
    %3304 = vmatprep.subr.mxu0 0.0
    %3305 = vmatpush1.msra.mxu0 0.0
    %3306 = vmatprep.subr.mxu0 0.0
    %3307 = vmatpush1.msra.mxu0 0.0
    %3308 = vmatprep.subr.mxu0 0.0
    %3309 = vmatpush1.msra.mxu0 0.0
    %3310 = vmatprep.subr.mxu0 0.0
    %3311 = vmatpush1.msra.mxu0 0.0
    %3312 = vmatprep.subr.mxu0 0.0
    %3313 = vmatpush1.msra.mxu0 0.0
    %3314 = vmatprep.subr.mxu0 0.0
    %3315 = vmatpush1.msra.mxu0 0.0
    %3316 = vmatprep.mubr.f32.mxu0 0.0
    %3317 = vmatmul.mubr.f32.gmra.mrb[0].mxu0 %v3251
    %v3318 = vpop.f32.mrb[0].mxu0
    %v3319 = vadd.f32 %v205, %v3318
    %v3320 = vpop.f32.mrb[0].mxu0
    %v3321 = vadd.f32 %v209, %v3320
    %3322 = vdwg.mxu0
    %3323 = vmatprep.subr.mxu0 %v225
    %3324 = vmatpush1.msra.mxu0 %v224
    %3325 = vmatprep.subr.mxu0 %v229
    %3326 = vmatpush1.msra.mxu0 %v228
    %3327 = vmatprep.subr.mxu0 %v233
    %3328 = vmatpush1.msra.mxu0 %v232
    %3329 = vmatprep.subr.mxu0 %v237
    %3330 = vmatpush1.msra.mxu0 %v236
    %3331 = vmatprep.subr.mxu0 %v241
    %3332 = vmatpush1.msra.mxu0 %v240
    %3333 = vmatprep.subr.mxu0 %v245
    %3334 = vmatpush1.msra.mxu0 %v244
    %3335 = vmatprep.subr.mxu0 %v249
    %3336 = vmatpush1.msra.mxu0 %v248
    %3337 = vmatprep.subr.mxu0 %v253
    %3338 = vmatpush1.msra.mxu0 %v252
    %3339 = vmatprep.subr.mxu0 %v257
    %3340 = vmatpush1.msra.mxu0 %v256
    %3341 = vmatprep.subr.mxu0 %v261
    %3342 = vmatpush1.msra.mxu0 %v260
    %3343 = vmatprep.subr.mxu0 %v265
    %3344 = vmatpush1.msra.mxu0 %v264
    %3345 = vmatprep.subr.mxu0 %v269
    %3346 = vmatpush1.msra.mxu0 %v268
    %3347 = vmatprep.subr.mxu0 %v273
    %3348 = vmatpush1.msra.mxu0 %v272
    %3349 = vmatprep.subr.mxu0 %v277
    %3350 = vmatpush1.msra.mxu0 %v276
    %3351 = vmatprep.subr.mxu0 %v281
    %3352 = vmatpush1.msra.mxu0 %v280
    %3353 = vmatprep.subr.mxu0 %v285
    %3354 = vmatpush1.msra.mxu0 %v284
    %3355 = vmatprep.subr.mxu0 0.0
    %3356 = vmatpush1.msra.mxu0 0.0
    %3357 = vmatprep.subr.mxu0 0.0
    %3358 = vmatpush1.msra.mxu0 0.0
    %3359 = vmatprep.subr.mxu0 0.0
    %3360 = vmatpush1.msra.mxu0 0.0
    %3361 = vmatprep.subr.mxu0 0.0
    %3362 = vmatpush1.msra.mxu0 0.0
    %3363 = vmatprep.subr.mxu0 0.0
    %3364 = vmatpush1.msra.mxu0 0.0
    %3365 = vmatprep.subr.mxu0 0.0
    %3366 = vmatpush1.msra.mxu0 0.0
    %3367 = vmatprep.subr.mxu0 0.0
    %3368 = vmatpush1.msra.mxu0 0.0
    %3369 = vmatprep.subr.mxu0 0.0
    %3370 = vmatpush1.msra.mxu0 0.0
    %3371 = vmatprep.subr.mxu0 0.0
    %3372 = vmatpush1.msra.mxu0 0.0
    %3373 = vmatprep.subr.mxu0 0.0
    %3374 = vmatpush1.msra.mxu0 0.0
    %3375 = vmatprep.subr.mxu0 0.0
    %3376 = vmatpush1.msra.mxu0 0.0
    %3377 = vmatprep.subr.mxu0 0.0
    %3378 = vmatpush1.msra.mxu0 0.0
    %3379 = vmatprep.subr.mxu0 0.0
    %3380 = vmatpush1.msra.mxu0 0.0
    %3381 = vmatprep.subr.mxu0 0.0
    %3382 = vmatpush1.msra.mxu0 0.0
    %3383 = vmatprep.subr.mxu0 0.0
    %3384 = vmatpush1.msra.mxu0 0.0
    %3385 = vmatprep.subr.mxu0 0.0
    %3386 = vmatpush1.msra.mxu0 0.0
    %3387 = vmatprep.mubr.f32.mxu0 0.0
    %3388 = vmatmul.mubr.f32.gmra.mrb[0].mxu0 %v3251
    %v3389 = vpop.f32.mrb[0].mxu0
    %v3390 = vadd.f32 %v213, %v3389
    %v3391 = vpop.f32.mrb[0].mxu0
    %v3392 = vadd.f32 %v217, %v3391
    %3393 = vdwg.mxu0
    %s3394 = smul.u32 6, 4
    %s3395 = smul.addr %s3394, 8
    %s3396 = scalar_lea.vmem [#allocation2], %s3395
    %v3397 = vld [vmem:[%s3396] sm:$0xff]
    %v3398 = vld [vmem:[%s3396 + $0x8] sm:$0xff]
    %v3399 = vld [vmem:[%s3396 + $0x10] sm:$0xff]
    %v3400 = vld [vmem:[%s3396 + $0x18] sm:$0xff]
    %3401 = vmatprep.subr.mxu0 %v436
    %3402 = vmatpush1.msra.mxu0 %v435
    %3403 = vmatprep.subr.mxu0 %v440
    %3404 = vmatpush1.msra.mxu0 %v439
    %3405 = vmatprep.subr.mxu0 %v444
    %3406 = vmatpush1.msra.mxu0 %v443
    %3407 = vmatprep.subr.mxu0 %v448
    %3408 = vmatpush1.msra.mxu0 %v447
    %3409 = vmatprep.subr.mxu0 %v452
    %3410 = vmatpush1.msra.mxu0 %v451
    %3411 = vmatprep.subr.mxu0 %v456
    %3412 = vmatpush1.msra.mxu0 %v455
    %3413 = vmatprep.subr.mxu0 %v460
    %3414 = vmatpush1.msra.mxu0 %v459
    %3415 = vmatprep.subr.mxu0 %v464
    %3416 = vmatpush1.msra.mxu0 %v463
    %3417 = vmatprep.subr.mxu0 %v468
    %3418 = vmatpush1.msra.mxu0 %v467
    %3419 = vmatprep.subr.mxu0 %v472
    %3420 = vmatpush1.msra.mxu0 %v471
    %3421 = vmatprep.subr.mxu0 %v476
    %3422 = vmatpush1.msra.mxu0 %v475
    %3423 = vmatprep.subr.mxu0 %v480
    %3424 = vmatpush1.msra.mxu0 %v479
    %3425 = vmatprep.subr.mxu0 %v484
    %3426 = vmatpush1.msra.mxu0 %v483
    %3427 = vmatprep.subr.mxu0 %v488
    %3428 = vmatpush1.msra.mxu0 %v487
    %3429 = vmatprep.subr.mxu0 %v492
    %3430 = vmatpush1.msra.mxu0 %v491
    %3431 = vmatprep.subr.mxu0 %v496
    %3432 = vmatpush1.msra.mxu0 %v495
    %3433 = vmatprep.subr.mxu0 0.0
    %3434 = vmatpush1.msra.mxu0 0.0
    %3435 = vmatprep.subr.mxu0 0.0
    %3436 = vmatpush1.msra.mxu0 0.0
    %3437 = vmatprep.subr.mxu0 0.0
    %3438 = vmatpush1.msra.mxu0 0.0
    %3439 = vmatprep.subr.mxu0 0.0
    %3440 = vmatpush1.msra.mxu0 0.0
    %3441 = vmatprep.subr.mxu0 0.0
    %3442 = vmatpush1.msra.mxu0 0.0
    %3443 = vmatprep.subr.mxu0 0.0
    %3444 = vmatpush1.msra.mxu0 0.0
    %3445 = vmatprep.subr.mxu0 0.0
    %3446 = vmatpush1.msra.mxu0 0.0
    %3447 = vmatprep.subr.mxu0 0.0
    %3448 = vmatpush1.msra.mxu0 0.0
    %3449 = vmatprep.subr.mxu0 0.0
    %3450 = vmatpush1.msra.mxu0 0.0
    %3451 = vmatprep.subr.mxu0 0.0
    %3452 = vmatpush1.msra.mxu0 0.0
    %3453 = vmatprep.subr.mxu0 0.0
    %3454 = vmatpush1.msra.mxu0 0.0
    %3455 = vmatprep.subr.mxu0 0.0
    %3456 = vmatpush1.msra.mxu0 0.0
    %3457 = vmatprep.subr.mxu0 0.0
    %3458 = vmatpush1.msra.mxu0 0.0
    %3459 = vmatprep.subr.mxu0 0.0
    %3460 = vmatpush1.msra.mxu0 0.0
    %3461 = vmatprep.subr.mxu0 0.0
    %3462 = vmatpush1.msra.mxu0 0.0
    %3463 = vmatprep.subr.mxu0 0.0
    %3464 = vmatpush1.msra.mxu0 0.0
    %3465 = vmatprep.mubr.f32.mxu0 0.0
    %3466 = vmatmul.mubr.f32.gmra.mrb[0].mxu0 %v3091
    %v3467 = vpop.f32.mrb[0].mxu0
    %v3468 = vadd.f32 0.0, %v3467
    %v3469 = vpop.f32.mrb[0].mxu0
    %v3470 = vadd.f32 0.0, %v3469
    %3471 = vdwg.mxu0
    %3472 = vmatprep.subr.mxu0 %v438
    %3473 = vmatpush1.msra.mxu0 %v437
    %3474 = vmatprep.subr.mxu0 %v442
    %3475 = vmatpush1.msra.mxu0 %v441
    %3476 = vmatprep.subr.mxu0 %v446
    %3477 = vmatpush1.msra.mxu0 %v445
    %3478 = vmatprep.subr.mxu0 %v450
    %3479 = vmatpush1.msra.mxu0 %v449
    %3480 = vmatprep.subr.mxu0 %v454
    %3481 = vmatpush1.msra.mxu0 %v453
    %3482 = vmatprep.subr.mxu0 %v458
    %3483 = vmatpush1.msra.mxu0 %v457
    %3484 = vmatprep.subr.mxu0 %v462
    %3485 = vmatpush1.msra.mxu0 %v461
    %3486 = vmatprep.subr.mxu0 %v466
    %3487 = vmatpush1.msra.mxu0 %v465
    %3488 = vmatprep.subr.mxu0 %v470
    %3489 = vmatpush1.msra.mxu0 %v469
    %3490 = vmatprep.subr.mxu0 %v474
    %3491 = vmatpush1.msra.mxu0 %v473
    %3492 = vmatprep.subr.mxu0 %v478
    %3493 = vmatpush1.msra.mxu0 %v477
    %3494 = vmatprep.subr.mxu0 %v482
    %3495 = vmatpush1.msra.mxu0 %v481
    %3496 = vmatprep.subr.mxu0 %v486
    %3497 = vmatpush1.msra.mxu0 %v485
    %3498 = vmatprep.subr.mxu0 %v490
    %3499 = vmatpush1.msra.mxu0 %v489
    %3500 = vmatprep.subr.mxu0 %v494
    %3501 = vmatpush1.msra.mxu0 %v493
    %3502 = vmatprep.subr.mxu0 %v498
    %3503 = vmatpush1.msra.mxu0 %v497
    %3504 = vmatprep.subr.mxu0 0.0
    %3505 = vmatpush1.msra.mxu0 0.0
    %3506 = vmatprep.subr.mxu0 0.0
    %3507 = vmatpush1.msra.mxu0 0.0
    %3508 = vmatprep.subr.mxu0 0.0
    %3509 = vmatpush1.msra.mxu0 0.0
    %3510 = vmatprep.subr.mxu0 0.0
    %3511 = vmatpush1.msra.mxu0 0.0
    %3512 = vmatprep.subr.mxu0 0.0
    %3513 = vmatpush1.msra.mxu0 0.0
    %3514 = vmatprep.subr.mxu0 0.0
    %3515 = vmatpush1.msra.mxu0 0.0
    %3516 = vmatprep.subr.mxu0 0.0
    %3517 = vmatpush1.msra.mxu0 0.0
    %3518 = vmatprep.subr.mxu0 0.0
    %3519 = vmatpush1.msra.mxu0 0.0
    %3520 = vmatprep.subr.mxu0 0.0
    %3521 = vmatpush1.msra.mxu0 0.0
    %3522 = vmatprep.subr.mxu0 0.0
    %3523 = vmatpush1.msra.mxu0 0.0
    %3524 = vmatprep.subr.mxu0 0.0
    %3525 = vmatpush1.msra.mxu0 0.0
    %3526 = vmatprep.subr.mxu0 0.0
    %3527 = vmatpush1.msra.mxu0 0.0
    %3528 = vmatprep.subr.mxu0 0.0
    %3529 = vmatpush1.msra.mxu0 0.0
    %3530 = vmatprep.subr.mxu0 0.0
    %3531 = vmatpush1.msra.mxu0 0.0
    %3532 = vmatprep.subr.mxu0 0.0
    %3533 = vmatpush1.msra.mxu0 0.0
    %3534 = vmatprep.subr.mxu0 0.0
    %3535 = vmatpush1.msra.mxu0 0.0
    %3536 = vmatprep.mubr.f32.mxu0 0.0
    %3537 = vmatmul.mubr.f32.gmra.mrb[0].mxu0 %v3091
    %v3538 = vpop.f32.mrb[0].mxu0
    %v3539 = vadd.f32 0.0, %v3538
    %v3540 = vpop.f32.mrb[0].mxu0
    %v3541 = vadd.f32 0.0, %v3540
    %3542 = vdwg.mxu0
    %v3543 = vadd.f32 %v3397, %v3468
    %v3544 = vadd.f32 %v3398, %v3470
    %v3545 = vadd.f32 %v3399, %v3539
    %v3546 = vadd.f32 %v3400, %v3541
    %v3547 = vmul.f32 %v3543, 0.5
    %v3548 = vmul.f32 %v3544, 0.5
    %v3549 = vmul.f32 %v3545, 0.5
    %v3550 = vtanh.pop %v3547
    %v3551 = vtanh.pop %v3548
    %v3552 = vtanh.pop %v3549
    %v3553 = vmul.f32 %v3550, 0.5
    %v3554 = vmul.f32 %v3551, 0.5
    %v3555 = vmul.f32 %v3552, 0.5
    %v3556 = vadd.f32 %v3553, 0.5
    %v3557 = vadd.f32 %v3554, 0.5
    %v3558 = vadd.f32 %v3555, 0.5
    %v3559 = vtanh.pop %v3546
    %v3560 = vmul.f32 %v3557, %v3089
    %v3561 = vmul.f32 %v3556, %v3559
    %v3562 = vadd.f32 %v3560, %v3561
    %v3563 = vtanh.pop %v3562
    %v3564 = vmul.f32 %v3558, %v3563
    %3565 = vmatprep.subr.mxu0 %v664
    %3566 = vmatpush1.msra.mxu0 %v663
    %3567 = vmatprep.subr.mxu0 %v668
    %3568 = vmatpush1.msra.mxu0 %v667
    %3569 = vmatprep.subr.mxu0 %v672
    %3570 = vmatpush1.msra.mxu0 %v671
    %3571 = vmatprep.subr.mxu0 %v676
    %3572 = vmatpush1.msra.mxu0 %v675
    %3573 = vmatprep.subr.mxu0 %v680
    %3574 = vmatpush1.msra.mxu0 %v679
    %3575 = vmatprep.subr.mxu0 %v684
    %3576 = vmatpush1.msra.mxu0 %v683
    %3577 = vmatprep.subr.mxu0 %v688
    %3578 = vmatpush1.msra.mxu0 %v687
    %3579 = vmatprep.subr.mxu0 %v692
    %3580 = vmatpush1.msra.mxu0 %v691
    %3581 = vmatprep.subr.mxu0 %v696
    %3582 = vmatpush1.msra.mxu0 %v695
    %3583 = vmatprep.subr.mxu0 %v700
    %3584 = vmatpush1.msra.mxu0 %v699
    %3585 = vmatprep.subr.mxu0 %v704
    %3586 = vmatpush1.msra.mxu0 %v703
    %3587 = vmatprep.subr.mxu0 %v708
    %3588 = vmatpush1.msra.mxu0 %v707
    %3589 = vmatprep.subr.mxu0 %v712
    %3590 = vmatpush1.msra.mxu0 %v711
    %3591 = vmatprep.subr.mxu0 %v716
    %3592 = vmatpush1.msra.mxu0 %v715
    %3593 = vmatprep.subr.mxu0 %v720
    %3594 = vmatpush1.msra.mxu0 %v719
    %3595 = vmatprep.subr.mxu0 %v724
    %3596 = vmatpush1.msra.mxu0 %v723
    %3597 = vmatprep.subr.mxu0 0.0
    %3598 = vmatpush1.msra.mxu0 0.0
    %3599 = vmatprep.subr.mxu0 0.0
    %3600 = vmatpush1.msra.mxu0 0.0
    %3601 = vmatprep.subr.mxu0 0.0
    %3602 = vmatpush1.msra.mxu0 0.0
    %3603 = vmatprep.subr.mxu0 0.0
    %3604 = vmatpush1.msra.mxu0 0.0
    %3605 = vmatprep.subr.mxu0 0.0
    %3606 = vmatpush1.msra.mxu0 0.0
    %3607 = vmatprep.subr.mxu0 0.0
    %3608 = vmatpush1.msra.mxu0 0.0
    %3609 = vmatprep.subr.mxu0 0.0
    %3610 = vmatpush1.msra.mxu0 0.0
    %3611 = vmatprep.subr.mxu0 0.0
    %3612 = vmatpush1.msra.mxu0 0.0
    %3613 = vmatprep.subr.mxu0 0.0
    %3614 = vmatpush1.msra.mxu0 0.0
    %3615 = vmatprep.subr.mxu0 0.0
    %3616 = vmatpush1.msra.mxu0 0.0
    %3617 = vmatprep.subr.mxu0 0.0
    %3618 = vmatpush1.msra.mxu0 0.0
    %3619 = vmatprep.subr.mxu0 0.0
    %3620 = vmatpush1.msra.mxu0 0.0
    %3621 = vmatprep.subr.mxu0 0.0
    %3622 = vmatpush1.msra.mxu0 0.0
    %3623 = vmatprep.subr.mxu0 0.0
    %3624 = vmatpush1.msra.mxu0 0.0
    %3625 = vmatprep.subr.mxu0 0.0
    %3626 = vmatpush1.msra.mxu0 0.0
    %3627 = vmatprep.subr.mxu0 0.0
    %3628 = vmatpush1.msra.mxu0 0.0
    %3629 = vmatprep.mubr.f32.mxu0 0.0
    %3630 = vmatmul.mubr.f32.gmra.mrb[0].mxu0 %v3564
    %v3631 = vpop.f32.mrb[0].mxu0
    %v3632 = vadd.f32 %v3319, %v3631
    %v3633 = vpop.f32.mrb[0].mxu0
    %v3634 = vadd.f32 %v3321, %v3633
    %3635 = vdwg.mxu0
    %3636 = vmatprep.subr.mxu0 %v666
    %3637 = vmatpush1.msra.mxu0 %v665
    %3638 = vmatprep.subr.mxu0 %v670
    %3639 = vmatpush1.msra.mxu0 %v669
    %3640 = vmatprep.subr.mxu0 %v674
    %3641 = vmatpush1.msra.mxu0 %v673
    %3642 = vmatprep.subr.mxu0 %v678
    %3643 = vmatpush1.msra.mxu0 %v677
    %3644 = vmatprep.subr.mxu0 %v682
    %3645 = vmatpush1.msra.mxu0 %v681
    %3646 = vmatprep.subr.mxu0 %v686
    %3647 = vmatpush1.msra.mxu0 %v685
    %3648 = vmatprep.subr.mxu0 %v690
    %3649 = vmatpush1.msra.mxu0 %v689
    %3650 = vmatprep.subr.mxu0 %v694
    %3651 = vmatpush1.msra.mxu0 %v693
    %3652 = vmatprep.subr.mxu0 %v698
    %3653 = vmatpush1.msra.mxu0 %v697
    %3654 = vmatprep.subr.mxu0 %v702
    %3655 = vmatpush1.msra.mxu0 %v701
    %3656 = vmatprep.subr.mxu0 %v706
    %3657 = vmatpush1.msra.mxu0 %v705
    %3658 = vmatprep.subr.mxu0 %v710
    %3659 = vmatpush1.msra.mxu0 %v709
    %3660 = vmatprep.subr.mxu0 %v714
    %3661 = vmatpush1.msra.mxu0 %v713
    %3662 = vmatprep.subr.mxu0 %v718
    %3663 = vmatpush1.msra.mxu0 %v717
    %3664 = vmatprep.subr.mxu0 %v722
    %3665 = vmatpush1.msra.mxu0 %v721
    %3666 = vmatprep.subr.mxu0 %v726
    %3667 = vmatpush1.msra.mxu0 %v725
    %3668 = vmatprep.subr.mxu0 0.0
    %3669 = vmatpush1.msra.mxu0 0.0
    %3670 = vmatprep.subr.mxu0 0.0
    %3671 = vmatpush1.msra.mxu0 0.0
    %3672 = vmatprep.subr.mxu0 0.0
    %3673 = vmatpush1.msra.mxu0 0.0
    %3674 = vmatprep.subr.mxu0 0.0
    %3675 = vmatpush1.msra.mxu0 0.0
    %3676 = vmatprep.subr.mxu0 0.0
    %3677 = vmatpush1.msra.mxu0 0.0
    %3678 = vmatprep.subr.mxu0 0.0
    %3679 = vmatpush1.msra.mxu0 0.0
    %3680 = vmatprep.subr.mxu0 0.0
    %3681 = vmatpush1.msra.mxu0 0.0
    %3682 = vmatprep.subr.mxu0 0.0
    %3683 = vmatpush1.msra.mxu0 0.0
    %3684 = vmatprep.subr.mxu0 0.0
    %3685 = vmatpush1.msra.mxu0 0.0
    %3686 = vmatprep.subr.mxu0 0.0
    %3687 = vmatpush1.msra.mxu0 0.0
    %3688 = vmatprep.subr.mxu0 0.0
    %3689 = vmatpush1.msra.mxu0 0.0
    %3690 = vmatprep.subr.mxu0 0.0
    %3691 = vmatpush1.msra.mxu0 0.0
    %3692 = vmatprep.subr.mxu0 0.0
    %3693 = vmatpush1.msra.mxu0 0.0
    %3694 = vmatprep.subr.mxu0 0.0
    %3695 = vmatpush1.msra.mxu0 0.0
    %3696 = vmatprep.subr.mxu0 0.0
    %3697 = vmatpush1.msra.mxu0 0.0
    %3698 = vmatprep.subr.mxu0 0.0
    %3699 = vmatpush1.msra.mxu0 0.0
    %3700 = vmatprep.mubr.f32.mxu0 0.0
    %3701 = vmatmul.mubr.f32.gmra.mrb[0].mxu0 %v3564
    %v3702 = vpop.f32.mrb[0].mxu0
    %v3703 = vadd.f32 %v3390, %v3702
    %v3704 = vpop.f32.mrb[0].mxu0
    %v3705 = vadd.f32 %v3392, %v3704
    %3706 = vdwg.mxu0
    %v3707 = vmul.f32 %v3632, 0.5
    %v3708 = vmul.f32 %v3634, 0.5
    %v3709 = vmul.f32 %v3703, 0.5
    %v3710 = vtanh.pop %v3707
    %v3711 = vtanh.pop %v3708
    %v3712 = vtanh.pop %v3709
    %v3713 = vmul.f32 %v3710, 0.5
    %v3714 = vmul.f32 %v3711, 0.5
    %v3715 = vmul.f32 %v3712, 0.5
    %v3716 = vadd.f32 %v3713, 0.5
    %v3717 = vadd.f32 %v3714, 0.5
    %v3718 = vadd.f32 %v3715, 0.5
    %v3719 = vtanh.pop %v3705
    %v3720 = vmul.f32 %v3717, %v3249
    %v3721 = vmul.f32 %v3716, %v3719
    %v3722 = vadd.f32 %v3720, %v3721
    %v3723 = vtanh.pop %v3722
    %v3724 = vmul.f32 %v3718, %v3723
    %3725 = vmatprep.subr.mxu0 %v223
    %3726 = vmatpush1.msra.mxu0 %v222
    %3727 = vmatprep.subr.mxu0 %v227
    %3728 = vmatpush1.msra.mxu0 %v226
    %3729 = vmatprep.subr.mxu0 %v231
    %3730 = vmatpush1.msra.mxu0 %v230
    %3731 = vmatprep.subr.mxu0 %v235
    %3732 = vmatpush1.msra.mxu0 %v234
    %3733 = vmatprep.subr.mxu0 %v239
    %3734 = vmatpush1.msra.mxu0 %v238
    %3735 = vmatprep.subr.mxu0 %v243
    %3736 = vmatpush1.msra.mxu0 %v242
    %3737 = vmatprep.subr.mxu0 %v247
    %3738 = vmatpush1.msra.mxu0 %v246
    %3739 = vmatprep.subr.mxu0 %v251
    %3740 = vmatpush1.msra.mxu0 %v250
    %3741 = vmatprep.subr.mxu0 %v255
    %3742 = vmatpush1.msra.mxu0 %v254
    %3743 = vmatprep.subr.mxu0 %v259
    %3744 = vmatpush1.msra.mxu0 %v258
    %3745 = vmatprep.subr.mxu0 %v263
    %3746 = vmatpush1.msra.mxu0 %v262
    %3747 = vmatprep.subr.mxu0 %v267
    %3748 = vmatpush1.msra.mxu0 %v266
    %3749 = vmatprep.subr.mxu0 %v271
    %3750 = vmatpush1.msra.mxu0 %v270
    %3751 = vmatprep.subr.mxu0 %v275
    %3752 = vmatpush1.msra.mxu0 %v274
    %3753 = vmatprep.subr.mxu0 %v279
    %3754 = vmatpush1.msra.mxu0 %v278
    %3755 = vmatprep.subr.mxu0 %v283
    %3756 = vmatpush1.msra.mxu0 %v282
    %3757 = vmatprep.subr.mxu0 0.0
    %3758 = vmatpush1.msra.mxu0 0.0
    %3759 = vmatprep.subr.mxu0 0.0
    %3760 = vmatpush1.msra.mxu0 0.0
    %3761 = vmatprep.subr.mxu0 0.0
    %3762 = vmatpush1.msra.mxu0 0.0
    %3763 = vmatprep.subr.mxu0 0.0
    %3764 = vmatpush1.msra.mxu0 0.0
    %3765 = vmatprep.subr.mxu0 0.0
    %3766 = vmatpush1.msra.mxu0 0.0
    %3767 = vmatprep.subr.mxu0 0.0
    %3768 = vmatpush1.msra.mxu0 0.0
    %3769 = vmatprep.subr.mxu0 0.0
    %3770 = vmatpush1.msra.mxu0 0.0
    %3771 = vmatprep.subr.mxu0 0.0
    %3772 = vmatpush1.msra.mxu0 0.0
    %3773 = vmatprep.subr.mxu0 0.0
    %3774 = vmatpush1.msra.mxu0 0.0
    %3775 = vmatprep.subr.mxu0 0.0
    %3776 = vmatpush1.msra.mxu0 0.0
    %3777 = vmatprep.subr.mxu0 0.0
    %3778 = vmatpush1.msra.mxu0 0.0
    %3779 = vmatprep.subr.mxu0 0.0
    %3780 = vmatpush1.msra.mxu0 0.0
    %3781 = vmatprep.subr.mxu0 0.0
    %3782 = vmatpush1.msra.mxu0 0.0
    %3783 = vmatprep.subr.mxu0 0.0
    %3784 = vmatpush1.msra.mxu0 0.0
    %3785 = vmatprep.subr.mxu0 0.0
    %3786 = vmatpush1.msra.mxu0 0.0
    %3787 = vmatprep.subr.mxu0 0.0
    %3788 = vmatpush1.msra.mxu0 0.0
    %3789 = vmatprep.mubr.f32.mxu0 0.0
    %3790 = vmatmul.mubr.f32.gmra.mrb[0].mxu0 %v3724
    %v3791 = vpop.f32.mrb[0].mxu0
    %v3792 = vadd.f32 %v205, %v3791
    %v3793 = vpop.f32.mrb[0].mxu0
    %v3794 = vadd.f32 %v209, %v3793
    %3795 = vdwg.mxu0
    %3796 = vmatprep.subr.mxu0 %v225
    %3797 = vmatpush1.msra.mxu0 %v224
    %3798 = vmatprep.subr.mxu0 %v229
    %3799 = vmatpush1.msra.mxu0 %v228
    %3800 = vmatprep.subr.mxu0 %v233
    %3801 = vmatpush1.msra.mxu0 %v232
    %3802 = vmatprep.subr.mxu0 %v237
    %3803 = vmatpush1.msra.mxu0 %v236
    %3804 = vmatprep.subr.mxu0 %v241
    %3805 = vmatpush1.msra.mxu0 %v240
    %3806 = vmatprep.subr.mxu0 %v245
    %3807 = vmatpush1.msra.mxu0 %v244
    %3808 = vmatprep.subr.mxu0 %v249
    %3809 = vmatpush1.msra.mxu0 %v248
    %3810 = vmatprep.subr.mxu0 %v253
    %3811 = vmatpush1.msra.mxu0 %v252
    %3812 = vmatprep.subr.mxu0 %v257
    %3813 = vmatpush1.msra.mxu0 %v256
    %3814 = vmatprep.subr.mxu0 %v261
    %3815 = vmatpush1.msra.mxu0 %v260
    %3816 = vmatprep.subr.mxu0 %v265
    %3817 = vmatpush1.msra.mxu0 %v264
    %3818 = vmatprep.subr.mxu0 %v269
    %3819 = vmatpush1.msra.mxu0 %v268
    %3820 = vmatprep.subr.mxu0 %v273
    %3821 = vmatpush1.msra.mxu0 %v272
    %3822 = vmatprep.subr.mxu0 %v277
    %3823 = vmatpush1.msra.mxu0 %v276
    %3824 = vmatprep.subr.mxu0 %v281
    %3825 = vmatpush1.msra.mxu0 %v280
    %3826 = vmatprep.subr.mxu0 %v285
    %3827 = vmatpush1.msra.mxu0 %v284
    %3828 = vmatprep.subr.mxu0 0.0
    %3829 = vmatpush1.msra.mxu0 0.0
    %3830 = vmatprep.subr.mxu0 0.0
    %3831 = vmatpush1.msra.mxu0 0.0
    %3832 = vmatprep.subr.mxu0 0.0
    %3833 = vmatpush1.msra.mxu0 0.0
    %3834 = vmatprep.subr.mxu0 0.0
    %3835 = vmatpush1.msra.mxu0 0.0
    %3836 = vmatprep.subr.mxu0 0.0
    %3837 = vmatpush1.msra.mxu0 0.0
    %3838 = vmatprep.subr.mxu0 0.0
    %3839 = vmatpush1.msra.mxu0 0.0
    %3840 = vmatprep.subr.mxu0 0.0
    %3841 = vmatpush1.msra.mxu0 0.0
    %3842 = vmatprep.subr.mxu0 0.0
    %3843 = vmatpush1.msra.mxu0 0.0
    %3844 = vmatprep.subr.mxu0 0.0
    %3845 = vmatpush1.msra.mxu0 0.0
    %3846 = vmatprep.subr.mxu0 0.0
    %3847 = vmatpush1.msra.mxu0 0.0
    %3848 = vmatprep.subr.mxu0 0.0
    %3849 = vmatpush1.msra.mxu0 0.0
    %3850 = vmatprep.subr.mxu0 0.0
    %3851 = vmatpush1.msra.mxu0 0.0
    %3852 = vmatprep.subr.mxu0 0.0
    %3853 = vmatpush1.msra.mxu0 0.0
    %3854 = vmatprep.subr.mxu0 0.0
    %3855 = vmatpush1.msra.mxu0 0.0
    %3856 = vmatprep.subr.mxu0 0.0
    %3857 = vmatpush1.msra.mxu0 0.0
    %3858 = vmatprep.subr.mxu0 0.0
    %3859 = vmatpush1.msra.mxu0 0.0
    %3860 = vmatprep.mubr.f32.mxu0 0.0
    %3861 = vmatmul.mubr.f32.gmra.mrb[0].mxu0 %v3724
    %v3862 = vpop.f32.mrb[0].mxu0
    %v3863 = vadd.f32 %v213, %v3862
    %v3864 = vpop.f32.mrb[0].mxu0
    %v3865 = vadd.f32 %v217, %v3864
    %3866 = vdwg.mxu0
    %s3867 = smul.u32 7, 4
    %s3868 = smul.addr %s3867, 8
    %s3869 = scalar_lea.vmem [#allocation2], %s3868
    %v3870 = vld [vmem:[%s3869] sm:$0xff]
    %v3871 = vld [vmem:[%s3869 + $0x8] sm:$0xff]
    %v3872 = vld [vmem:[%s3869 + $0x10] sm:$0xff]
    %v3873 = vld [vmem:[%s3869 + $0x18] sm:$0xff]
    %3874 = vmatprep.subr.mxu0 %v436
    %3875 = vmatpush1.msra.mxu0 %v435
    %3876 = vmatprep.subr.mxu0 %v440
    %3877 = vmatpush1.msra.mxu0 %v439
    %3878 = vmatprep.subr.mxu0 %v444
    %3879 = vmatpush1.msra.mxu0 %v443
    %3880 = vmatprep.subr.mxu0 %v448
    %3881 = vmatpush1.msra.mxu0 %v447
    %3882 = vmatprep.subr.mxu0 %v452
    %3883 = vmatpush1.msra.mxu0 %v451
    %3884 = vmatprep.subr.mxu0 %v456
    %3885 = vmatpush1.msra.mxu0 %v455
    %3886 = vmatprep.subr.mxu0 %v460
    %3887 = vmatpush1.msra.mxu0 %v459
    %3888 = vmatprep.subr.mxu0 %v464
    %3889 = vmatpush1.msra.mxu0 %v463
    %3890 = vmatprep.subr.mxu0 %v468
    %3891 = vmatpush1.msra.mxu0 %v467
    %3892 = vmatprep.subr.mxu0 %v472
    %3893 = vmatpush1.msra.mxu0 %v471
    %3894 = vmatprep.subr.mxu0 %v476
    %3895 = vmatpush1.msra.mxu0 %v475
    %3896 = vmatprep.subr.mxu0 %v480
    %3897 = vmatpush1.msra.mxu0 %v479
    %3898 = vmatprep.subr.mxu0 %v484
    %3899 = vmatpush1.msra.mxu0 %v483
    %3900 = vmatprep.subr.mxu0 %v488
    %3901 = vmatpush1.msra.mxu0 %v487
    %3902 = vmatprep.subr.mxu0 %v492
    %3903 = vmatpush1.msra.mxu0 %v491
    %3904 = vmatprep.subr.mxu0 %v496
    %3905 = vmatpush1.msra.mxu0 %v495
    %3906 = vmatprep.subr.mxu0 0.0
    %3907 = vmatpush1.msra.mxu0 0.0
    %3908 = vmatprep.subr.mxu0 0.0
    %3909 = vmatpush1.msra.mxu0 0.0
    %3910 = vmatprep.subr.mxu0 0.0
    %3911 = vmatpush1.msra.mxu0 0.0
    %3912 = vmatprep.subr.mxu0 0.0
    %3913 = vmatpush1.msra.mxu0 0.0
    %3914 = vmatprep.subr.mxu0 0.0
    %3915 = vmatpush1.msra.mxu0 0.0
    %3916 = vmatprep.subr.mxu0 0.0
    %3917 = vmatpush1.msra.mxu0 0.0
    %3918 = vmatprep.subr.mxu0 0.0
    %3919 = vmatpush1.msra.mxu0 0.0
    %3920 = vmatprep.subr.mxu0 0.0
    %3921 = vmatpush1.msra.mxu0 0.0
    %3922 = vmatprep.subr.mxu0 0.0
    %3923 = vmatpush1.msra.mxu0 0.0
    %3924 = vmatprep.subr.mxu0 0.0
    %3925 = vmatpush1.msra.mxu0 0.0
    %3926 = vmatprep.subr.mxu0 0.0
    %3927 = vmatpush1.msra.mxu0 0.0
    %3928 = vmatprep.subr.mxu0 0.0
    %3929 = vmatpush1.msra.mxu0 0.0
    %3930 = vmatprep.subr.mxu0 0.0
    %3931 = vmatpush1.msra.mxu0 0.0
    %3932 = vmatprep.subr.mxu0 0.0
    %3933 = vmatpush1.msra.mxu0 0.0
    %3934 = vmatprep.subr.mxu0 0.0
    %3935 = vmatpush1.msra.mxu0 0.0
    %3936 = vmatprep.subr.mxu0 0.0
    %3937 = vmatpush1.msra.mxu0 0.0
    %3938 = vmatprep.mubr.f32.mxu0 0.0
    %3939 = vmatmul.mubr.f32.gmra.mrb[0].mxu0 %v3564
    %v3940 = vpop.f32.mrb[0].mxu0
    %v3941 = vadd.f32 0.0, %v3940
    %v3942 = vpop.f32.mrb[0].mxu0
    %v3943 = vadd.f32 0.0, %v3942
    %3944 = vdwg.mxu0
    %3945 = vmatprep.subr.mxu0 %v438
    %3946 = vmatpush1.msra.mxu0 %v437
    %3947 = vmatprep.subr.mxu0 %v442
    %3948 = vmatpush1.msra.mxu0 %v441
    %3949 = vmatprep.subr.mxu0 %v446
    %3950 = vmatpush1.msra.mxu0 %v445
    %3951 = vmatprep.subr.mxu0 %v450
    %3952 = vmatpush1.msra.mxu0 %v449
    %3953 = vmatprep.subr.mxu0 %v454
    %3954 = vmatpush1.msra.mxu0 %v453
    %3955 = vmatprep.subr.mxu0 %v458
    %3956 = vmatpush1.msra.mxu0 %v457
    %3957 = vmatprep.subr.mxu0 %v462
    %3958 = vmatpush1.msra.mxu0 %v461
    %3959 = vmatprep.subr.mxu0 %v466
    %3960 = vmatpush1.msra.mxu0 %v465
    %3961 = vmatprep.subr.mxu0 %v470
    %3962 = vmatpush1.msra.mxu0 %v469
    %3963 = vmatprep.subr.mxu0 %v474
    %3964 = vmatpush1.msra.mxu0 %v473
    %3965 = vmatprep.subr.mxu0 %v478
    %3966 = vmatpush1.msra.mxu0 %v477
    %3967 = vmatprep.subr.mxu0 %v482
    %3968 = vmatpush1.msra.mxu0 %v481
    %3969 = vmatprep.subr.mxu0 %v486
    %3970 = vmatpush1.msra.mxu0 %v485
    %3971 = vmatprep.subr.mxu0 %v490
    %3972 = vmatpush1.msra.mxu0 %v489
    %3973 = vmatprep.subr.mxu0 %v494
    %3974 = vmatpush1.msra.mxu0 %v493
    %3975 = vmatprep.subr.mxu0 %v498
    %3976 = vmatpush1.msra.mxu0 %v497
    %3977 = vmatprep.subr.mxu0 0.0
    %3978 = vmatpush1.msra.mxu0 0.0
    %3979 = vmatprep.subr.mxu0 0.0
    %3980 = vmatpush1.msra.mxu0 0.0
    %3981 = vmatprep.subr.mxu0 0.0
    %3982 = vmatpush1.msra.mxu0 0.0
    %3983 = vmatprep.subr.mxu0 0.0
    %3984 = vmatpush1.msra.mxu0 0.0
    %3985 = vmatprep.subr.mxu0 0.0
    %3986 = vmatpush1.msra.mxu0 0.0
    %3987 = vmatprep.subr.mxu0 0.0
    %3988 = vmatpush1.msra.mxu0 0.0
    %3989 = vmatprep.subr.mxu0 0.0
    %3990 = vmatpush1.msra.mxu0 0.0
    %3991 = vmatprep.subr.mxu0 0.0
    %3992 = vmatpush1.msra.mxu0 0.0
    %3993 = vmatprep.subr.mxu0 0.0
    %3994 = vmatpush1.msra.mxu0 0.0
    %3995 = vmatprep.subr.mxu0 0.0
    %3996 = vmatpush1.msra.mxu0 0.0
    %3997 = vmatprep.subr.mxu0 0.0
    %3998 = vmatpush1.msra.mxu0 0.0
    %3999 = vmatprep.subr.mxu0 0.0
    %4000 = vmatpush1.msra.mxu0 0.0
    %4001 = vmatprep.subr.mxu0 0.0
    %4002 = vmatpush1.msra.mxu0 0.0
    %4003 = vmatprep.subr.mxu0 0.0
    %4004 = vmatpush1.msra.mxu0 0.0
    %4005 = vmatprep.subr.mxu0 0.0
    %4006 = vmatpush1.msra.mxu0 0.0
    %4007 = vmatprep.subr.mxu0 0.0
    %4008 = vmatpush1.msra.mxu0 0.0
    %4009 = vmatprep.mubr.f32.mxu0 0.0
    %4010 = vmatmul.mubr.f32.gmra.mrb[0].mxu0 %v3564
    %v4011 = vpop.f32.mrb[0].mxu0
    %v4012 = vadd.f32 0.0, %v4011
    %v4013 = vpop.f32.mrb[0].mxu0
    %v4014 = vadd.f32 0.0, %v4013
    %4015 = vdwg.mxu0
    %v4016 = vadd.f32 %v3870, %v3941
    %v4017 = vadd.f32 %v3871, %v3943
    %v4018 = vadd.f32 %v3872, %v4012
    %v4019 = vadd.f32 %v3873, %v4014
    %v4020 = vmul.f32 %v4016, 0.5
    %v4021 = vmul.f32 %v4017, 0.5
    %v4022 = vmul.f32 %v4018, 0.5
    %v4023 = vtanh.pop %v4020
    %v4024 = vtanh.pop %v4021
    %v4025 = vtanh.pop %v4022
    %v4026 = vmul.f32 %v4023, 0.5
    %v4027 = vmul.f32 %v4024, 0.5
    %v4028 = vmul.f32 %v4025, 0.5
    %v4029 = vadd.f32 %v4026, 0.5
    %v4030 = vadd.f32 %v4027, 0.5
    %v4031 = vadd.f32 %v4028, 0.5
    %v4032 = vtanh.pop %v4019
    %v4033 = vmul.f32 %v4030, %v3562
    %v4034 = vmul.f32 %v4029, %v4032
    %v4035 = vadd.f32 %v4033, %v4034
    %v4036 = vtanh.pop %v4035
    %v4037 = vmul.f32 %v4031, %v4036
    %4038 = vmatprep.subr.mxu0 %v664
    %4039 = vmatpush1.msra.mxu0 %v663
    %4040 = vmatprep.subr.mxu0 %v668
    %4041 = vmatpush1.msra.mxu0 %v667
    %4042 = vmatprep.subr.mxu0 %v672
    %4043 = vmatpush1.msra.mxu0 %v671
    %4044 = vmatprep.subr.mxu0 %v676
    %4045 = vmatpush1.msra.mxu0 %v675
    %4046 = vmatprep.subr.mxu0 %v680
    %4047 = vmatpush1.msra.mxu0 %v679
    %4048 = vmatprep.subr.mxu0 %v684
    %4049 = vmatpush1.msra.mxu0 %v683
    %4050 = vmatprep.subr.mxu0 %v688
    %4051 = vmatpush1.msra.mxu0 %v687
    %4052 = vmatprep.subr.mxu0 %v692
    %4053 = vmatpush1.msra.mxu0 %v691
    %4054 = vmatprep.subr.mxu0 %v696
    %4055 = vmatpush1.msra.mxu0 %v695
    %4056 = vmatprep.subr.mxu0 %v700
    %4057 = vmatpush1.msra.mxu0 %v699
    %4058 = vmatprep.subr.mxu0 %v704
    %4059 = vmatpush1.msra.mxu0 %v703
    %4060 = vmatprep.subr.mxu0 %v708
    %4061 = vmatpush1.msra.mxu0 %v707
    %4062 = vmatprep.subr.mxu0 %v712
    %4063 = vmatpush1.msra.mxu0 %v711
    %4064 = vmatprep.subr.mxu0 %v716
    %4065 = vmatpush1.msra.mxu0 %v715
    %4066 = vmatprep.subr.mxu0 %v720
    %4067 = vmatpush1.msra.mxu0 %v719
    %4068 = vmatprep.subr.mxu0 %v724
    %4069 = vmatpush1.msra.mxu0 %v723
    %4070 = vmatprep.subr.mxu0 0.0
    %4071 = vmatpush1.msra.mxu0 0.0
    %4072 = vmatprep.subr.mxu0 0.0
    %4073 = vmatpush1.msra.mxu0 0.0
    %4074 = vmatprep.subr.mxu0 0.0
    %4075 = vmatpush1.msra.mxu0 0.0
    %4076 = vmatprep.subr.mxu0 0.0
    %4077 = vmatpush1.msra.mxu0 0.0
    %4078 = vmatprep.subr.mxu0 0.0
    %4079 = vmatpush1.msra.mxu0 0.0
    %4080 = vmatprep.subr.mxu0 0.0
    %4081 = vmatpush1.msra.mxu0 0.0
    %4082 = vmatprep.subr.mxu0 0.0
    %4083 = vmatpush1.msra.mxu0 0.0
    %4084 = vmatprep.subr.mxu0 0.0
    %4085 = vmatpush1.msra.mxu0 0.0
    %4086 = vmatprep.subr.mxu0 0.0
    %4087 = vmatpush1.msra.mxu0 0.0
    %4088 = vmatprep.subr.mxu0 0.0
    %4089 = vmatpush1.msra.mxu0 0.0
    %4090 = vmatprep.subr.mxu0 0.0
    %4091 = vmatpush1.msra.mxu0 0.0
    %4092 = vmatprep.subr.mxu0 0.0
    %4093 = vmatpush1.msra.mxu0 0.0
    %4094 = vmatprep.subr.mxu0 0.0
    %4095 = vmatpush1.msra.mxu0 0.0
    %4096 = vmatprep.subr.mxu0 0.0
    %4097 = vmatpush1.msra.mxu0 0.0
    %4098 = vmatprep.subr.mxu0 0.0
    %4099 = vmatpush1.msra.mxu0 0.0
    %4100 = vmatprep.subr.mxu0 0.0
    %4101 = vmatpush1.msra.mxu0 0.0
    %4102 = vmatprep.mubr.f32.mxu0 0.0
    %4103 = vmatmul.mubr.f32.gmra.mrb[0].mxu0 %v4037
    %v4104 = vpop.f32.mrb[0].mxu0
    %v4105 = vadd.f32 %v3792, %v4104
    %v4106 = vpop.f32.mrb[0].mxu0
    %v4107 = vadd.f32 %v3794, %v4106
    %4108 = vdwg.mxu0
    %4109 = vmatprep.subr.mxu0 %v666
    %4110 = vmatpush1.msra.mxu0 %v665
    %4111 = vmatprep.subr.mxu0 %v670
    %4112 = vmatpush1.msra.mxu0 %v669
    %4113 = vmatprep.subr.mxu0 %v674
    %4114 = vmatpush1.msra.mxu0 %v673
    %4115 = vmatprep.subr.mxu0 %v678
    %4116 = vmatpush1.msra.mxu0 %v677
    %4117 = vmatprep.subr.mxu0 %v682
    %4118 = vmatpush1.msra.mxu0 %v681
    %4119 = vmatprep.subr.mxu0 %v686
    %4120 = vmatpush1.msra.mxu0 %v685
    %4121 = vmatprep.subr.mxu0 %v690
    %4122 = vmatpush1.msra.mxu0 %v689
    %4123 = vmatprep.subr.mxu0 %v694
    %4124 = vmatpush1.msra.mxu0 %v693
    %4125 = vmatprep.subr.mxu0 %v698
    %4126 = vmatpush1.msra.mxu0 %v697
    %4127 = vmatprep.subr.mxu0 %v702
    %4128 = vmatpush1.msra.mxu0 %v701
    %4129 = vmatprep.subr.mxu0 %v706
    %4130 = vmatpush1.msra.mxu0 %v705
    %4131 = vmatprep.subr.mxu0 %v710
    %4132 = vmatpush1.msra.mxu0 %v709
    %4133 = vmatprep.subr.mxu0 %v714
    %4134 = vmatpush1.msra.mxu0 %v713
    %4135 = vmatprep.subr.mxu0 %v718
    %4136 = vmatpush1.msra.mxu0 %v717
    %4137 = vmatprep.subr.mxu0 %v722
    %4138 = vmatpush1.msra.mxu0 %v721
    %4139 = vmatprep.subr.mxu0 %v726
    %4140 = vmatpush1.msra.mxu0 %v725
    %4141 = vmatprep.subr.mxu0 0.0
    %4142 = vmatpush1.msra.mxu0 0.0
    %4143 = vmatprep.subr.mxu0 0.0
    %4144 = vmatpush1.msra.mxu0 0.0
    %4145 = vmatprep.subr.mxu0 0.0
    %4146 = vmatpush1.msra.mxu0 0.0
    %4147 = vmatprep.subr.mxu0 0.0
    %4148 = vmatpush1.msra.mxu0 0.0
    %4149 = vmatprep.subr.mxu0 0.0
    %4150 = vmatpush1.msra.mxu0 0.0
    %4151 = vmatprep.subr.mxu0 0.0
    %4152 = vmatpush1.msra.mxu0 0.0
    %4153 = vmatprep.subr.mxu0 0.0
    %4154 = vmatpush1.msra.mxu0 0.0
    %4155 = vmatprep.subr.mxu0 0.0
    %4156 = vmatpush1.msra.mxu0 0.0
    %4157 = vmatprep.subr.mxu0 0.0
    %4158 = vmatpush1.msra.mxu0 0.0
    %4159 = vmatprep.subr.mxu0 0.0
    %4160 = vmatpush1.msra.mxu0 0.0
    %4161 = vmatprep.subr.mxu0 0.0
    %4162 = vmatpush1.msra.mxu0 0.0
    %4163 = vmatprep.subr.mxu0 0.0
    %4164 = vmatpush1.msra.mxu0 0.0
    %4165 = vmatprep.subr.mxu0 0.0
    %4166 = vmatpush1.msra.mxu0 0.0
    %4167 = vmatprep.subr.mxu0 0.0
    %4168 = vmatpush1.msra.mxu0 0.0
    %4169 = vmatprep.subr.mxu0 0.0
    %4170 = vmatpush1.msra.mxu0 0.0
    %4171 = vmatprep.subr.mxu0 0.0
    %4172 = vmatpush1.msra.mxu0 0.0
    %4173 = vmatprep.mubr.f32.mxu0 0.0
    %4174 = vmatmul.mubr.f32.gmra.mrb[0].mxu0 %v4037
    %v4175 = vpop.f32.mrb[0].mxu0
    %v4176 = vadd.f32 %v3863, %v4175
    %v4177 = vpop.f32.mrb[0].mxu0
    %v4178 = vadd.f32 %v3865, %v4177
    %4179 = vdwg.mxu0
    %v4180 = vmul.f32 %v4105, 0.5
    %v4181 = vmul.f32 %v4107, 0.5
    %v4182 = vmul.f32 %v4176, 0.5
    %v4183 = vtanh.pop %v4180
    %v4184 = vtanh.pop %v4181
    %v4185 = vtanh.pop %v4182
    %v4186 = vmul.f32 %v4183, 0.5
    %v4187 = vmul.f32 %v4184, 0.5
    %v4188 = vmul.f32 %v4185, 0.5
    %v4189 = vadd.f32 %v4186, 0.5
    %v4190 = vadd.f32 %v4187, 0.5
    %v4191 = vadd.f32 %v4188, 0.5
    %v4192 = vtanh.pop %v4178
    %v4193 = vmul.f32 %v4190, %v3722
    %v4194 = vmul.f32 %v4189, %v4192
    %v4195 = vadd.f32 %v4193, %v4194
    %v4196 = vtanh.pop %v4195
    %v4197 = vmul.f32 %v4191, %v4196
    %v4198 = vld [vmem:[#allocation14] sm:$0xff]
    %v4199 = vld [vmem:[#allocation14 + $0x8] sm:$0xff]
    %v4200 = vld [vmem:[#allocation14 + $0x10] sm:$0xff]
    %v4201 = vld [vmem:[#allocation14 + $0x18] sm:$0xff]
    %v4202 = vld [vmem:[#allocation14 + $0x20] sm:$0xff]
    %v4203 = vld [vmem:[#allocation14 + $0x28] sm:$0xff]
    %v4204 = vld [vmem:[#allocation14 + $0x30] sm:$0xff]
    %v4205 = vld [vmem:[#allocation14 + $0x38] sm:$0xff]
    %v4206 = vld [vmem:[#allocation14 + $0x40] sm:$0xff]
    %v4207 = vld [vmem:[#allocation14 + $0x48] sm:$0xff]
    %v4208 = vld [vmem:[#allocation14 + $0x50] sm:$0xff]
    %v4209 = vld [vmem:[#allocation14 + $0x58] sm:$0xff]
    %v4210 = vld [vmem:[#allocation14 + $0x60] sm:$0xff]
    %v4211 = vld [vmem:[#allocation14 + $0x68] sm:$0xff]
    %v4212 = vld [vmem:[#allocation14 + $0x70] sm:$0xff]
    %v4213 = vld [vmem:[#allocation14 + $0x78] sm:$0xff]
    %v4214 = vld [vmem:[#allocation16] sm:$0x1]
    %v4216 = vlaneseq
    %v4217 = vshrl.u32 %v4216, 7
    %v4218 = vsub.s32 0, %v4217
    %v4219 = vrot.slane %v4214, %v4218
    %4221 = vmatprep.subr.mxu0 0.0
    %4222 = vmatpush1.msra.mxu0 %v4198
    %4223 = vmatprep.subr.mxu0 0.0
    %4224 = vmatpush1.msra.mxu0 %v4199
    %4225 = vmatprep.subr.mxu0 0.0
    %4226 = vmatpush1.msra.mxu0 %v4200
    %4227 = vmatprep.subr.mxu0 0.0
    %4228 = vmatpush1.msra.mxu0 %v4201
    %4229 = vmatprep.subr.mxu0 0.0
    %4230 = vmatpush1.msra.mxu0 %v4202
    %4231 = vmatprep.subr.mxu0 0.0
    %4232 = vmatpush1.msra.mxu0 %v4203
    %4233 = vmatprep.subr.mxu0 0.0
    %4234 = vmatpush1.msra.mxu0 %v4204
    %4235 = vmatprep.subr.mxu0 0.0
    %4236 = vmatpush1.msra.mxu0 %v4205
    %4237 = vmatprep.subr.mxu0 0.0
    %4238 = vmatpush1.msra.mxu0 %v4206
    %4239 = vmatprep.subr.mxu0 0.0
    %4240 = vmatpush1.msra.mxu0 %v4207
    %4241 = vmatprep.subr.mxu0 0.0
    %4242 = vmatpush1.msra.mxu0 %v4208
    %4243 = vmatprep.subr.mxu0 0.0
    %4244 = vmatpush1.msra.mxu0 %v4209
    %4245 = vmatprep.subr.mxu0 0.0
    %4246 = vmatpush1.msra.mxu0 %v4210
    %4247 = vmatprep.subr.mxu0 0.0
    %4248 = vmatpush1.msra.mxu0 %v4211
    %4249 = vmatprep.subr.mxu0 0.0
    %4250 = vmatpush1.msra.mxu0 %v4212
    %4251 = vmatprep.subr.mxu0 0.0
    %4252 = vmatpush1.msra.mxu0 %v4213
    %4253 = vmatprep.subr.mxu0 0.0
    %4254 = vmatpush1.msra.mxu0 0.0
    %4255 = vmatprep.subr.mxu0 0.0
    %4256 = vmatpush1.msra.mxu0 0.0
    %4257 = vmatprep.subr.mxu0 0.0
    %4258 = vmatpush1.msra.mxu0 0.0
    %4259 = vmatprep.subr.mxu0 0.0
    %4260 = vmatpush1.msra.mxu0 0.0
    %4261 = vmatprep.subr.mxu0 0.0
    %4262 = vmatpush1.msra.mxu0 0.0
    %4263 = vmatprep.subr.mxu0 0.0
    %4264 = vmatpush1.msra.mxu0 0.0
    %4265 = vmatprep.subr.mxu0 0.0
    %4266 = vmatpush1.msra.mxu0 0.0
    %4267 = vmatprep.subr.mxu0 0.0
    %4268 = vmatpush1.msra.mxu0 0.0
    %4269 = vmatprep.subr.mxu0 0.0
    %4270 = vmatpush1.msra.mxu0 0.0
    %4271 = vmatprep.subr.mxu0 0.0
    %4272 = vmatpush1.msra.mxu0 0.0
    %4273 = vmatprep.subr.mxu0 0.0
    %4274 = vmatpush1.msra.mxu0 0.0
    %4275 = vmatprep.subr.mxu0 0.0
    %4276 = vmatpush1.msra.mxu0 0.0
    %4277 = vmatprep.subr.mxu0 0.0
    %4278 = vmatpush1.msra.mxu0 0.0
    %4279 = vmatprep.subr.mxu0 0.0
    %4280 = vmatpush1.msra.mxu0 0.0
    %4281 = vmatprep.subr.mxu0 0.0
    %4282 = vmatpush1.msra.mxu0 0.0
    %4283 = vmatprep.subr.mxu0 0.0
    %4284 = vmatpush1.msra.mxu0 0.0
    %4285 = vmatprep.mubr.f32.mxu0 0.0
    %4286 = vmatmul.mubr.f32.gmra.mrb[0].mxu0 %v4197
    %v4287 = vpop.f32.mrb[0].mxu0
    %v4288 = vadd.f32 %v4219, %v4287
    %v4289 = vpop.f32.mrb[0].mxu0
    %4290 = vdwg.mxu0
    %4291 = vmatprep.subr.mxu0 %v223
    %4292 = vmatpush1.msra.mxu0 %v222
    %4293 = vmatprep.subr.mxu0 %v227
    %4294 = vmatpush1.msra.mxu0 %v226
    %4295 = vmatprep.subr.mxu0 %v231
    %4296 = vmatpush1.msra.mxu0 %v230
    %4297 = vmatprep.subr.mxu0 %v235
    %4298 = vmatpush1.msra.mxu0 %v234
    %4299 = vmatprep.subr.mxu0 %v239
    %4300 = vmatpush1.msra.mxu0 %v238
    %4301 = vmatprep.subr.mxu0 %v243
    %4302 = vmatpush1.msra.mxu0 %v242
    %4303 = vmatprep.subr.mxu0 %v247
    %4304 = vmatpush1.msra.mxu0 %v246
    %4305 = vmatprep.subr.mxu0 %v251
    %4306 = vmatpush1.msra.mxu0 %v250
    %4307 = vmatprep.subr.mxu0 %v255
    %4308 = vmatpush1.msra.mxu0 %v254
    %4309 = vmatprep.subr.mxu0 %v259
    %4310 = vmatpush1.msra.mxu0 %v258
    %4311 = vmatprep.subr.mxu0 %v263
    %4312 = vmatpush1.msra.mxu0 %v262
    %4313 = vmatprep.subr.mxu0 %v267
    %4314 = vmatpush1.msra.mxu0 %v266
    %4315 = vmatprep.subr.mxu0 %v271
    %4316 = vmatpush1.msra.mxu0 %v270
    %4317 = vmatprep.subr.mxu0 %v275
    %4318 = vmatpush1.msra.mxu0 %v274
    %4319 = vmatprep.subr.mxu0 %v279
    %4320 = vmatpush1.msra.mxu0 %v278
    %4321 = vmatprep.subr.mxu0 %v283
    %4322 = vmatpush1.msra.mxu0 %v282
    %4323 = vmatprep.subr.mxu0 0.0
    %4324 = vmatpush1.msra.mxu0 0.0
    %4325 = vmatprep.subr.mxu0 0.0
    %4326 = vmatpush1.msra.mxu0 0.0
    %4327 = vmatprep.subr.mxu0 0.0
    %4328 = vmatpush1.msra.mxu0 0.0
    %4329 = vmatprep.subr.mxu0 0.0
    %4330 = vmatpush1.msra.mxu0 0.0
    %4331 = vmatprep.subr.mxu0 0.0
    %4332 = vmatpush1.msra.mxu0 0.0
    %4333 = vmatprep.subr.mxu0 0.0
    %4334 = vmatpush1.msra.mxu0 0.0
    %4335 = vmatprep.subr.mxu0 0.0
    %4336 = vmatpush1.msra.mxu0 0.0
    %4337 = vmatprep.subr.mxu0 0.0
    %4338 = vmatpush1.msra.mxu0 0.0
    %4339 = vmatprep.subr.mxu0 0.0
    %4340 = vmatpush1.msra.mxu0 0.0
    %4341 = vmatprep.subr.mxu0 0.0
    %4342 = vmatpush1.msra.mxu0 0.0
    %4343 = vmatprep.subr.mxu0 0.0
    %4344 = vmatpush1.msra.mxu0 0.0
    %4345 = vmatprep.subr.mxu0 0.0
    %4346 = vmatpush1.msra.mxu0 0.0
    %4347 = vmatprep.subr.mxu0 0.0
    %4348 = vmatpush1.msra.mxu0 0.0
    %4349 = vmatprep.subr.mxu0 0.0
    %4350 = vmatpush1.msra.mxu0 0.0
    %4351 = vmatprep.subr.mxu0 0.0
    %4352 = vmatpush1.msra.mxu0 0.0
    %4353 = vmatprep.subr.mxu0 0.0
    %4354 = vmatpush1.msra.mxu0 0.0
    %4355 = vmatprep.mubr.f32.mxu0 0.0
    %4356 = vmatmul.mubr.f32.gmra.mrb[0].mxu0 %v4197
    %v4357 = vpop.f32.mrb[0].mxu0
    %v4358 = vadd.f32 %v205, %v4357
    %v4359 = vpop.f32.mrb[0].mxu0
    %v4360 = vadd.f32 %v209, %v4359
    %4361 = vdwg.mxu0
    %4362 = vmatprep.subr.mxu0 %v225
    %4363 = vmatpush1.msra.mxu0 %v224
    %4364 = vmatprep.subr.mxu0 %v229
    %4365 = vmatpush1.msra.mxu0 %v228
    %4366 = vmatprep.subr.mxu0 %v233
    %4367 = vmatpush1.msra.mxu0 %v232
    %4368 = vmatprep.subr.mxu0 %v237
    %4369 = vmatpush1.msra.mxu0 %v236
    %4370 = vmatprep.subr.mxu0 %v241
    %4371 = vmatpush1.msra.mxu0 %v240
    %4372 = vmatprep.subr.mxu0 %v245
    %4373 = vmatpush1.msra.mxu0 %v244
    %4374 = vmatprep.subr.mxu0 %v249
    %4375 = vmatpush1.msra.mxu0 %v248
    %4376 = vmatprep.subr.mxu0 %v253
    %4377 = vmatpush1.msra.mxu0 %v252
    %4378 = vmatprep.subr.mxu0 %v257
    %4379 = vmatpush1.msra.mxu0 %v256
    %4380 = vmatprep.subr.mxu0 %v261
    %4381 = vmatpush1.msra.mxu0 %v260
    %4382 = vmatprep.subr.mxu0 %v265
    %4383 = vmatpush1.msra.mxu0 %v264
    %4384 = vmatprep.subr.mxu0 %v269
    %4385 = vmatpush1.msra.mxu0 %v268
    %4386 = vmatprep.subr.mxu0 %v273
    %4387 = vmatpush1.msra.mxu0 %v272
    %4388 = vmatprep.subr.mxu0 %v277
    %4389 = vmatpush1.msra.mxu0 %v276
    %4390 = vmatprep.subr.mxu0 %v281
    %4391 = vmatpush1.msra.mxu0 %v280
    %4392 = vmatprep.subr.mxu0 %v285
    %4393 = vmatpush1.msra.mxu0 %v284
    %4394 = vmatprep.subr.mxu0 0.0
    %4395 = vmatpush1.msra.mxu0 0.0
    %4396 = vmatprep.subr.mxu0 0.0
    %4397 = vmatpush1.msra.mxu0 0.0
    %4398 = vmatprep.subr.mxu0 0.0
    %4399 = vmatpush1.msra.mxu0 0.0
    %4400 = vmatprep.subr.mxu0 0.0
    %4401 = vmatpush1.msra.mxu0 0.0
    %4402 = vmatprep.subr.mxu0 0.0
    %4403 = vmatpush1.msra.mxu0 0.0
    %4404 = vmatprep.subr.mxu0 0.0
    %4405 = vmatpush1.msra.mxu0 0.0
    %4406 = vmatprep.subr.mxu0 0.0
    %4407 = vmatpush1.msra.mxu0 0.0
    %4408 = vmatprep.subr.mxu0 0.0
    %4409 = vmatpush1.msra.mxu0 0.0
    %4410 = vmatprep.subr.mxu0 0.0
    %4411 = vmatpush1.msra.mxu0 0.0
    %4412 = vmatprep.subr.mxu0 0.0
    %4413 = vmatpush1.msra.mxu0 0.0
    %4414 = vmatprep.subr.mxu0 0.0
    %4415 = vmatpush1.msra.mxu0 0.0
    %4416 = vmatprep.subr.mxu0 0.0
    %4417 = vmatpush1.msra.mxu0 0.0
    %4418 = vmatprep.subr.mxu0 0.0
    %4419 = vmatpush1.msra.mxu0 0.0
    %4420 = vmatprep.subr.mxu0 0.0
    %4421 = vmatpush1.msra.mxu0 0.0
    %4422 = vmatprep.subr.mxu0 0.0
    %4423 = vmatpush1.msra.mxu0 0.0
    %4424 = vmatprep.subr.mxu0 0.0
    %4425 = vmatpush1.msra.mxu0 0.0
    %4426 = vmatprep.mubr.f32.mxu0 0.0
    %4427 = vmatmul.mubr.f32.gmra.mrb[0].mxu0 %v4197
    %v4428 = vpop.f32.mrb[0].mxu0
    %v4429 = vadd.f32 %v213, %v4428
    %v4430 = vpop.f32.mrb[0].mxu0
    %v4431 = vadd.f32 %v217, %v4430
    %4432 = vdwg.mxu0
    %v4433 = vld [vmem:[#allocation5] sm:$0xff]
    %v4434 = vld [vmem:[#allocation5 + $0x8] sm:$0xff]
    %4435 = vmatprep.subr.mxu0 %v436
    %4436 = vmatpush1.msra.mxu0 %v435
    %4437 = vmatprep.subr.mxu0 %v440
    %4438 = vmatpush1.msra.mxu0 %v439
    %4439 = vmatprep.subr.mxu0 %v444
    %4440 = vmatpush1.msra.mxu0 %v443
    %4441 = vmatprep.subr.mxu0 %v448
    %4442 = vmatpush1.msra.mxu0 %v447
    %4443 = vmatprep.subr.mxu0 %v452
    %4444 = vmatpush1.msra.mxu0 %v451
    %4445 = vmatprep.subr.mxu0 %v456
    %4446 = vmatpush1.msra.mxu0 %v455
    %4447 = vmatprep.subr.mxu0 %v460
    %4448 = vmatpush1.msra.mxu0 %v459
    %4449 = vmatprep.subr.mxu0 %v464
    %4450 = vmatpush1.msra.mxu0 %v463
    %4451 = vmatprep.subr.mxu0 %v468
    %4452 = vmatpush1.msra.mxu0 %v467
    %4453 = vmatprep.subr.mxu0 %v472
    %4454 = vmatpush1.msra.mxu0 %v471
    %4455 = vmatprep.subr.mxu0 %v476
    %4456 = vmatpush1.msra.mxu0 %v475
    %4457 = vmatprep.subr.mxu0 %v480
    %4458 = vmatpush1.msra.mxu0 %v479
    %4459 = vmatprep.subr.mxu0 %v484
    %4460 = vmatpush1.msra.mxu0 %v483
    %4461 = vmatprep.subr.mxu0 %v488
    %4462 = vmatpush1.msra.mxu0 %v487
    %4463 = vmatprep.subr.mxu0 %v492
    %4464 = vmatpush1.msra.mxu0 %v491
    %4465 = vmatprep.subr.mxu0 %v496
    %4466 = vmatpush1.msra.mxu0 %v495
    %4467 = vmatprep.subr.mxu0 0.0
    %4468 = vmatpush1.msra.mxu0 0.0
    %4469 = vmatprep.subr.mxu0 0.0
    %4470 = vmatpush1.msra.mxu0 0.0
    %4471 = vmatprep.subr.mxu0 0.0
    %4472 = vmatpush1.msra.mxu0 0.0
    %4473 = vmatprep.subr.mxu0 0.0
    %4474 = vmatpush1.msra.mxu0 0.0
    %4475 = vmatprep.subr.mxu0 0.0
    %4476 = vmatpush1.msra.mxu0 0.0
    %4477 = vmatprep.subr.mxu0 0.0
    %4478 = vmatpush1.msra.mxu0 0.0
    %4479 = vmatprep.subr.mxu0 0.0
    %4480 = vmatpush1.msra.mxu0 0.0
    %4481 = vmatprep.subr.mxu0 0.0
    %4482 = vmatpush1.msra.mxu0 0.0
    %4483 = vmatprep.subr.mxu0 0.0
    %4484 = vmatpush1.msra.mxu0 0.0
    %4485 = vmatprep.subr.mxu0 0.0
    %4486 = vmatpush1.msra.mxu0 0.0
    %4487 = vmatprep.subr.mxu0 0.0
    %4488 = vmatpush1.msra.mxu0 0.0
    %4489 = vmatprep.subr.mxu0 0.0
    %4490 = vmatpush1.msra.mxu0 0.0
    %4491 = vmatprep.subr.mxu0 0.0
    %4492 = vmatpush1.msra.mxu0 0.0
    %4493 = vmatprep.subr.mxu0 0.0
    %4494 = vmatpush1.msra.mxu0 0.0
    %4495 = vmatprep.subr.mxu0 0.0
    %4496 = vmatpush1.msra.mxu0 0.0
    %4497 = vmatprep.subr.mxu0 0.0
    %4498 = vmatpush1.msra.mxu0 0.0
    %4499 = vmatprep.mubr.f32.mxu0 0.0
    %4500 = vmatmul.mubr.f32.gmra.mrb[0].mxu0 %v4037
    %v4501 = vpop.f32.mrb[0].mxu0
    %v4502 = vadd.f32 0.0, %v4501
    %v4503 = vpop.f32.mrb[0].mxu0
    %v4504 = vadd.f32 0.0, %v4503
    %4505 = vdwg.mxu0
    %4506 = vmatprep.subr.mxu0 %v438
    %4507 = vmatpush1.msra.mxu0 %v437
    %4508 = vmatprep.subr.mxu0 %v442
    %4509 = vmatpush1.msra.mxu0 %v441
    %4510 = vmatprep.subr.mxu0 %v446
    %4511 = vmatpush1.msra.mxu0 %v445
    %4512 = vmatprep.subr.mxu0 %v450
    %4513 = vmatpush1.msra.mxu0 %v449
    %4514 = vmatprep.subr.mxu0 %v454
    %4515 = vmatpush1.msra.mxu0 %v453
    %4516 = vmatprep.subr.mxu0 %v458
    %4517 = vmatpush1.msra.mxu0 %v457
    %4518 = vmatprep.subr.mxu0 %v462
    %4519 = vmatpush1.msra.mxu0 %v461
    %4520 = vmatprep.subr.mxu0 %v466
    %4521 = vmatpush1.msra.mxu0 %v465
    %4522 = vmatprep.subr.mxu0 %v470
    %4523 = vmatpush1.msra.mxu0 %v469
    %4524 = vmatprep.subr.mxu0 %v474
    %4525 = vmatpush1.msra.mxu0 %v473
    %4526 = vmatprep.subr.mxu0 %v478
    %4527 = vmatpush1.msra.mxu0 %v477
    %4528 = vmatprep.subr.mxu0 %v482
    %4529 = vmatpush1.msra.mxu0 %v481
    %4530 = vmatprep.subr.mxu0 %v486
    %4531 = vmatpush1.msra.mxu0 %v485
    %4532 = vmatprep.subr.mxu0 %v490
    %4533 = vmatpush1.msra.mxu0 %v489
    %4534 = vmatprep.subr.mxu0 %v494
    %4535 = vmatpush1.msra.mxu0 %v493
    %4536 = vmatprep.subr.mxu0 %v498
    %4537 = vmatpush1.msra.mxu0 %v497
    %4538 = vmatprep.subr.mxu0 0.0
    %4539 = vmatpush1.msra.mxu0 0.0
    %4540 = vmatprep.subr.mxu0 0.0
    %4541 = vmatpush1.msra.mxu0 0.0
    %4542 = vmatprep.subr.mxu0 0.0
    %4543 = vmatpush1.msra.mxu0 0.0
    %4544 = vmatprep.subr.mxu0 0.0
    %4545 = vmatpush1.msra.mxu0 0.0
    %4546 = vmatprep.subr.mxu0 0.0
    %4547 = vmatpush1.msra.mxu0 0.0
    %4548 = vmatprep.subr.mxu0 0.0
    %4549 = vmatpush1.msra.mxu0 0.0
    %4550 = vmatprep.subr.mxu0 0.0
    %4551 = vmatpush1.msra.mxu0 0.0
    %4552 = vmatprep.subr.mxu0 0.0
    %4553 = vmatpush1.msra.mxu0 0.0
    %4554 = vmatprep.subr.mxu0 0.0
    %4555 = vmatpush1.msra.mxu0 0.0
    %4556 = vmatprep.subr.mxu0 0.0
    %4557 = vmatpush1.msra.mxu0 0.0
    %4558 = vmatprep.subr.mxu0 0.0
    %4559 = vmatpush1.msra.mxu0 0.0
    %4560 = vmatprep.subr.mxu0 0.0
    %4561 = vmatpush1.msra.mxu0 0.0
    %4562 = vmatprep.subr.mxu0 0.0
    %4563 = vmatpush1.msra.mxu0 0.0
    %4564 = vmatprep.subr.mxu0 0.0
    %4565 = vmatpush1.msra.mxu0 0.0
    %4566 = vmatprep.subr.mxu0 0.0
    %4567 = vmatpush1.msra.mxu0 0.0
    %4568 = vmatprep.subr.mxu0 0.0
    %4569 = vmatpush1.msra.mxu0 0.0
    %4570 = vmatprep.mubr.f32.mxu0 0.0
    %4571 = vmatmul.mubr.f32.gmra.mrb[0].mxu0 %v4037
    %v4572 = vpop.f32.mrb[0].mxu0
    %v4573 = vadd.f32 0.0, %v4572
    %v4574 = vpop.f32.mrb[0].mxu0
    %v4575 = vadd.f32 0.0, %v4574
    %4576 = vdwg.mxu0
    %v4579 = vcombine.high %v4433, %v4433
    %v4580 = vcombine.high %v4434, %v4434
    %vm4581 = vcmask 31744
    %v4583 = vsel %vm4581, %v4288, 0
    %vm4585 = vcmask 1043456
    %v4586 = vsel %vm4585, %v4433, 0
    %v4588 = vsel %vm4585, %v4579, 0
    %v4590 = vsel %vm4585, %v4434, 0
    %v4592 = vsel %vm4585, %v4580, 0
    %4594 = vmatprep.subr.mxu0 %v4588
    %4595 = vmatpush1.msra.mxu0 %v4586
    %4596 = vmatprep.subr.mxu0 0.0
    %4597 = vmatpush1.msra.mxu0 0.0
    %4598 = vmatprep.subr.mxu0 0.0
    %4599 = vmatpush1.msra.mxu0 0.0
    %4600 = vmatprep.subr.mxu0 0.0
    %4601 = vmatpush1.msra.mxu0 0.0
    %4602 = vmatprep.subr.mxu0 0.0
    %4603 = vmatpush1.msra.mxu0 0.0
    %4604 = vmatprep.subr.mxu0 0.0
    %4605 = vmatpush1.msra.mxu0 0.0
    %4606 = vmatprep.subr.mxu0 0.0
    %4607 = vmatpush1.msra.mxu0 0.0
    %4608 = vmatprep.subr.mxu0 0.0
    %4609 = vmatpush1.msra.mxu0 0.0
    %4610 = vmatprep.subr.mxu0 0.0
    %4611 = vmatpush1.msra.mxu0 0.0
    %4612 = vmatprep.subr.mxu0 0.0
    %4613 = vmatpush1.msra.mxu0 0.0
    %4614 = vmatprep.subr.mxu0 0.0
    %4615 = vmatpush1.msra.mxu0 0.0
    %4616 = vmatprep.subr.mxu0 0.0
    %4617 = vmatpush1.msra.mxu0 0.0
    %4618 = vmatprep.subr.mxu0 0.0
    %4619 = vmatpush1.msra.mxu0 0.0
    %4620 = vmatprep.subr.mxu0 0.0
    %4621 = vmatpush1.msra.mxu0 0.0
    %4622 = vmatprep.subr.mxu0 0.0
    %4623 = vmatpush1.msra.mxu0 0.0
    %4624 = vmatprep.subr.mxu0 0.0
    %4625 = vmatpush1.msra.mxu0 0.0
    %4626 = vmatprep.subr.mxu0 0.0
    %4627 = vmatpush1.msra.mxu0 0.0
    %4628 = vmatprep.subr.mxu0 0.0
    %4629 = vmatpush1.msra.mxu0 0.0
    %4630 = vmatprep.subr.mxu0 0.0
    %4631 = vmatpush1.msra.mxu0 0.0
    %4632 = vmatprep.subr.mxu0 0.0
    %4633 = vmatpush1.msra.mxu0 0.0
    %4634 = vmatprep.subr.mxu0 0.0
    %4635 = vmatpush1.msra.mxu0 0.0
    %4636 = vmatprep.subr.mxu0 0.0
    %4637 = vmatpush1.msra.mxu0 0.0
    %4638 = vmatprep.subr.mxu0 0.0
    %4639 = vmatpush1.msra.mxu0 0.0
    %4640 = vmatprep.subr.mxu0 0.0
    %4641 = vmatpush1.msra.mxu0 0.0
    %4642 = vmatprep.subr.mxu0 0.0
    %4643 = vmatpush1.msra.mxu0 0.0
    %4644 = vmatprep.subr.mxu0 0.0
    %4645 = vmatpush1.msra.mxu0 0.0
    %4646 = vmatprep.subr.mxu0 0.0
    %4647 = vmatpush1.msra.mxu0 0.0
    %4648 = vmatprep.subr.mxu0 0.0
    %4649 = vmatpush1.msra.mxu0 0.0
    %4650 = vmatprep.subr.mxu0 0.0
    %4651 = vmatpush1.msra.mxu0 0.0
    %4652 = vmatprep.subr.mxu0 0.0
    %4653 = vmatpush1.msra.mxu0 0.0
    %4654 = vmatprep.subr.mxu0 0.0
    %4655 = vmatpush1.msra.mxu0 0.0
    %4656 = vmatprep.subr.mxu0 0.0
    %4657 = vmatpush1.msra.mxu0 0.0
    %4658 = vmatprep.mubr.f32.mxu0 0.0
    %4659 = vmatmul.mubr.f32.gmra.mrb[0].mxu0 %v4583
    %v4660 = vpop.f32.mrb[0].mxu0
    %v4661 = vadd.f32 %v4502, %v4660
    %v4662 = vpop.f32.mrb[0].mxu0
    %v4663 = vadd.f32 %v4504, %v4662
    %4664 = vdwg.mxu0
    %4665 = vmatprep.subr.mxu0 %v4592
    %4666 = vmatpush1.msra.mxu0 %v4590
    %4667 = vmatprep.subr.mxu0 0.0
    %4668 = vmatpush1.msra.mxu0 0.0
    %4669 = vmatprep.subr.mxu0 0.0
    %4670 = vmatpush1.msra.mxu0 0.0
    %4671 = vmatprep.subr.mxu0 0.0
    %4672 = vmatpush1.msra.mxu0 0.0
    %4673 = vmatprep.subr.mxu0 0.0
    %4674 = vmatpush1.msra.mxu0 0.0
    %4675 = vmatprep.subr.mxu0 0.0
    %4676 = vmatpush1.msra.mxu0 0.0
    %4677 = vmatprep.subr.mxu0 0.0
    %4678 = vmatpush1.msra.mxu0 0.0
    %4679 = vmatprep.subr.mxu0 0.0
    %4680 = vmatpush1.msra.mxu0 0.0
    %4681 = vmatprep.subr.mxu0 0.0
    %4682 = vmatpush1.msra.mxu0 0.0
    %4683 = vmatprep.subr.mxu0 0.0
    %4684 = vmatpush1.msra.mxu0 0.0
    %4685 = vmatprep.subr.mxu0 0.0
    %4686 = vmatpush1.msra.mxu0 0.0
    %4687 = vmatprep.subr.mxu0 0.0
    %4688 = vmatpush1.msra.mxu0 0.0
    %4689 = vmatprep.subr.mxu0 0.0
    %4690 = vmatpush1.msra.mxu0 0.0
    %4691 = vmatprep.subr.mxu0 0.0
    %4692 = vmatpush1.msra.mxu0 0.0
    %4693 = vmatprep.subr.mxu0 0.0
    %4694 = vmatpush1.msra.mxu0 0.0
    %4695 = vmatprep.subr.mxu0 0.0
    %4696 = vmatpush1.msra.mxu0 0.0
    %4697 = vmatprep.subr.mxu0 0.0
    %4698 = vmatpush1.msra.mxu0 0.0
    %4699 = vmatprep.subr.mxu0 0.0
    %4700 = vmatpush1.msra.mxu0 0.0
    %4701 = vmatprep.subr.mxu0 0.0
    %4702 = vmatpush1.msra.mxu0 0.0
    %4703 = vmatprep.subr.mxu0 0.0
    %4704 = vmatpush1.msra.mxu0 0.0
    %4705 = vmatprep.subr.mxu0 0.0
    %4706 = vmatpush1.msra.mxu0 0.0
    %4707 = vmatprep.subr.mxu0 0.0
    %4708 = vmatpush1.msra.mxu0 0.0
    %4709 = vmatprep.subr.mxu0 0.0
    %4710 = vmatpush1.msra.mxu0 0.0
    %4711 = vmatprep.subr.mxu0 0.0
    %4712 = vmatpush1.msra.mxu0 0.0
    %4713 = vmatprep.subr.mxu0 0.0
    %4714 = vmatpush1.msra.mxu0 0.0
    %4715 = vmatprep.subr.mxu0 0.0
    %4716 = vmatpush1.msra.mxu0 0.0
    %4717 = vmatprep.subr.mxu0 0.0
    %4718 = vmatpush1.msra.mxu0 0.0
    %4719 = vmatprep.subr.mxu0 0.0
    %4720 = vmatpush1.msra.mxu0 0.0
    %4721 = vmatprep.subr.mxu0 0.0
    %4722 = vmatpush1.msra.mxu0 0.0
    %4723 = vmatprep.subr.mxu0 0.0
    %4724 = vmatpush1.msra.mxu0 0.0
    %4725 = vmatprep.subr.mxu0 0.0
    %4726 = vmatpush1.msra.mxu0 0.0
    %4727 = vmatprep.subr.mxu0 0.0
    %4728 = vmatpush1.msra.mxu0 0.0
    %4729 = vmatprep.mubr.f32.mxu0 0.0
    %4730 = vmatmul.mubr.f32.gmra.mrb[0].mxu0 %v4583
    %v4731 = vpop.f32.mrb[0].mxu0
    %v4732 = vadd.f32 %v4573, %v4731
    %v4733 = vpop.f32.mrb[0].mxu0
    %v4734 = vadd.f32 %v4575, %v4733
    %4735 = vdwg.mxu0
    %v4736 = vadd.f32 %v4661, %v183
    %v4737 = vadd.f32 %v4663, %v187
    %v4738 = vadd.f32 %v4732, %v191
    %v4739 = vadd.f32 %v4734, %v195
    %v4740 = vmul.f32 %v4736, 0.5
    %v4741 = vmul.f32 %v4737, 0.5
    %v4742 = vmul.f32 %v4738, 0.5
    %v4743 = vtanh.pop %v4740
    %v4744 = vtanh.pop %v4741
    %v4745 = vtanh.pop %v4742
    %v4746 = vmul.f32 %v4743, 0.5
    %v4747 = vmul.f32 %v4744, 0.5
    %v4748 = vmul.f32 %v4745, 0.5
    %v4749 = vadd.f32 %v4746, 0.5
    %v4750 = vadd.f32 %v4747, 0.5
    %v4751 = vadd.f32 %v4748, 0.5
    %v4752 = vtanh.pop %v4739
    %v4753 = vmul.f32 %v4750, %v4035
    %v4754 = vmul.f32 %v4749, %v4752
    %v4755 = vadd.f32 %v4753, %v4754
    %v4756 = vtanh.pop %v4755
    %v4757 = vmul.f32 %v4751, %v4756
    %4758 = vmatprep.subr.mxu0 %v664
    %4759 = vmatpush1.msra.mxu0 %v663
    %4760 = vmatprep.subr.mxu0 %v668
    %4761 = vmatpush1.msra.mxu0 %v667
    %4762 = vmatprep.subr.mxu0 %v672
    %4763 = vmatpush1.msra.mxu0 %v671
    %4764 = vmatprep.subr.mxu0 %v676
    %4765 = vmatpush1.msra.mxu0 %v675
    %4766 = vmatprep.subr.mxu0 %v680
    %4767 = vmatpush1.msra.mxu0 %v679
    %4768 = vmatprep.subr.mxu0 %v684
    %4769 = vmatpush1.msra.mxu0 %v683
    %4770 = vmatprep.subr.mxu0 %v688
    %4771 = vmatpush1.msra.mxu0 %v687
    %4772 = vmatprep.subr.mxu0 %v692
    %4773 = vmatpush1.msra.mxu0 %v691
    %4774 = vmatprep.subr.mxu0 %v696
    %4775 = vmatpush1.msra.mxu0 %v695
    %4776 = vmatprep.subr.mxu0 %v700
    %4777 = vmatpush1.msra.mxu0 %v699
    %4778 = vmatprep.subr.mxu0 %v704
    %4779 = vmatpush1.msra.mxu0 %v703
    %4780 = vmatprep.subr.mxu0 %v708
    %4781 = vmatpush1.msra.mxu0 %v707
    %4782 = vmatprep.subr.mxu0 %v712
    %4783 = vmatpush1.msra.mxu0 %v711
    %4784 = vmatprep.subr.mxu0 %v716
    %4785 = vmatpush1.msra.mxu0 %v715
    %4786 = vmatprep.subr.mxu0 %v720
    %4787 = vmatpush1.msra.mxu0 %v719
    %4788 = vmatprep.subr.mxu0 %v724
    %4789 = vmatpush1.msra.mxu0 %v723
    %4790 = vmatprep.subr.mxu0 0.0
    %4791 = vmatpush1.msra.mxu0 0.0
    %4792 = vmatprep.subr.mxu0 0.0
    %4793 = vmatpush1.msra.mxu0 0.0
    %4794 = vmatprep.subr.mxu0 0.0
    %4795 = vmatpush1.msra.mxu0 0.0
    %4796 = vmatprep.subr.mxu0 0.0
    %4797 = vmatpush1.msra.mxu0 0.0
    %4798 = vmatprep.subr.mxu0 0.0
    %4799 = vmatpush1.msra.mxu0 0.0
    %4800 = vmatprep.subr.mxu0 0.0
    %4801 = vmatpush1.msra.mxu0 0.0
    %4802 = vmatprep.subr.mxu0 0.0
    %4803 = vmatpush1.msra.mxu0 0.0
    %4804 = vmatprep.subr.mxu0 0.0
    %4805 = vmatpush1.msra.mxu0 0.0
    %4806 = vmatprep.subr.mxu0 0.0
    %4807 = vmatpush1.msra.mxu0 0.0
    %4808 = vmatprep.subr.mxu0 0.0
    %4809 = vmatpush1.msra.mxu0 0.0
    %4810 = vmatprep.subr.mxu0 0.0
    %4811 = vmatpush1.msra.mxu0 0.0
    %4812 = vmatprep.subr.mxu0 0.0
    %4813 = vmatpush1.msra.mxu0 0.0
    %4814 = vmatprep.subr.mxu0 0.0
    %4815 = vmatpush1.msra.mxu0 0.0
    %4816 = vmatprep.subr.mxu0 0.0
    %4817 = vmatpush1.msra.mxu0 0.0
    %4818 = vmatprep.subr.mxu0 0.0
    %4819 = vmatpush1.msra.mxu0 0.0
    %4820 = vmatprep.subr.mxu0 0.0
    %4821 = vmatpush1.msra.mxu0 0.0
    %4822 = vmatprep.mubr.f32.mxu0 0.0
    %4823 = vmatmul.mubr.f32.gmra.mrb[0].mxu0 %v4757
    %v4824 = vpop.f32.mrb[0].mxu0
    %v4825 = vadd.f32 %v4358, %v4824
    %v4826 = vpop.f32.mrb[0].mxu0
    %v4827 = vadd.f32 %v4360, %v4826
    %4828 = vdwg.mxu0
    %4829 = vmatprep.subr.mxu0 %v666
    %4830 = vmatpush1.msra.mxu0 %v665
    %4831 = vmatprep.subr.mxu0 %v670
    %4832 = vmatpush1.msra.mxu0 %v669
    %4833 = vmatprep.subr.mxu0 %v674
    %4834 = vmatpush1.msra.mxu0 %v673
    %4835 = vmatprep.subr.mxu0 %v678
    %4836 = vmatpush1.msra.mxu0 %v677
    %4837 = vmatprep.subr.mxu0 %v682
    %4838 = vmatpush1.msra.mxu0 %v681
    %4839 = vmatprep.subr.mxu0 %v686
    %4840 = vmatpush1.msra.mxu0 %v685
    %4841 = vmatprep.subr.mxu0 %v690
    %4842 = vmatpush1.msra.mxu0 %v689
    %4843 = vmatprep.subr.mxu0 %v694
    %4844 = vmatpush1.msra.mxu0 %v693
    %4845 = vmatprep.subr.mxu0 %v698
    %4846 = vmatpush1.msra.mxu0 %v697
    %4847 = vmatprep.subr.mxu0 %v702
    %4848 = vmatpush1.msra.mxu0 %v701
    %4849 = vmatprep.subr.mxu0 %v706
    %4850 = vmatpush1.msra.mxu0 %v705
    %4851 = vmatprep.subr.mxu0 %v710
    %4852 = vmatpush1.msra.mxu0 %v709
    %4853 = vmatprep.subr.mxu0 %v714
    %4854 = vmatpush1.msra.mxu0 %v713
    %4855 = vmatprep.subr.mxu0 %v718
    %4856 = vmatpush1.msra.mxu0 %v717
    %4857 = vmatprep.subr.mxu0 %v722
    %4858 = vmatpush1.msra.mxu0 %v721
    %4859 = vmatprep.subr.mxu0 %v726
    %4860 = vmatpush1.msra.mxu0 %v725
    %4861 = vmatprep.subr.mxu0 0.0
    %4862 = vmatpush1.msra.mxu0 0.0
    %4863 = vmatprep.subr.mxu0 0.0
    %4864 = vmatpush1.msra.mxu0 0.0
    %4865 = vmatprep.subr.mxu0 0.0
    %4866 = vmatpush1.msra.mxu0 0.0
    %4867 = vmatprep.subr.mxu0 0.0
    %4868 = vmatpush1.msra.mxu0 0.0
    %4869 = vmatprep.subr.mxu0 0.0
    %4870 = vmatpush1.msra.mxu0 0.0
    %4871 = vmatprep.subr.mxu0 0.0
    %4872 = vmatpush1.msra.mxu0 0.0
    %4873 = vmatprep.subr.mxu0 0.0
    %4874 = vmatpush1.msra.mxu0 0.0
    %4875 = vmatprep.subr.mxu0 0.0
    %4876 = vmatpush1.msra.mxu0 0.0
    %4877 = vmatprep.subr.mxu0 0.0
    %4878 = vmatpush1.msra.mxu0 0.0
    %4879 = vmatprep.subr.mxu0 0.0
    %4880 = vmatpush1.msra.mxu0 0.0
    %4881 = vmatprep.subr.mxu0 0.0
    %4882 = vmatpush1.msra.mxu0 0.0
    %4883 = vmatprep.subr.mxu0 0.0
    %4884 = vmatpush1.msra.mxu0 0.0
    %4885 = vmatprep.subr.mxu0 0.0
    %4886 = vmatpush1.msra.mxu0 0.0
    %4887 = vmatprep.subr.mxu0 0.0
    %4888 = vmatpush1.msra.mxu0 0.0
    %4889 = vmatprep.subr.mxu0 0.0
    %4890 = vmatpush1.msra.mxu0 0.0
    %4891 = vmatprep.subr.mxu0 0.0
    %4892 = vmatpush1.msra.mxu0 0.0
    %4893 = vmatprep.mubr.f32.mxu0 0.0
    %4894 = vmatmul.mubr.f32.gmra.mrb[0].mxu0 %v4757
    %v4895 = vpop.f32.mrb[0].mxu0
    %v4896 = vadd.f32 %v4429, %v4895
    %v4897 = vpop.f32.mrb[0].mxu0
    %v4898 = vadd.f32 %v4431, %v4897
    %4899 = vdwg.mxu0
    %v4900 = vmul.f32 %v4825, 0.5
    %v4901 = vmul.f32 %v4827, 0.5
    %v4902 = vmul.f32 %v4896, 0.5
    %v4903 = vtanh.pop %v4900
    %v4904 = vtanh.pop %v4901
    %v4905 = vtanh.pop %v4902
    %v4906 = vmul.f32 %v4903, 0.5
    %v4907 = vmul.f32 %v4904, 0.5
    %v4908 = vmul.f32 %v4905, 0.5
    %v4909 = vadd.f32 %v4906, 0.5
    %v4910 = vadd.f32 %v4907, 0.5
    %v4911 = vadd.f32 %v4908, 0.5
    %v4912 = vtanh.pop %v4898
    %v4913 = vmul.f32 %v4910, %v4195
    %v4914 = vmul.f32 %v4909, %v4912
    %v4915 = vadd.f32 %v4913, %v4914
    %v4916 = vtanh.pop %v4915
    %v4917 = vmul.f32 %v4911, %v4916
    %v4918 = vld [vmem:[#allocation17] sm:$0xff]
    %v4919 = vld [vmem:[#allocation17 + $0x8] sm:$0xff]
    %v4920 = vld [vmem:[#allocation17 + $0x10] sm:$0xff]
    %v4921 = vld [vmem:[#allocation17 + $0x18] sm:$0xff]
    %v4922 = vld [vmem:[#allocation17 + $0x20] sm:$0xff]
    %v4923 = vld [vmem:[#allocation17 + $0x28] sm:$0xff]
    %v4924 = vld [vmem:[#allocation17 + $0x30] sm:$0xff]
    %v4925 = vld [vmem:[#allocation17 + $0x38] sm:$0xff]
    %v4926 = vld [vmem:[#allocation17 + $0x40] sm:$0xff]
    %v4927 = vld [vmem:[#allocation17 + $0x48] sm:$0xff]
    %v4928 = vld [vmem:[#allocation17 + $0x50] sm:$0xff]
    %v4929 = vld [vmem:[#allocation17 + $0x58] sm:$0xff]
    %v4930 = vld [vmem:[#allocation17 + $0x60] sm:$0xff]
    %v4931 = vld [vmem:[#allocation17 + $0x68] sm:$0xff]
    %v4932 = vld [vmem:[#allocation17 + $0x70] sm:$0xff]
    %v4933 = vld [vmem:[#allocation17 + $0x78] sm:$0xff]
    %v4934 = vld [vmem:[#allocation19] sm:$0x1]
    %v4936 = vlaneseq
    %v4937 = vshrl.u32 %v4936, 7
    %v4938 = vsub.s32 0, %v4937
    %v4939 = vrot.slane %v4934, %v4938
    %4941 = vmatprep.subr.mxu0 0.0
    %4942 = vmatpush1.msra.mxu0 %v4918
    %4943 = vmatprep.subr.mxu0 0.0
    %4944 = vmatpush1.msra.mxu0 %v4919
    %4945 = vmatprep.subr.mxu0 0.0
    %4946 = vmatpush1.msra.mxu0 %v4920
    %4947 = vmatprep.subr.mxu0 0.0
    %4948 = vmatpush1.msra.mxu0 %v4921
    %4949 = vmatprep.subr.mxu0 0.0
    %4950 = vmatpush1.msra.mxu0 %v4922
    %4951 = vmatprep.subr.mxu0 0.0
    %4952 = vmatpush1.msra.mxu0 %v4923
    %4953 = vmatprep.subr.mxu0 0.0
    %4954 = vmatpush1.msra.mxu0 %v4924
    %4955 = vmatprep.subr.mxu0 0.0
    %4956 = vmatpush1.msra.mxu0 %v4925
    %4957 = vmatprep.subr.mxu0 0.0
    %4958 = vmatpush1.msra.mxu0 %v4926
    %4959 = vmatprep.subr.mxu0 0.0
    %4960 = vmatpush1.msra.mxu0 %v4927
    %4961 = vmatprep.subr.mxu0 0.0
    %4962 = vmatpush1.msra.mxu0 %v4928
    %4963 = vmatprep.subr.mxu0 0.0
    %4964 = vmatpush1.msra.mxu0 %v4929
    %4965 = vmatprep.subr.mxu0 0.0
    %4966 = vmatpush1.msra.mxu0 %v4930
    %4967 = vmatprep.subr.mxu0 0.0
    %4968 = vmatpush1.msra.mxu0 %v4931
    %4969 = vmatprep.subr.mxu0 0.0
    %4970 = vmatpush1.msra.mxu0 %v4932
    %4971 = vmatprep.subr.mxu0 0.0
    %4972 = vmatpush1.msra.mxu0 %v4933
    %4973 = vmatprep.subr.mxu0 0.0
    %4974 = vmatpush1.msra.mxu0 0.0
    %4975 = vmatprep.subr.mxu0 0.0
    %4976 = vmatpush1.msra.mxu0 0.0
    %4977 = vmatprep.subr.mxu0 0.0
    %4978 = vmatpush1.msra.mxu0 0.0
    %4979 = vmatprep.subr.mxu0 0.0
    %4980 = vmatpush1.msra.mxu0 0.0
    %4981 = vmatprep.subr.mxu0 0.0
    %4982 = vmatpush1.msra.mxu0 0.0
    %4983 = vmatprep.subr.mxu0 0.0
    %4984 = vmatpush1.msra.mxu0 0.0
    %4985 = vmatprep.subr.mxu0 0.0
    %4986 = vmatpush1.msra.mxu0 0.0
    %4987 = vmatprep.subr.mxu0 0.0
    %4988 = vmatpush1.msra.mxu0 0.0
    %4989 = vmatprep.subr.mxu0 0.0
    %4990 = vmatpush1.msra.mxu0 0.0
    %4991 = vmatprep.subr.mxu0 0.0
    %4992 = vmatpush1.msra.mxu0 0.0
    %4993 = vmatprep.subr.mxu0 0.0
    %4994 = vmatpush1.msra.mxu0 0.0
    %4995 = vmatprep.subr.mxu0 0.0
    %4996 = vmatpush1.msra.mxu0 0.0
    %4997 = vmatprep.subr.mxu0 0.0
    %4998 = vmatpush1.msra.mxu0 0.0
    %4999 = vmatprep.subr.mxu0 0.0
    %5000 = vmatpush1.msra.mxu0 0.0
    %5001 = vmatprep.subr.mxu0 0.0
    %5002 = vmatpush1.msra.mxu0 0.0
    %5003 = vmatprep.subr.mxu0 0.0
    %5004 = vmatpush1.msra.mxu0 0.0
    %5005 = vmatprep.mubr.f32.mxu0 0.0
    %5006 = vmatmul.mubr.f32.gmra.mrb[0].mxu0 %v4917
    %v5007 = vpop.f32.mrb[0].mxu0
    %v5008 = vadd.f32 %v4939, %v5007
    %v5009 = vpop.f32.mrb[0].mxu0
    %5010 = vdwg.mxu0
    %vm5011 = vcmask 15360
    %5012 = vst.msk [vmem:[#allocation20] sm:$0xff] %vm5011, %v5008
    // Predicated region
    $region90: #{tpu_custom_call.1} parent=1 // pred_check
      _
    $region91: #{tpu_custom_call.1} parent=1 // pred_check_branch
      %5014 = sbr.rel (0) target = $region93
    $region92: #{tpu_custom_call.1} parent=1 // pred_region
      %s5016 = ssub.s32 128, 128
      %5017 = vsyncadd [#allocation4], %s5016
      %s5019 = sshll.u32 [#allocation20], 4
      %s5020 = int_to_ptr.vmem [resolvable:$true] %s5019
      %5022 = dma.vmem_to_hbm [thread:$0]  %s5020, 128, %s11, [#allocation4]
    $region93: #{tpu_custom_call.1} parent=1 // pred_fallthru
      _
    // Predicated region
    $region94: #{tpu_custom_call.1} parent=1 // pred_check
      _
    $region95: #{tpu_custom_call.1} parent=1 // pred_check_branch
      %5024 = sbr.rel (0) target = $region97
    $region96: #{tpu_custom_call.1} parent=1 // pred_region
      %5025 = dma.done [#allocation4], 128
    $region97: #{tpu_custom_call.1} parent=1 // pred_fallthru
      _
    %5026 = vsyncpa [#allocation3], 1
    %5027 = vsyncpa [#allocation6], 1
    %5028 = vsyncpa [#allocation9], 1
    %5029 = vsyncpa [#allocation12], 1
    %5030 = vsyncpa [#allocation15], 1
    %5031 = vsyncpa [#allocation18], 1
    %5032 = vsyncpa [#allocation4], 1

</llo_original>
